<compile_context>
chip_gen: v5e
topology: v5e:2x2
jax: 0.10.0
libtpu: 0.0.40
codegen_flags: <defaults>
</compile_context>

<pallas_src>
import jax
import jax.numpy as jnp
from jax import lax
from jax.experimental import pallas as pl
from jax.experimental.pallas import tpu as pltpu

_EPS = 1e-5
_INV_SQRT2 = 0.7071067811865476
_TANH_C0 = 0.7978845608028654  # sqrt(2/pi)
_TANH_C1 = 0.044715


def _round_up(x, m):
    return ((x + m - 1) // m) * m


def _pad2(a, rows, cols):
    a = jnp.asarray(a, jnp.float32)
    return jnp.pad(a, ((0, rows - a.shape[0]), (0, cols - a.shape[1])))


# ------------------------------ pallas wrapper ------------------------------ #
def mlp_mixer_forward(x, params, coarsen_adj=None, with_final_norm=True, *,
                      use_bf16_matmuls=False, approx_gelu=False,
                      batch_block=None, vmem_limit_bytes=64 * 1024 * 1024):
    """Full MLPMixer forward in one pallas_call. x: [B, N, D] f32."""
    B, N, D = x.shape
    blocks = params["blocks"]
    L = len(blocks)
    has_adj = coarsen_adj is not None
    token_dim = blocks[0]["wt1"].shape[1]
    channel_dim = blocks[0]["wc1"].shape[1]

    # ---- lane-dense padded sizes ------------------------------------------ #
    Np = _round_up(N, 8)            # sublane multiple
    Dp = _round_up(D, 128)          # activation lane dim
    TDp = _round_up(token_dim, 8)   # token-mix hidden (sublane dim of the intermediate)
    Cp = _round_up(channel_dim, 128)  # channel-mix hidden lane dim

    # ---- batch-block heuristic --------------------------------------------- #
    if batch_block is None:
        row_target = max(1, 256 // Np)      # fill MXU rows (256 on v6e/v7x)
        core_cap = max(1, B // 2)           # keep >= 2 grid steps for v7x's 2 TCs
        cap = max(1, min(row_target, core_cap))
        bb = 1
        for cand in range(min(B, cap), 0, -1):
            if B % cand == 0:
                bb = cand
                break
    else:
        bb = int(batch_block)
        assert B % bb == 0, "batch_block must divide the batch size"
    n_bblocks = B // bb
    rows = bb * Np

    # ---- host-side padding & weight pre-transposition (free wrt kernel) ---- #
    xp = jnp.pad(x.astype(jnp.float32),
                 ((0, 0), (0, Np - N), (0, Dp - D))).reshape(B * Np, Dp)
    if has_adj:
        adjp = jnp.pad(coarsen_adj.astype(jnp.float32),
                       ((0, 0), (0, Np - N), (0, Np - N)))

    def stack(key, fn):
        return jnp.stack([fn(p[key]) for p in blocks], axis=0)

    g1 = stack("ln1_g", lambda a: _pad2(a, 1, Dp))        # (L, 1, Dp)
    be1 = stack("ln1_b", lambda a: _pad2(a, 1, Dp))
    wt1t = stack("wt1", lambda a: _pad2(a.T, TDp, Np))     # (L, TDp, Np)  [pre-transposed]
    bt1 = stack("bt1", lambda a: _pad2(a.T, TDp, 1))       # (L, TDp, 1)   column bias
    wt2t = stack("wt2", lambda a: _pad2(a.T, Np, TDp))     # (L, Np, TDp)  [pre-transposed]
    bt2 = stack("bt2", lambda a: _pad2(a.T, Np, 1))        # (L, Np, 1)    column bias
    g2 = stack("ln2_g", lambda a: _pad2(a, 1, Dp))
    be2 = stack("ln2_b", lambda a: _pad2(a, 1, Dp))
    wc1 = stack("wc1", lambda a: _pad2(a, Dp, Cp))         # (L, Dp, Cp)
    bc1 = stack("bc1", lambda a: _pad2(a, 1, Cp))
    wc2 = stack("wc2", lambda a: _pad2(a, Cp, Dp))         # (L, Cp, Dp)
    bc2 = stack("bc2", lambda a: _pad2(a, 1, Dp))
    fg = _pad2(params["final_g"], 1, Dp)
    fb = _pad2(params["final_b"], 1, Dp)

    weight_stacks = [g1, be1, wt1t, bt1, wt2t, bt2, g2, be2, wc1, bc1, wc2, bc2]

    inv_d = 1.0 / float(D)
    needs_mask = (Dp != D)

    # ------------------------------ fused kernel ---------------------------- #
    def kernel(*refs):
        if has_adj:
            x_ref, adj_ref, *rest = refs
        else:
            x_ref, *rest = refs
            adj_ref = None
        (g1_ref, be1_ref, wt1t_ref, bt1_ref, wt2t_ref, bt2_ref,
         g2_ref, be2_ref, wc1_ref, bc1_ref, wc2_ref, bc2_ref,
         fg_ref, fb_ref, o_ref) = rest

        # Lane masks for the zero-padded hidden columns (hoisted once; JAX does
        # not CSE broadcast_in_dim, so never rebuild these inside the loop).
        if needs_mask:
            lane_mask_b = lax.broadcasted_iota(jnp.int32, (Np, Dp), 1) < D
            lane_mask_r = lax.broadcasted_iota(jnp.int32, (rows, Dp), 1) < D
        else:
            lane_mask_b = lane_mask_r = None

        def layernorm(v, g, b, mask):
            # torch.nn.LayerNorm: biased variance, eps inside rsqrt; statistics
            # over the real D columns only (padded lanes are kept exactly 0).
            mean = jnp.sum(v, axis=-1, keepdims=True) * inv_d
            diff = v - mean
            sq = diff * diff
            if mask is not None:
                sq = jnp.where(mask, sq, 0.0)
            var = jnp.sum(sq, axis=-1, keepdims=True) * inv_d
            # gamma/beta are zero in padded lanes -> padded LN output is 0.
            return diff * lax.rsqrt(var + _EPS) * g + b

        def gelu(v):
            if approx_gelu:
                return 0.5 * v * (1.0 + jnp.tanh(_TANH_C0 * (v + _TANH_C1 * v * v * v)))
            return 0.5 * v * (1.0 + lax.erf(v * _INV_SQRT2))   # exact torch GELU

        def mm(a, b):
            if use_bf16_matmuls:
                a = a.astype(jnp.bfloat16)
                b = b.astype(jnp.bfloat16)
            return jnp.dot(a, b, preferred_element_type=jnp.float32)

        x0 = x_ref[...]                              # (rows, Dp) resident activation
        adj = adj_ref[...] if has_adj else None      # (bb, Np, Np)

        def layer(l, xc):
            g1_l, be1_l = g1_ref[l], be1_ref[l]
            wt1t_l, bt1_l = wt1t_ref[l], bt1_ref[l]
            wt2t_l, bt2_l = wt2t_ref[l], bt2_ref[l]
            g2_l, be2_l = g2_ref[l], be2_ref[l]
            wc1_l, bc1_l = wc1_ref[l], bc1_ref[l]
            wc2_l, bc2_l = wc2_ref[l], bc2_ref[l]

            # --- token mix: per batch element, contraction over the patch axis.
            # Both contractions are MXU-canonical ((1,),(0,)) thanks to the
            # host-side weight transposes -> no in-kernel transposes.
            parts = []
            for b in range(bb):
                xb = xc[b * Np:(b + 1) * Np, :]                       # (Np, Dp)
                a_xb = mm(adj[b], xb) if has_adj else xb
                hb = layernorm(a_xb, g1_l, be1_l, lane_mask_b)
                t = gelu(mm(wt1t_l, hb) + bt1_l)                      # (TDp, Dp)
                db = mm(wt2t_l, t) + bt2_l                            # (Np, Dp)
                if needs_mask:
                    # bt1/bt2 column biases leak into padded D lanes; zero them so
                    # the residual keeps padded columns exactly 0 (for LN stats).
                    db = jnp.where(lane_mask_b, db, 0.0)
                parts.append(xb + db)
            xc = parts[0] if bb == 1 else jnp.concatenate(parts, axis=0)

            # --- channel mix: batch folded into the MXU row axis ------------- #
            h2 = layernorm(xc, g2_l, be2_l, lane_mask_r)
            c = gelu(mm(h2, wc1_l) + bc1_l)                           # (rows, Cp)
            c = mm(c, wc2_l) + bc2_l                                  # (rows, Dp)
            return xc + c

        xL = lax.fori_loop(0, L, layer, x0, unroll=True)

        if with_final_norm:
            xL = layernorm(xL, fg_ref[...], fb_ref[...], lane_mask_r)
        o_ref[...] = xL

    # ------------------------------ specs / call ----------------------------- #
    def resident_spec(w):
        nd = w.ndim
        # Constant block index across the whole grid -> DMA'd once, stays in VMEM.
        # TODO(synk): pipeline_mode=pl.Buffered(1) would halve the weight VMEM
        # footprint (constant blocks don't need a second buffer).
        return pl.BlockSpec(w.shape, lambda i, _nd=nd: (0,) * _nd)

    in_specs = [pl.BlockSpec((rows, Dp), lambda i: (i, 0))]
    args = [xp]
    if has_adj:
        in_specs.append(pl.BlockSpec((bb, Np, Np), lambda i: (i, 0, 0)))
        args.append(adjp)
    in_specs += [resident_spec(w) for w in weight_stacks]
    args += weight_stacks
    in_specs += [resident_spec(fg), resident_spec(fb)]
    args += [fg, fb]

    mm_flops = 2 * Np * Dp * (2 * TDp + 2 * Cp) + (2 * Np * Np * Dp if has_adj else 0)
    weight_bytes = 4 * (sum(int(w.size) for w in weight_stacks) + int(fg.size) + int(fb.size))
    cost = pl.CostEstimate(
        flops=int(B * L * mm_flops),
        transcendentals=int(B * L * (TDp * Dp + Np * Cp)),
        bytes_accessed=int(4 * (2 * B * Np * Dp + (B * Np * Np if has_adj else 0))
                           + weight_bytes),
    )

    out2d = pl.pallas_call(
        kernel,
        out_shape=jax.ShapeDtypeStruct((B * Np, Dp), jnp.float32),
        grid=(n_bblocks,),
        in_specs=in_specs,
        out_specs=pl.BlockSpec((rows, Dp), lambda i: (i, 0)),
        compiler_params=pltpu.CompilerParams(
            dimension_semantics=("parallel",),
            # Above the v5e (16 MiB) / v6e (32 MiB) scoped defaults; fits v7x.
            vmem_limit_bytes=vmem_limit_bytes),
        cost_estimate=cost,
    )(*args)

    return out2d.reshape(B, Np, Dp)[:, :N, :D]


# ------------------------------ params / reference --------------------------- #
def init_params(key, nlayer, nhid, n_patches):
    token_dim = nhid * 4
    channel_dim = nhid // 2
    blocks = []
    for _ in range(nlayer):
        key, *ks = jax.random.split(key, 9)
        blocks.append({
            "ln1_g": jnp.ones((1, nhid), jnp.float32),
            "ln1_b": jnp.zeros((1, nhid), jnp.float32),
            "wt1": 0.05 * jax.random.normal(ks[0], (n_patches, token_dim), jnp.float32),
            "bt1": 0.05 * jax.random.normal(ks[1], (1, token_dim), jnp.float32),
            "wt2": 0.05 * jax.random.normal(ks[2], (token_dim, n_patches), jnp.float32),
            "bt2": 0.05 * jax.random.normal(ks[3], (1, n_patches), jnp.float32),
            "ln2_g": jnp.ones((1, nhid), jnp.float32),
            "ln2_b": jnp.zeros((1, nhid), jnp.float32),
            "wc1": 0.05 * jax.random.normal(ks[4], (nhid, channel_dim), jnp.float32),
            "bc1": 0.05 * jax.random.normal(ks[5], (1, channel_dim), jnp.float32),
            "wc2": 0.05 * jax.random.normal(ks[6], (channel_dim, nhid), jnp.float32),
            "bc2": 0.05 * jax.random.normal(ks[7], (1, nhid), jnp.float32),
        })
    return {"blocks": blocks,
            "final_g": jnp.ones((1, nhid), jnp.float32),
            "final_b": jnp.zeros((1, nhid), jnp.float32)}


def _reference_forward(x, params, coarsen_adj=None, with_final_norm=True):
    """Pure-JAX reference mirroring the PyTorch forward (dropout=0)."""
    def ln(v, g, b):
        m = jnp.mean(v, axis=-1, keepdims=True)
        va = jnp.mean((v - m) ** 2, axis=-1, keepdims=True)
        return (v - m) * lax.rsqrt(va + _EPS) * g + b

    def gelu(v):
        return 0.5 * v * (1.0 + lax.erf(v * _INV_SQRT2))

    for p in params["blocks"]:
        a_x = jnp.einsum("bij,bjd->bid", coarsen_adj, x) if coarsen_adj is not None else x
        h = ln(a_x, p["ln1_g"], p["ln1_b"])
        h = jnp.swapaxes(h, 1, 2)                              # b d n
        h = gelu(h @ p["wt1"] + p["bt1"]) @ p["wt2"] + p["bt2"]
        x = x + jnp.swapaxes(h, 1, 2)                          # b n d
        h2 = ln(x, p["ln2_g"], p["ln2_b"])
        x = x + (gelu(h2 @ p["wc1"] + p["bc1"]) @ p["wc2"] + p["bc2"])
    if with_final_norm:
        x = ln(x, params["final_g"], params["final_b"])
    return x


# ----------------------------------- main ------------------------------------ #
if __name__ == "__main__":
    B, n_patches, nhid, nlayer = 2, 8, 32, 2

    key = jax.random.PRNGKey(0)
    kx, kadj, kp = jax.random.split(key, 3)
    x = jax.random.normal(kx, (B, n_patches, nhid), jnp.float32)
    coarsen_adj = jax.random.normal(kadj, (B, n_patches, n_patches), jnp.float32)
    params = init_params(kp, nlayer, nhid, n_patches)

    # default heuristic: bb=1, grid=(2,) -> both v7x cores fed
    out = jax.block_until_ready(
        mlp_mixer_forward(x, params, coarsen_adj=coarsen_adj, with_final_norm=True))
    # batch-folded variant: bb=2, grid=(1,) -> 2x MXU row occupancy per step
    out_bb2 = jax.block_until_ready(
        mlp_mixer_forward(x, params, coarsen_adj=coarsen_adj, with_final_norm=True,
                          batch_block=2))
    # coarsen_adj=None path (adj matmul compiled out entirely)
    out_noadj = jax.block_until_ready(
        mlp_mixer_forward(x, params, coarsen_adj=None, with_final_norm=True))
    # optional fast-math path (bf16 MXU operands + tanh GELU), numerics-relaxed
    out_fast = jax.block_until_ready(
        mlp_mixer_forward(x, params, coarsen_adj=coarsen_adj, with_final_norm=True,
                          use_bf16_matmuls=True, approx_gelu=True))

    ref = _reference_forward(x, params, coarsen_adj=coarsen_adj)
    ref_noadj = _reference_forward(x, params, coarsen_adj=None)

    assert out.shape == (B, n_patches, nhid)
    assert jnp.allclose(out, ref, rtol=1e-4, atol=1e-4)
    assert jnp.allclose(out_bb2, ref, rtol=1e-4, atol=1e-4)
    assert jnp.allclose(out_noadj, ref_noadj, rtol=1e-4, atol=1e-4)
    assert out_fast.shape == (B, n_patches, nhid)
    assert bool(jnp.isfinite(out_fast).all())

    print("KERNEL_OK")
</pallas_src>

<mosaic_0001>
module attributes {stable_mosaic.version = 11 : i64} {
  func.func @kernel(%arg0: i32, %arg1: memref<8x128xf32, #tpu.memory_space<vmem>>, %arg2: memref<1x8x8xf32, #tpu.memory_space<vmem>>, %arg3: memref<2x1x128xf32, #tpu.memory_space<vmem>>, %arg4: memref<2x1x128xf32, #tpu.memory_space<vmem>>, %arg5: memref<2x128x8xf32, #tpu.memory_space<vmem>>, %arg6: memref<2x128x1xf32, #tpu.memory_space<vmem>>, %arg7: memref<2x8x128xf32, #tpu.memory_space<vmem>>, %arg8: memref<2x8x1xf32, #tpu.memory_space<vmem>>, %arg9: memref<2x1x128xf32, #tpu.memory_space<vmem>>, %arg10: memref<2x1x128xf32, #tpu.memory_space<vmem>>, %arg11: memref<2x128x128xf32, #tpu.memory_space<vmem>>, %arg12: memref<2x1x128xf32, #tpu.memory_space<vmem>>, %arg13: memref<2x128x128xf32, #tpu.memory_space<vmem>>, %arg14: memref<2x1x128xf32, #tpu.memory_space<vmem>>, %arg15: memref<1x128xf32, #tpu.memory_space<vmem>>, %arg16: memref<1x128xf32, #tpu.memory_space<vmem>>, %arg17: memref<8x128xf32, #tpu.memory_space<vmem>>) attributes {dimension_semantics = [#tpu.dimension_semantics<parallel>], iteration_bounds = array<i64: 2>, scalar_prefetch = 0 : i64, scratch_operands = 0 : i64, tpu.core_type = #tpu.core_type<tc>, window_params = [{transform_indices = @transform_0, window_bounds = array<i64: 8, 128>}, {transform_indices = @transform_1, window_bounds = array<i64: 1, 8, 8>}, {pipeline_mode = #tpu.pipeline_mode<synchronous>, transform_indices = @transform_2, window_bounds = array<i64: 2, 1, 128>}, {pipeline_mode = #tpu.pipeline_mode<synchronous>, transform_indices = @transform_3, window_bounds = array<i64: 2, 1, 128>}, {pipeline_mode = #tpu.pipeline_mode<synchronous>, transform_indices = @transform_4, window_bounds = array<i64: 2, 128, 8>}, {pipeline_mode = #tpu.pipeline_mode<synchronous>, transform_indices = @transform_5, window_bounds = array<i64: 2, 128, 1>}, {pipeline_mode = #tpu.pipeline_mode<synchronous>, transform_indices = @transform_6, window_bounds = array<i64: 2, 8, 128>}, {pipeline_mode = #tpu.pipeline_mode<synchronous>, transform_indices = @transform_7, window_bounds = array<i64: 2, 8, 1>}, {pipeline_mode = #tpu.pipeline_mode<synchronous>, transform_indices = @transform_8, window_bounds = array<i64: 2, 1, 128>}, {pipeline_mode = #tpu.pipeline_mode<synchronous>, transform_indices = @transform_9, window_bounds = array<i64: 2, 1, 128>}, {pipeline_mode = #tpu.pipeline_mode<synchronous>, transform_indices = @transform_10, window_bounds = array<i64: 2, 128, 128>}, {pipeline_mode = #tpu.pipeline_mode<synchronous>, transform_indices = @transform_11, window_bounds = array<i64: 2, 1, 128>}, {pipeline_mode = #tpu.pipeline_mode<synchronous>, transform_indices = @transform_12, window_bounds = array<i64: 2, 128, 128>}, {pipeline_mode = #tpu.pipeline_mode<synchronous>, transform_indices = @transform_13, window_bounds = array<i64: 2, 1, 128>}, {pipeline_mode = #tpu.pipeline_mode<synchronous>, transform_indices = @transform_14, window_bounds = array<i64: 1, 128>}, {pipeline_mode = #tpu.pipeline_mode<synchronous>, transform_indices = @transform_15, window_bounds = array<i64: 1, 128>}, {transform_indices = @transform_16, window_bounds = array<i64: 8, 128>}]} {
    %0 = tpu.iota {dimensions = array<i32: 1>} : vector<8x128xi32>
    %c32_i32 = arith.constant 32 : i32
    %1 = vector.broadcast %c32_i32 : i32 to vector<8x128xi32>
    %2 = arith.cmpi slt, %0, %1 : vector<8x128xi32>
    %3 = tpu.iota {dimensions = array<i32: 1>} : vector<8x128xi32>
    %c32_i32_0 = arith.constant 32 : i32
    %4 = vector.broadcast %c32_i32_0 : i32 to vector<8x128xi32>
    %5 = arith.cmpi slt, %3, %4 : vector<8x128xi32>
    %c0 = arith.constant 0 : index
    %c0_1 = arith.constant 0 : index
    %6 = vector.load %arg1[%c0, %c0_1] : memref<8x128xf32, #tpu.memory_space<vmem>>, vector<8x128xf32>
    %c0_2 = arith.constant 0 : index
    %c0_3 = arith.constant 0 : index
    %c0_4 = arith.constant 0 : index
    %7 = vector.load %arg2[%c0_2, %c0_3, %c0_4] : memref<1x8x8xf32, #tpu.memory_space<vmem>>, vector<1x8x8xf32>
    %c0_i32 = arith.constant 0 : i32
    %8 = arith.index_cast %c0_i32 : i32 to index
    %c0_5 = arith.constant 0 : index
    %c0_6 = arith.constant 0 : index
    %9 = vector.load %arg3[%8, %c0_5, %c0_6] : memref<2x1x128xf32, #tpu.memory_space<vmem>>, vector<1x1x128xf32>
    %10 = vector.shape_cast %9 : vector<1x1x128xf32> to vector<1x128xf32>
    %11 = arith.index_cast %c0_i32 : i32 to index
    %c0_7 = arith.constant 0 : index
    %c0_8 = arith.constant 0 : index
    %12 = vector.load %arg4[%11, %c0_7, %c0_8] : memref<2x1x128xf32, #tpu.memory_space<vmem>>, vector<1x1x128xf32>
    %13 = vector.shape_cast %12 : vector<1x1x128xf32> to vector<1x128xf32>
    %14 = arith.index_cast %c0_i32 : i32 to index
    %c0_9 = arith.constant 0 : index
    %c0_10 = arith.constant 0 : index
    %15 = vector.load %arg5[%14, %c0_9, %c0_10] : memref<2x128x8xf32, #tpu.memory_space<vmem>>, vector<1x128x8xf32>
    %16 = vector.shape_cast %15 : vector<1x128x8xf32> to vector<128x8xf32>
    %17 = arith.index_cast %c0_i32 : i32 to index
    %c0_11 = arith.constant 0 : index
    %c0_12 = arith.constant 0 : index
    %18 = vector.load %arg6[%17, %c0_11, %c0_12] : memref<2x128x1xf32, #tpu.memory_space<vmem>>, vector<1x128x1xf32>
    %19 = vector.shape_cast %18 : vector<1x128x1xf32> to vector<128x1xf32>
    %20 = arith.index_cast %c0_i32 : i32 to index
    %c0_13 = arith.constant 0 : index
    %c0_14 = arith.constant 0 : index
    %21 = vector.load %arg7[%20, %c0_13, %c0_14] : memref<2x8x128xf32, #tpu.memory_space<vmem>>, vector<1x8x128xf32>
    %22 = vector.shape_cast %21 : vector<1x8x128xf32> to vector<8x128xf32>
    %23 = arith.index_cast %c0_i32 : i32 to index
    %c0_15 = arith.constant 0 : index
    %c0_16 = arith.constant 0 : index
    %24 = vector.load %arg8[%23, %c0_15, %c0_16] : memref<2x8x1xf32, #tpu.memory_space<vmem>>, vector<1x8x1xf32>
    %25 = vector.shape_cast %24 : vector<1x8x1xf32> to vector<8x1xf32>
    %26 = arith.index_cast %c0_i32 : i32 to index
    %c0_17 = arith.constant 0 : index
    %c0_18 = arith.constant 0 : index
    %27 = vector.load %arg9[%26, %c0_17, %c0_18] : memref<2x1x128xf32, #tpu.memory_space<vmem>>, vector<1x1x128xf32>
    %28 = vector.shape_cast %27 : vector<1x1x128xf32> to vector<1x128xf32>
    %29 = arith.index_cast %c0_i32 : i32 to index
    %c0_19 = arith.constant 0 : index
    %c0_20 = arith.constant 0 : index
    %30 = vector.load %arg10[%29, %c0_19, %c0_20] : memref<2x1x128xf32, #tpu.memory_space<vmem>>, vector<1x1x128xf32>
    %31 = vector.shape_cast %30 : vector<1x1x128xf32> to vector<1x128xf32>
    %32 = arith.index_cast %c0_i32 : i32 to index
    %c0_21 = arith.constant 0 : index
    %c0_22 = arith.constant 0 : index
    %33 = vector.load %arg11[%32, %c0_21, %c0_22] : memref<2x128x128xf32, #tpu.memory_space<vmem>>, vector<1x128x128xf32>
    %34 = vector.shape_cast %33 : vector<1x128x128xf32> to vector<128x128xf32>
    %35 = arith.index_cast %c0_i32 : i32 to index
    %c0_23 = arith.constant 0 : index
    %c0_24 = arith.constant 0 : index
    %36 = vector.load %arg12[%35, %c0_23, %c0_24] : memref<2x1x128xf32, #tpu.memory_space<vmem>>, vector<1x1x128xf32>
    %37 = vector.shape_cast %36 : vector<1x1x128xf32> to vector<1x128xf32>
    %38 = arith.index_cast %c0_i32 : i32 to index
    %c0_25 = arith.constant 0 : index
    %c0_26 = arith.constant 0 : index
    %39 = vector.load %arg13[%38, %c0_25, %c0_26] : memref<2x128x128xf32, #tpu.memory_space<vmem>>, vector<1x128x128xf32>
    %40 = vector.shape_cast %39 : vector<1x128x128xf32> to vector<128x128xf32>
    %41 = arith.index_cast %c0_i32 : i32 to index
    %c0_27 = arith.constant 0 : index
    %c0_28 = arith.constant 0 : index
    %42 = vector.load %arg14[%41, %c0_27, %c0_28] : memref<2x1x128xf32, #tpu.memory_space<vmem>>, vector<1x1x128xf32>
    %43 = vector.shape_cast %42 : vector<1x1x128xf32> to vector<1x128xf32>
    %44 = vector.shape_cast %7 : vector<1x8x8xf32> to vector<8x8xf32>
    %cst = arith.constant dense<0.000000e+00> : vector<8x128xf32>
    %45 = tpu.matmul %44, %6, %cst {dimension_numbers = #tpu.dot_dimension_numbers<[1], [0], [0], [1], [0, 0, 1, 1], [], []>} : vector<8x8xf32>, vector<8x128xf32>, vector<8x128xf32> -> vector<8x128xf32>
    %cst_29 = arith.constant dense<0.000000e+00> : vector<8xf32>
    %46 = vector.multi_reduction <add>, %45, %cst_29 [1] : vector<8x128xf32> to vector<8xf32>
    %47 = vector.shape_cast %46 : vector<8xf32> to vector<8x1xf32>
    %cst_30 = arith.constant 3.125000e-02 : f32
    %48 = vector.broadcast %cst_30 : f32 to vector<8x1xf32>
    %49 = arith.mulf %47, %48 : vector<8x1xf32>
    %50 = vector.broadcast %49 : vector<8x1xf32> to vector<8x128xf32>
    %51 = arith.subf %45, %50 : vector<8x128xf32>
    %52 = arith.mulf %51, %51 : vector<8x128xf32>
    %cst_31 = arith.constant 0.000000e+00 : f32
    %53 = vector.broadcast %cst_31 : f32 to vector<8x128xf32>
    %54 = arith.select %2, %52, %53 : vector<8x128xi1>, vector<8x128xf32>
    %cst_32 = arith.constant dense<0.000000e+00> : vector<8xf32>
    %55 = vector.multi_reduction <add>, %54, %cst_32 [1] : vector<8x128xf32> to vector<8xf32>
    %56 = vector.shape_cast %55 : vector<8xf32> to vector<8x1xf32>
    %cst_33 = arith.constant 3.125000e-02 : f32
    %57 = vector.broadcast %cst_33 : f32 to vector<8x1xf32>
    %58 = arith.mulf %56, %57 : vector<8x1xf32>
    %cst_34 = arith.constant 9.99999974E-6 : f32
    %59 = vector.broadcast %cst_34 : f32 to vector<8x1xf32>
    %60 = arith.addf %58, %59 : vector<8x1xf32>
    %61 = math.rsqrt %60 : vector<8x1xf32>
    %62 = vector.broadcast %61 : vector<8x1xf32> to vector<8x128xf32>
    %63 = arith.mulf %51, %62 : vector<8x128xf32>
    %64 = vector.broadcast %10 : vector<1x128xf32> to vector<8x128xf32>
    %65 = arith.mulf %63, %64 : vector<8x128xf32>
    %66 = vector.broadcast %13 : vector<1x128xf32> to vector<8x128xf32>
    %67 = arith.addf %65, %66 : vector<8x128xf32>
    %cst_35 = arith.constant dense<0.000000e+00> : vector<128x128xf32>
    %68 = tpu.matmul %16, %67, %cst_35 {dimension_numbers = #tpu.dot_dimension_numbers<[1], [0], [0], [1], [0, 0, 1, 1], [], []>} : vector<128x8xf32>, vector<8x128xf32>, vector<128x128xf32> -> vector<128x128xf32>
    %69 = vector.broadcast %19 : vector<128x1xf32> to vector<128x128xf32>
    %70 = arith.addf %68, %69 : vector<128x128xf32>
    %cst_36 = arith.constant 5.000000e-01 : f32
    %71 = vector.broadcast %cst_36 : f32 to vector<128x128xf32>
    %72 = arith.mulf %71, %70 : vector<128x128xf32>
    %cst_37 = arith.constant 0.707106769 : f32
    %73 = vector.broadcast %cst_37 : f32 to vector<128x128xf32>
    %74 = arith.mulf %70, %73 : vector<128x128xf32>
    %75 = math.erf %74 : vector<128x128xf32>
    %cst_38 = arith.constant 1.000000e+00 : f32
    %76 = vector.broadcast %cst_38 : f32 to vector<128x128xf32>
    %77 = arith.addf %76, %75 : vector<128x128xf32>
    %78 = arith.mulf %72, %77 : vector<128x128xf32>
    %cst_39 = arith.constant dense<0.000000e+00> : vector<8x128xf32>
    %79 = tpu.matmul %22, %78, %cst_39 {dimension_numbers = #tpu.dot_dimension_numbers<[1], [0], [0], [1], [0, 0, 1, 1], [], []>} : vector<8x128xf32>, vector<128x128xf32>, vector<8x128xf32> -> vector<8x128xf32>
    %80 = vector.broadcast %25 : vector<8x1xf32> to vector<8x128xf32>
    %81 = arith.addf %79, %80 : vector<8x128xf32>
    %cst_40 = arith.constant 0.000000e+00 : f32
    %82 = vector.broadcast %cst_40 : f32 to vector<8x128xf32>
    %83 = arith.select %2, %81, %82 : vector<8x128xi1>, vector<8x128xf32>
    %84 = arith.addf %6, %83 : vector<8x128xf32>
    %cst_41 = arith.constant dense<0.000000e+00> : vector<8xf32>
    %85 = vector.multi_reduction <add>, %84, %cst_41 [1] : vector<8x128xf32> to vector<8xf32>
    %86 = vector.shape_cast %85 : vector<8xf32> to vector<8x1xf32>
    %cst_42 = arith.constant 3.125000e-02 : f32
    %87 = vector.broadcast %cst_42 : f32 to vector<8x1xf32>
    %88 = arith.mulf %86, %87 : vector<8x1xf32>
    %89 = vector.broadcast %88 : vector<8x1xf32> to vector<8x128xf32>
    %90 = arith.subf %84, %89 : vector<8x128xf32>
    %91 = arith.mulf %90, %90 : vector<8x128xf32>
    %cst_43 = arith.constant 0.000000e+00 : f32
    %92 = vector.broadcast %cst_43 : f32 to vector<8x128xf32>
    %93 = arith.select %5, %91, %92 : vector<8x128xi1>, vector<8x128xf32>
    %cst_44 = arith.constant dense<0.000000e+00> : vector<8xf32>
    %94 = vector.multi_reduction <add>, %93, %cst_44 [1] : vector<8x128xf32> to vector<8xf32>
    %95 = vector.shape_cast %94 : vector<8xf32> to vector<8x1xf32>
    %cst_45 = arith.constant 3.125000e-02 : f32
    %96 = vector.broadcast %cst_45 : f32 to vector<8x1xf32>
    %97 = arith.mulf %95, %96 : vector<8x1xf32>
    %cst_46 = arith.constant 9.99999974E-6 : f32
    %98 = vector.broadcast %cst_46 : f32 to vector<8x1xf32>
    %99 = arith.addf %97, %98 : vector<8x1xf32>
    %100 = math.rsqrt %99 : vector<8x1xf32>
    %101 = vector.broadcast %100 : vector<8x1xf32> to vector<8x128xf32>
    %102 = arith.mulf %90, %101 : vector<8x128xf32>
    %103 = vector.broadcast %28 : vector<1x128xf32> to vector<8x128xf32>
    %104 = arith.mulf %102, %103 : vector<8x128xf32>
    %105 = vector.broadcast %31 : vector<1x128xf32> to vector<8x128xf32>
    %106 = arith.addf %104, %105 : vector<8x128xf32>
    %cst_47 = arith.constant dense<0.000000e+00> : vector<8x128xf32>
    %107 = tpu.matmul %106, %34, %cst_47 {dimension_numbers = #tpu.dot_dimension_numbers<[1], [0], [0], [1], [0, 0, 1, 1], [], []>} : vector<8x128xf32>, vector<128x128xf32>, vector<8x128xf32> -> vector<8x128xf32>
    %108 = vector.broadcast %37 : vector<1x128xf32> to vector<8x128xf32>
    %109 = arith.addf %107, %108 : vector<8x128xf32>
    %cst_48 = arith.constant 5.000000e-01 : f32
    %110 = vector.broadcast %cst_48 : f32 to vector<8x128xf32>
    %111 = arith.mulf %110, %109 : vector<8x128xf32>
    %cst_49 = arith.constant 0.707106769 : f32
    %112 = vector.broadcast %cst_49 : f32 to vector<8x128xf32>
    %113 = arith.mulf %109, %112 : vector<8x128xf32>
    %114 = math.erf %113 : vector<8x128xf32>
    %cst_50 = arith.constant 1.000000e+00 : f32
    %115 = vector.broadcast %cst_50 : f32 to vector<8x128xf32>
    %116 = arith.addf %115, %114 : vector<8x128xf32>
    %117 = arith.mulf %111, %116 : vector<8x128xf32>
    %cst_51 = arith.constant dense<0.000000e+00> : vector<8x128xf32>
    %118 = tpu.matmul %117, %40, %cst_51 {dimension_numbers = #tpu.dot_dimension_numbers<[1], [0], [0], [1], [0, 0, 1, 1], [], []>} : vector<8x128xf32>, vector<128x128xf32>, vector<8x128xf32> -> vector<8x128xf32>
    %119 = vector.broadcast %43 : vector<1x128xf32> to vector<8x128xf32>
    %120 = arith.addf %118, %119 : vector<8x128xf32>
    %121 = arith.addf %84, %120 : vector<8x128xf32>
    %c1_i32 = arith.constant 1 : i32
    %122 = arith.index_cast %c1_i32 : i32 to index
    %c0_52 = arith.constant 0 : index
    %c0_53 = arith.constant 0 : index
    %123 = vector.load %arg3[%122, %c0_52, %c0_53] : memref<2x1x128xf32, #tpu.memory_space<vmem>>, vector<1x1x128xf32>
    %124 = vector.shape_cast %123 : vector<1x1x128xf32> to vector<1x128xf32>
    %125 = arith.index_cast %c1_i32 : i32 to index
    %c0_54 = arith.constant 0 : index
    %c0_55 = arith.constant 0 : index
    %126 = vector.load %arg4[%125, %c0_54, %c0_55] : memref<2x1x128xf32, #tpu.memory_space<vmem>>, vector<1x1x128xf32>
    %127 = vector.shape_cast %126 : vector<1x1x128xf32> to vector<1x128xf32>
    %128 = arith.index_cast %c1_i32 : i32 to index
    %c0_56 = arith.constant 0 : index
    %c0_57 = arith.constant 0 : index
    %129 = vector.load %arg5[%128, %c0_56, %c0_57] : memref<2x128x8xf32, #tpu.memory_space<vmem>>, vector<1x128x8xf32>
    %130 = vector.shape_cast %129 : vector<1x128x8xf32> to vector<128x8xf32>
    %131 = arith.index_cast %c1_i32 : i32 to index
    %c0_58 = arith.constant 0 : index
    %c0_59 = arith.constant 0 : index
    %132 = vector.load %arg6[%131, %c0_58, %c0_59] : memref<2x128x1xf32, #tpu.memory_space<vmem>>, vector<1x128x1xf32>
    %133 = vector.shape_cast %132 : vector<1x128x1xf32> to vector<128x1xf32>
    %134 = arith.index_cast %c1_i32 : i32 to index
    %c0_60 = arith.constant 0 : index
    %c0_61 = arith.constant 0 : index
    %135 = vector.load %arg7[%134, %c0_60, %c0_61] : memref<2x8x128xf32, #tpu.memory_space<vmem>>, vector<1x8x128xf32>
    %136 = vector.shape_cast %135 : vector<1x8x128xf32> to vector<8x128xf32>
    %137 = arith.index_cast %c1_i32 : i32 to index
    %c0_62 = arith.constant 0 : index
    %c0_63 = arith.constant 0 : index
    %138 = vector.load %arg8[%137, %c0_62, %c0_63] : memref<2x8x1xf32, #tpu.memory_space<vmem>>, vector<1x8x1xf32>
    %139 = vector.shape_cast %138 : vector<1x8x1xf32> to vector<8x1xf32>
    %140 = arith.index_cast %c1_i32 : i32 to index
    %c0_64 = arith.constant 0 : index
    %c0_65 = arith.constant 0 : index
    %141 = vector.load %arg9[%140, %c0_64, %c0_65] : memref<2x1x128xf32, #tpu.memory_space<vmem>>, vector<1x1x128xf32>
    %142 = vector.shape_cast %141 : vector<1x1x128xf32> to vector<1x128xf32>
    %143 = arith.index_cast %c1_i32 : i32 to index
    %c0_66 = arith.constant 0 : index
    %c0_67 = arith.constant 0 : index
    %144 = vector.load %arg10[%143, %c0_66, %c0_67] : memref<2x1x128xf32, #tpu.memory_space<vmem>>, vector<1x1x128xf32>
    %145 = vector.shape_cast %144 : vector<1x1x128xf32> to vector<1x128xf32>
    %146 = arith.index_cast %c1_i32 : i32 to index
    %c0_68 = arith.constant 0 : index
    %c0_69 = arith.constant 0 : index
    %147 = vector.load %arg11[%146, %c0_68, %c0_69] : memref<2x128x128xf32, #tpu.memory_space<vmem>>, vector<1x128x128xf32>
    %148 = vector.shape_cast %147 : vector<1x128x128xf32> to vector<128x128xf32>
    %149 = arith.index_cast %c1_i32 : i32 to index
    %c0_70 = arith.constant 0 : index
    %c0_71 = arith.constant 0 : index
    %150 = vector.load %arg12[%149, %c0_70, %c0_71] : memref<2x1x128xf32, #tpu.memory_space<vmem>>, vector<1x1x128xf32>
    %151 = vector.shape_cast %150 : vector<1x1x128xf32> to vector<1x128xf32>
    %152 = arith.index_cast %c1_i32 : i32 to index
    %c0_72 = arith.constant 0 : index
    %c0_73 = arith.constant 0 : index
    %153 = vector.load %arg13[%152, %c0_72, %c0_73] : memref<2x128x128xf32, #tpu.memory_space<vmem>>, vector<1x128x128xf32>
    %154 = vector.shape_cast %153 : vector<1x128x128xf32> to vector<128x128xf32>
    %155 = arith.index_cast %c1_i32 : i32 to index
    %c0_74 = arith.constant 0 : index
    %c0_75 = arith.constant 0 : index
    %156 = vector.load %arg14[%155, %c0_74, %c0_75] : memref<2x1x128xf32, #tpu.memory_space<vmem>>, vector<1x1x128xf32>
    %157 = vector.shape_cast %156 : vector<1x1x128xf32> to vector<1x128xf32>
    %158 = vector.shape_cast %7 : vector<1x8x8xf32> to vector<8x8xf32>
    %cst_76 = arith.constant dense<0.000000e+00> : vector<8x128xf32>
    %159 = tpu.matmul %158, %121, %cst_76 {dimension_numbers = #tpu.dot_dimension_numbers<[1], [0], [0], [1], [0, 0, 1, 1], [], []>} : vector<8x8xf32>, vector<8x128xf32>, vector<8x128xf32> -> vector<8x128xf32>
    %cst_77 = arith.constant dense<0.000000e+00> : vector<8xf32>
    %160 = vector.multi_reduction <add>, %159, %cst_77 [1] : vector<8x128xf32> to vector<8xf32>
    %161 = vector.shape_cast %160 : vector<8xf32> to vector<8x1xf32>
    %cst_78 = arith.constant 3.125000e-02 : f32
    %162 = vector.broadcast %cst_78 : f32 to vector<8x1xf32>
    %163 = arith.mulf %161, %162 : vector<8x1xf32>
    %164 = vector.broadcast %163 : vector<8x1xf32> to vector<8x128xf32>
    %165 = arith.subf %159, %164 : vector<8x128xf32>
    %166 = arith.mulf %165, %165 : vector<8x128xf32>
    %cst_79 = arith.constant 0.000000e+00 : f32
    %167 = vector.broadcast %cst_79 : f32 to vector<8x128xf32>
    %168 = arith.select %2, %166, %167 : vector<8x128xi1>, vector<8x128xf32>
    %cst_80 = arith.constant dense<0.000000e+00> : vector<8xf32>
    %169 = vector.multi_reduction <add>, %168, %cst_80 [1] : vector<8x128xf32> to vector<8xf32>
    %170 = vector.shape_cast %169 : vector<8xf32> to vector<8x1xf32>
    %cst_81 = arith.constant 3.125000e-02 : f32
    %171 = vector.broadcast %cst_81 : f32 to vector<8x1xf32>
    %172 = arith.mulf %170, %171 : vector<8x1xf32>
    %cst_82 = arith.constant 9.99999974E-6 : f32
    %173 = vector.broadcast %cst_82 : f32 to vector<8x1xf32>
    %174 = arith.addf %172, %173 : vector<8x1xf32>
    %175 = math.rsqrt %174 : vector<8x1xf32>
    %176 = vector.broadcast %175 : vector<8x1xf32> to vector<8x128xf32>
    %177 = arith.mulf %165, %176 : vector<8x128xf32>
    %178 = vector.broadcast %124 : vector<1x128xf32> to vector<8x128xf32>
    %179 = arith.mulf %177, %178 : vector<8x128xf32>
    %180 = vector.broadcast %127 : vector<1x128xf32> to vector<8x128xf32>
    %181 = arith.addf %179, %180 : vector<8x128xf32>
    %cst_83 = arith.constant dense<0.000000e+00> : vector<128x128xf32>
    %182 = tpu.matmul %130, %181, %cst_83 {dimension_numbers = #tpu.dot_dimension_numbers<[1], [0], [0], [1], [0, 0, 1, 1], [], []>} : vector<128x8xf32>, vector<8x128xf32>, vector<128x128xf32> -> vector<128x128xf32>
    %183 = vector.broadcast %133 : vector<128x1xf32> to vector<128x128xf32>
    %184 = arith.addf %182, %183 : vector<128x128xf32>
    %cst_84 = arith.constant 5.000000e-01 : f32
    %185 = vector.broadcast %cst_84 : f32 to vector<128x128xf32>
    %186 = arith.mulf %185, %184 : vector<128x128xf32>
    %cst_85 = arith.constant 0.707106769 : f32
    %187 = vector.broadcast %cst_85 : f32 to vector<128x128xf32>
    %188 = arith.mulf %184, %187 : vector<128x128xf32>
    %189 = math.erf %188 : vector<128x128xf32>
    %cst_86 = arith.constant 1.000000e+00 : f32
    %190 = vector.broadcast %cst_86 : f32 to vector<128x128xf32>
    %191 = arith.addf %190, %189 : vector<128x128xf32>
    %192 = arith.mulf %186, %191 : vector<128x128xf32>
    %cst_87 = arith.constant dense<0.000000e+00> : vector<8x128xf32>
    %193 = tpu.matmul %136, %192, %cst_87 {dimension_numbers = #tpu.dot_dimension_numbers<[1], [0], [0], [1], [0, 0, 1, 1], [], []>} : vector<8x128xf32>, vector<128x128xf32>, vector<8x128xf32> -> vector<8x128xf32>
    %194 = vector.broadcast %139 : vector<8x1xf32> to vector<8x128xf32>
    %195 = arith.addf %193, %194 : vector<8x128xf32>
    %cst_88 = arith.constant 0.000000e+00 : f32
    %196 = vector.broadcast %cst_88 : f32 to vector<8x128xf32>
    %197 = arith.select %2, %195, %196 : vector<8x128xi1>, vector<8x128xf32>
    %198 = arith.addf %121, %197 : vector<8x128xf32>
    %cst_89 = arith.constant dense<0.000000e+00> : vector<8xf32>
    %199 = vector.multi_reduction <add>, %198, %cst_89 [1] : vector<8x128xf32> to vector<8xf32>
    %200 = vector.shape_cast %199 : vector<8xf32> to vector<8x1xf32>
    %cst_90 = arith.constant 3.125000e-02 : f32
    %201 = vector.broadcast %cst_90 : f32 to vector<8x1xf32>
    %202 = arith.mulf %200, %201 : vector<8x1xf32>
    %203 = vector.broadcast %202 : vector<8x1xf32> to vector<8x128xf32>
    %204 = arith.subf %198, %203 : vector<8x128xf32>
    %205 = arith.mulf %204, %204 : vector<8x128xf32>
    %cst_91 = arith.constant 0.000000e+00 : f32
    %206 = vector.broadcast %cst_91 : f32 to vector<8x128xf32>
    %207 = arith.select %5, %205, %206 : vector<8x128xi1>, vector<8x128xf32>
    %cst_92 = arith.constant dense<0.000000e+00> : vector<8xf32>
    %208 = vector.multi_reduction <add>, %207, %cst_92 [1] : vector<8x128xf32> to vector<8xf32>
    %209 = vector.shape_cast %208 : vector<8xf32> to vector<8x1xf32>
    %cst_93 = arith.constant 3.125000e-02 : f32
    %210 = vector.broadcast %cst_93 : f32 to vector<8x1xf32>
    %211 = arith.mulf %209, %210 : vector<8x1xf32>
    %cst_94 = arith.constant 9.99999974E-6 : f32
    %212 = vector.broadcast %cst_94 : f32 to vector<8x1xf32>
    %213 = arith.addf %211, %212 : vector<8x1xf32>
    %214 = math.rsqrt %213 : vector<8x1xf32>
    %215 = vector.broadcast %214 : vector<8x1xf32> to vector<8x128xf32>
    %216 = arith.mulf %204, %215 : vector<8x128xf32>
    %217 = vector.broadcast %142 : vector<1x128xf32> to vector<8x128xf32>
    %218 = arith.mulf %216, %217 : vector<8x128xf32>
    %219 = vector.broadcast %145 : vector<1x128xf32> to vector<8x128xf32>
    %220 = arith.addf %218, %219 : vector<8x128xf32>
    %cst_95 = arith.constant dense<0.000000e+00> : vector<8x128xf32>
    %221 = tpu.matmul %220, %148, %cst_95 {dimension_numbers = #tpu.dot_dimension_numbers<[1], [0], [0], [1], [0, 0, 1, 1], [], []>} : vector<8x128xf32>, vector<128x128xf32>, vector<8x128xf32> -> vector<8x128xf32>
    %222 = vector.broadcast %151 : vector<1x128xf32> to vector<8x128xf32>
    %223 = arith.addf %221, %222 : vector<8x128xf32>
    %cst_96 = arith.constant 5.000000e-01 : f32
    %224 = vector.broadcast %cst_96 : f32 to vector<8x128xf32>
    %225 = arith.mulf %224, %223 : vector<8x128xf32>
    %cst_97 = arith.constant 0.707106769 : f32
    %226 = vector.broadcast %cst_97 : f32 to vector<8x128xf32>
    %227 = arith.mulf %223, %226 : vector<8x128xf32>
    %228 = math.erf %227 : vector<8x128xf32>
    %cst_98 = arith.constant 1.000000e+00 : f32
    %229 = vector.broadcast %cst_98 : f32 to vector<8x128xf32>
    %230 = arith.addf %229, %228 : vector<8x128xf32>
    %231 = arith.mulf %225, %230 : vector<8x128xf32>
    %cst_99 = arith.constant dense<0.000000e+00> : vector<8x128xf32>
    %232 = tpu.matmul %231, %154, %cst_99 {dimension_numbers = #tpu.dot_dimension_numbers<[1], [0], [0], [1], [0, 0, 1, 1], [], []>} : vector<8x128xf32>, vector<128x128xf32>, vector<8x128xf32> -> vector<8x128xf32>
    %233 = vector.broadcast %157 : vector<1x128xf32> to vector<8x128xf32>
    %234 = arith.addf %232, %233 : vector<8x128xf32>
    %235 = arith.addf %198, %234 : vector<8x128xf32>
    %c2_i32 = arith.constant 2 : i32
    %c0_100 = arith.constant 0 : index
    %c0_101 = arith.constant 0 : index
    %236 = vector.load %arg15[%c0_100, %c0_101] : memref<1x128xf32, #tpu.memory_space<vmem>>, vector<1x128xf32>
    %c0_102 = arith.constant 0 : index
    %c0_103 = arith.constant 0 : index
    %237 = vector.load %arg16[%c0_102, %c0_103] : memref<1x128xf32, #tpu.memory_space<vmem>>, vector<1x128xf32>
    %cst_104 = arith.constant dense<0.000000e+00> : vector<8xf32>
    %238 = vector.multi_reduction <add>, %235, %cst_104 [1] : vector<8x128xf32> to vector<8xf32>
    %239 = vector.shape_cast %238 : vector<8xf32> to vector<8x1xf32>
    %cst_105 = arith.constant 3.125000e-02 : f32
    %240 = vector.broadcast %cst_105 : f32 to vector<8x1xf32>
    %241 = arith.mulf %239, %240 : vector<8x1xf32>
    %242 = vector.broadcast %241 : vector<8x1xf32> to vector<8x128xf32>
    %243 = arith.subf %235, %242 : vector<8x128xf32>
    %244 = arith.mulf %243, %243 : vector<8x128xf32>
    %cst_106 = arith.constant 0.000000e+00 : f32
    %245 = vector.broadcast %cst_106 : f32 to vector<8x128xf32>
    %246 = arith.select %5, %244, %245 : vector<8x128xi1>, vector<8x128xf32>
    %cst_107 = arith.constant dense<0.000000e+00> : vector<8xf32>
    %247 = vector.multi_reduction <add>, %246, %cst_107 [1] : vector<8x128xf32> to vector<8xf32>
    %248 = vector.shape_cast %247 : vector<8xf32> to vector<8x1xf32>
    %cst_108 = arith.constant 3.125000e-02 : f32
    %249 = vector.broadcast %cst_108 : f32 to vector<8x1xf32>
    %250 = arith.mulf %248, %249 : vector<8x1xf32>
    %cst_109 = arith.constant 9.99999974E-6 : f32
    %251 = vector.broadcast %cst_109 : f32 to vector<8x1xf32>
    %252 = arith.addf %250, %251 : vector<8x1xf32>
    %253 = math.rsqrt %252 : vector<8x1xf32>
    %254 = vector.broadcast %253 : vector<8x1xf32> to vector<8x128xf32>
    %255 = arith.mulf %243, %254 : vector<8x128xf32>
    %256 = vector.broadcast %236 : vector<1x128xf32> to vector<8x128xf32>
    %257 = arith.mulf %255, %256 : vector<8x128xf32>
    %258 = vector.broadcast %237 : vector<1x128xf32> to vector<8x128xf32>
    %259 = arith.addf %257, %258 : vector<8x128xf32>
    %c0_110 = arith.constant 0 : index
    %c0_111 = arith.constant 0 : index
    %260 = vector.load %arg17[%c0_110, %c0_111] : memref<8x128xf32, #tpu.memory_space<vmem>>, vector<8x128xf32>
    tpu.vector_store %arg17[%c0_110, %c0_111], %259 {strides = array<i32>} : memref<8x128xf32, #tpu.memory_space<vmem>>, vector<8x128xf32>,
    return
  }
  func.func @transform_0(%arg0: i32) -> (i32, i32) {
    %c0_i32 = arith.constant 0 : i32
    %c0_i32_0 = arith.constant 0 : i32
    return %arg0, %c0_i32 : i32, i32
  }
  func.func @transform_1(%arg0: i32) -> (i32, i32, i32) {
    %c0_i32 = arith.constant 0 : i32
    %c0_i32_0 = arith.constant 0 : i32
    %c0_i32_1 = arith.constant 0 : i32
    return %arg0, %c0_i32, %c0_i32_0 : i32, i32, i32
  }
  func.func @transform_2(%arg0: i32) -> (i32, i32, i32) {
    %c0_i32 = arith.constant 0 : i32
    %c0_i32_0 = arith.constant 0 : i32
    %c0_i32_1 = arith.constant 0 : i32
    %c0_i32_2 = arith.constant 0 : i32
    return %c0_i32, %c0_i32_0, %c0_i32_1 : i32, i32, i32
  }
  func.func @transform_3(%arg0: i32) -> (i32, i32, i32) {
    %c0_i32 = arith.constant 0 : i32
    %c0_i32_0 = arith.constant 0 : i32
    %c0_i32_1 = arith.constant 0 : i32
    %c0_i32_2 = arith.constant 0 : i32
    return %c0_i32, %c0_i32_0, %c0_i32_1 : i32, i32, i32
  }
  func.func @transform_4(%arg0: i32) -> (i32, i32, i32) {
    %c0_i32 = arith.constant 0 : i32
    %c0_i32_0 = arith.constant 0 : i32
    %c0_i32_1 = arith.constant 0 : i32
    %c0_i32_2 = arith.constant 0 : i32
    return %c0_i32, %c0_i32_0, %c0_i32_1 : i32, i32, i32
  }
  func.func @transform_5(%arg0: i32) -> (i32, i32, i32) {
    %c0_i32 = arith.constant 0 : i32
    %c0_i32_0 = arith.constant 0 : i32
    %c0_i32_1 = arith.constant 0 : i32
    %c0_i32_2 = arith.constant 0 : i32
    return %c0_i32, %c0_i32_0, %c0_i32_1 : i32, i32, i32
  }
  func.func @transform_6(%arg0: i32) -> (i32, i32, i32) {
    %c0_i32 = arith.constant 0 : i32
    %c0_i32_0 = arith.constant 0 : i32
    %c0_i32_1 = arith.constant 0 : i32
    %c0_i32_2 = arith.constant 0 : i32
    return %c0_i32, %c0_i32_0, %c0_i32_1 : i32, i32, i32
  }
  func.func @transform_7(%arg0: i32) -> (i32, i32, i32) {
    %c0_i32 = arith.constant 0 : i32
    %c0_i32_0 = arith.constant 0 : i32
    %c0_i32_1 = arith.constant 0 : i32
    %c0_i32_2 = arith.constant 0 : i32
    return %c0_i32, %c0_i32_0, %c0_i32_1 : i32, i32, i32
  }
  func.func @transform_8(%arg0: i32) -> (i32, i32, i32) {
    %c0_i32 = arith.constant 0 : i32
    %c0_i32_0 = arith.constant 0 : i32
    %c0_i32_1 = arith.constant 0 : i32
    %c0_i32_2 = arith.constant 0 : i32
    return %c0_i32, %c0_i32_0, %c0_i32_1 : i32, i32, i32
  }
  func.func @transform_9(%arg0: i32) -> (i32, i32, i32) {
    %c0_i32 = arith.constant 0 : i32
    %c0_i32_0 = arith.constant 0 : i32
    %c0_i32_1 = arith.constant 0 : i32
    %c0_i32_2 = arith.constant 0 : i32
    return %c0_i32, %c0_i32_0, %c0_i32_1 : i32, i32, i32
  }
  func.func @transform_10(%arg0: i32) -> (i32, i32, i32) {
    %c0_i32 = arith.constant 0 : i32
    %c0_i32_0 = arith.constant 0 : i32
    %c0_i32_1 = arith.constant 0 : i32
    %c0_i32_2 = arith.constant 0 : i32
    return %c0_i32, %c0_i32_0, %c0_i32_1 : i32, i32, i32
  }
  func.func @transform_11(%arg0: i32) -> (i32, i32, i32) {
    %c0_i32 = arith.constant 0 : i32
    %c0_i32_0 = arith.constant 0 : i32
    %c0_i32_1 = arith.constant 0 : i32
    %c0_i32_2 = arith.constant 0 : i32
    return %c0_i32, %c0_i32_0, %c0_i32_1 : i32, i32, i32
  }
  func.func @transform_12(%arg0: i32) -> (i32, i32, i32) {
    %c0_i32 = arith.constant 0 : i32
    %c0_i32_0 = arith.constant 0 : i32
    %c0_i32_1 = arith.constant 0 : i32
    %c0_i32_2 = arith.constant 0 : i32
    return %c0_i32, %c0_i32_0, %c0_i32_1 : i32, i32, i32
  }
  func.func @transform_13(%arg0: i32) -> (i32, i32, i32) {
    %c0_i32 = arith.constant 0 : i32
    %c0_i32_0 = arith.constant 0 : i32
    %c0_i32_1 = arith.constant 0 : i32
    %c0_i32_2 = arith.constant 0 : i32
    return %c0_i32, %c0_i32_0, %c0_i32_1 : i32, i32, i32
  }
  func.func @transform_14(%arg0: i32) -> (i32, i32) {
    %c0_i32 = arith.constant 0 : i32
    %c0_i32_0 = arith.constant 0 : i32
    %c0_i32_1 = arith.constant 0 : i32
    return %c0_i32, %c0_i32_0 : i32, i32
  }
  func.func @transform_15(%arg0: i32) -> (i32, i32) {
    %c0_i32 = arith.constant 0 : i32
    %c0_i32_0 = arith.constant 0 : i32
    %c0_i32_1 = arith.constant 0 : i32
    return %c0_i32, %c0_i32_0 : i32, i32
  }
  func.func @transform_16(%arg0: i32) -> (i32, i32) {
    %c0_i32 = arith.constant 0 : i32
    %c0_i32_0 = arith.constant 0 : i32
    return %arg0, %c0_i32 : i32, i32
  }
}

</mosaic_0001>

<llo_original>
// kernel: tpu_custom_call.1
$region0: #{tpu_custom_call.1}
  #allocation0 [shape = 'u32[]', space=smem, size = 0x4, offset = 0x4, fixed_abs, tag = 'smem constant byte address 0x4 - core index']
  #allocation1 [shape = 'u32[72,128]{1,0:T(1,128)}', space=vmem, size = 0x9000, scoped, tag = 'internal scratch']
  %s0 = inlined_call_operand.vmem [shape: f32[16,128], index: 0, kind: input, shape index: {}]
  %s1 = inlined_call_operand.vmem [shape: f32[2,8,8], index: 1, kind: input, shape index: {}]
  %s2 = inlined_call_operand.vmem [shape: f32[2,1,128], index: 2, kind: input, shape index: {}]
  %s3 = inlined_call_operand.hbm [shape: f32[2,1,128], index: 3, kind: input, shape index: {}]
  %s4 = inlined_call_operand.vmem [shape: f32[2,128,8], index: 4, kind: input, shape index: {}]
  %s5 = inlined_call_operand.vmem [shape: f32[2,128,1], index: 5, kind: input, shape index: {}]
  %s6 = inlined_call_operand.hbm [shape: f32[2,8,128], index: 6, kind: input, shape index: {}]
  %s7 = inlined_call_operand.vmem [shape: f32[2,8,1], index: 7, kind: input, shape index: {}]
  %s8 = inlined_call_operand.vmem [shape: f32[2,1,128], index: 8, kind: input, shape index: {}]
  %s9 = inlined_call_operand.hbm [shape: f32[2,1,128], index: 9, kind: input, shape index: {}]
  %s10 = inlined_call_operand.vmem [shape: f32[2,128,128], index: 10, kind: input, shape index: {}]
  %s11 = inlined_call_operand.hbm [shape: f32[2,1,128], index: 11, kind: input, shape index: {}]
  %s12 = inlined_call_operand.vmem [shape: f32[2,128,128], index: 12, kind: input, shape index: {}]
  %s13 = inlined_call_operand.vmem [shape: f32[2,1,128], index: 13, kind: input, shape index: {}]
  %s14 = inlined_call_operand.vmem [shape: f32[1,128], index: 14, kind: input, shape index: {}]
  %s15 = inlined_call_operand.vmem [shape: f32[1,128], index: 15, kind: input, shape index: {}]
  %s16 = inlined_call_operand.hbm [shape: f32[16,128], index: 16, kind: output, shape index: {}]
  %s17 = sld [smem:[#allocation0]]
  $region113: #{tpu_custom_call.1} parent=0
    _
  %s19 = ssub.s32 1, %s17
  %s20 = scalar_select 0, %s19, %s17
  $region1: #{tpu_custom_call.1} parent=0
    #allocation2 [shape = 'u8[1024]{0}', space=vmem, size = 0x400, scoped, tag = 'input window, operand 3, single buffered']
    #allocation3 [shape = 's32[2]{0}', space=sflag, size = 0x8, scoped, tag = 'scoped memory for tpu_custom_call.1']
    #allocation4 [shape = 's32[2]{0}', space=sflag, size = 0x8, scoped, tag = 'scoped memory for tpu_custom_call.1']
    #allocation5 [shape = 'u8[8192]{0}', space=vmem, size = 0x2000, scoped, tag = 'input window, operand 6, single buffered']
    #allocation6 [shape = 's32[1]{0}', space=sflag, size = 0x4, scoped, tag = 'scoped memory for tpu_custom_call.1']
    #allocation7 [shape = 'u8[1024]{0}', space=vmem, size = 0x400, scoped, tag = 'input window, operand 9, single buffered']
    #allocation8 [shape = 'u8[1024]{0}', space=vmem, size = 0x400, scoped, tag = 'input window, operand 11, single buffered']
    #allocation9 [shape = 's32[1]{0}', space=sflag, size = 0x4, scoped, tag = 'scoped memory for tpu_custom_call.1']
    #allocation10 [shape = 'u8[8192]{0}', space=vmem, size = 0x2000, scoped, tag = 'output window, operand 0']
    %21 = vsyncpa [#allocation3], 0
    %22 = vsyncpa [#allocation6], 0
    %23 = vsyncpa [#allocation9], 0
    %24 = vsyncpa [#allocation4], 0
    %s25 = scalar_lea.sflag [#allocation4], 1
    %26 = vsyncpa %s25, 0
    loop: start=0, step=1, limit=4
    $region2: #{tpu_custom_call.1} parent=1 // loop_pre_header
      _
    $region3: #{tpu_custom_call.1} parent=1 // loop_header
      %s28 = sphi 0, %s32
      %p29 = scmp.ge.s32.totalorder %s28, 4
      %s38 = sphi 0, %s40
      %s41 = sphi 0, %s38
      %s42 = sphi 0, %s41
      %s58 = sphi 0, %s42
      %s64 = sphi 0, %s66
      %s67 = sphi 0, %s64
      %s68 = sphi 0, %s67
      %s84 = sphi 0, %s68
      %s88 = sphi 0, %s88
      %s90 = sphi 0, %s88
      %s91 = sphi 0, %s90
      %s105 = sphi 0, %s91
      %s109 = sphi 0, %s109
      %s111 = sphi 0, %s109
      %s112 = sphi 0, %s111
      %s126 = sphi 0, %s112
      %s130 = sphi 0, %s130
      %s132 = sphi 0, %s130
      %s133 = sphi 0, %s132
      %s147 = sphi 0, %s133
      %s151 = sphi 0, %s151
      %s153 = sphi 0, %s151
      %s154 = sphi 0, %s153
      %s168 = sphi 0, %s154
      %s172 = sphi 0, %s172
      %s174 = sphi 0, %s172
      %s175 = sphi 0, %s174
      %s189 = sphi 0, %s175
      %s193 = sphi 0, %s193
      %s195 = sphi 0, %s193
      %s196 = sphi 0, %s195
      %s210 = sphi 0, %s196
      %s214 = sphi 0, %s214
      %s216 = sphi 0, %s214
      %s217 = sphi 0, %s216
      %s231 = sphi 0, %s217
      %s235 = sphi 0, %s235
      %s237 = sphi 0, %s235
      %s238 = sphi 0, %s237
      %s252 = sphi 0, %s238
      %s256 = sphi 0, %s256
      %s258 = sphi 0, %s256
      %s259 = sphi 0, %s258
      %s273 = sphi 0, %s259
      %s277 = sphi 0, %s277
      %s279 = sphi 0, %s277
      %s280 = sphi 0, %s279
      %s294 = sphi 0, %s280
      %s298 = sphi 0, %s298
      %s300 = sphi 0, %s298
      %s301 = sphi 0, %s300
      %s315 = sphi 0, %s301
      %s319 = sphi 0, %s319
      %s321 = sphi 0, %s319
      %s322 = sphi 0, %s321
      %s336 = sphi 0, %s322
      %s340 = sphi 0, %s340
      %s342 = sphi 0, %s340
      %s343 = sphi 0, %s342
      %s357 = sphi 0, %s343
      %s361 = sphi 0, %s361
      %s363 = sphi 0, %s361
      %s364 = sphi 0, %s363
      %s378 = sphi 0, %s364
      %s384 = sphi 0, %s386
      %s387 = sphi 0, %s384
      %s388 = sphi 0, %s387
      %s404 = sphi 0, %s388
    $region4: #{tpu_custom_call.1} parent=1 // loop_header_branch
      %31 = sbr.rel (%p29) target = $region8
    $region5: #{tpu_custom_call.1} parent=1 // loop_body
      %s33 = ssub.s32 %s28, 1
      %s34 = ssub.s32 %s28, 2
      %s35 = sadd.s32 %s28, 1
      %s36 = ssub.s32 %s28, %s35
      %p37 = scmp.eq.s32.totalorder %s36, 0
      %s39 = sadd.s32 %s38, 1
      %s40 = scalar_select %p37, %s38, %s39
      %p43 = pneg %p37
      %p44 = scmp.eq.s32.totalorder %s28, 1
      %p45 = por %p43, %p44
      %p46 = scmp.ne.s32.totalorder %s38, %s41
      %p47 = scmp.eq.s32.totalorder %s28, 0
      %p48 = por %p46, %p47
      %p49 = scmp.ne.s32.totalorder %s38, %s41
      %p50 = scmp.eq.s32.totalorder %s33, 1
      %p51 = por %p49, %p50
      %p52 = scmp.ne.s32.totalorder %s41, %s42
      %p53 = scmp.eq.s32.totalorder %s33, 0
      %p54 = por %p52, %p53
      %p55 = scmp.ne.s32.totalorder %s41, %s42
      %p56 = scmp.eq.s32.totalorder %s34, 1
      %p57 = por %p55, %p56
      %p59 = scmp.ne.s32.totalorder %s42, %s58
      %p60 = scmp.eq.s32.totalorder %s34, 0
      %p61 = por %p59, %p60
      %s62 = ssub.s32 %s28, %s35
      %p63 = scmp.eq.s32.totalorder %s62, 0
      %s65 = sadd.s32 %s64, 1
      %s66 = scalar_select %p63, %s64, %s65
      %p69 = pneg %p63
      %p70 = scmp.eq.s32.totalorder %s28, 1
      %p71 = por %p69, %p70
      %p72 = scmp.ne.s32.totalorder %s64, %s67
      %p73 = scmp.eq.s32.totalorder %s28, 0
      %p74 = por %p72, %p73
      %p75 = scmp.ne.s32.totalorder %s64, %s67
      %p76 = scmp.eq.s32.totalorder %s33, 1
      %p77 = por %p75, %p76
      %p78 = scmp.ne.s32.totalorder %s67, %s68
      %p79 = scmp.eq.s32.totalorder %s33, 0
      %p80 = por %p78, %p79
      %p81 = scmp.ne.s32.totalorder %s67, %s68
      %p82 = scmp.eq.s32.totalorder %s34, 1
      %p83 = por %p81, %p82
      %p85 = scmp.ne.s32.totalorder %s68, %s84
      %p86 = scmp.eq.s32.totalorder %s34, 0
      %p87 = por %p85, %p86
      %s89 = sadd.s32 %s88, 1
      %p92 = scmp.eq.s32.totalorder %s28, 1
      %p93 = scmp.ne.s32.totalorder %s88, %s90
      %p94 = scmp.eq.s32.totalorder %s28, 0
      %p95 = por %p93, %p94
      %p96 = scmp.ne.s32.totalorder %s88, %s90
      %p97 = scmp.eq.s32.totalorder %s33, 1
      %p98 = por %p96, %p97
      %p99 = scmp.ne.s32.totalorder %s90, %s91
      %p100 = scmp.eq.s32.totalorder %s33, 0
      %p101 = por %p99, %p100
      %p102 = scmp.ne.s32.totalorder %s90, %s91
      %p103 = scmp.eq.s32.totalorder %s34, 1
      %p104 = por %p102, %p103
      %p106 = scmp.ne.s32.totalorder %s91, %s105
      %p107 = scmp.eq.s32.totalorder %s34, 0
      %p108 = por %p106, %p107
      %s110 = sadd.s32 %s109, 1
      %p113 = scmp.eq.s32.totalorder %s28, 1
      %p114 = scmp.ne.s32.totalorder %s109, %s111
      %p115 = scmp.eq.s32.totalorder %s28, 0
      %p116 = por %p114, %p115
      %p117 = scmp.ne.s32.totalorder %s109, %s111
      %p118 = scmp.eq.s32.totalorder %s33, 1
      %p119 = por %p117, %p118
      %p120 = scmp.ne.s32.totalorder %s111, %s112
      %p121 = scmp.eq.s32.totalorder %s33, 0
      %p122 = por %p120, %p121
      %p123 = scmp.ne.s32.totalorder %s111, %s112
      %p124 = scmp.eq.s32.totalorder %s34, 1
      %p125 = por %p123, %p124
      %p127 = scmp.ne.s32.totalorder %s112, %s126
      %p128 = scmp.eq.s32.totalorder %s34, 0
      %p129 = por %p127, %p128
      %s131 = sadd.s32 %s130, 1
      %p134 = scmp.eq.s32.totalorder %s28, 1
      %p135 = scmp.ne.s32.totalorder %s130, %s132
      %p136 = scmp.eq.s32.totalorder %s28, 0
      %p137 = por %p135, %p136
      %p138 = scmp.ne.s32.totalorder %s130, %s132
      %p139 = scmp.eq.s32.totalorder %s33, 1
      %p140 = por %p138, %p139
      %p141 = scmp.ne.s32.totalorder %s132, %s133
      %p142 = scmp.eq.s32.totalorder %s33, 0
      %p143 = por %p141, %p142
      %p144 = scmp.ne.s32.totalorder %s132, %s133
      %p145 = scmp.eq.s32.totalorder %s34, 1
      %p146 = por %p144, %p145
      %p148 = scmp.ne.s32.totalorder %s133, %s147
      %p149 = scmp.eq.s32.totalorder %s34, 0
      %p150 = por %p148, %p149
      %s152 = sadd.s32 %s151, 1
      %p155 = scmp.eq.s32.totalorder %s28, 1
      %p156 = scmp.ne.s32.totalorder %s151, %s153
      %p157 = scmp.eq.s32.totalorder %s28, 0
      %p158 = por %p156, %p157
      %p159 = scmp.ne.s32.totalorder %s151, %s153
      %p160 = scmp.eq.s32.totalorder %s33, 1
      %p161 = por %p159, %p160
      %p162 = scmp.ne.s32.totalorder %s153, %s154
      %p163 = scmp.eq.s32.totalorder %s33, 0
      %p164 = por %p162, %p163
      %p165 = scmp.ne.s32.totalorder %s153, %s154
      %p166 = scmp.eq.s32.totalorder %s34, 1
      %p167 = por %p165, %p166
      %p169 = scmp.ne.s32.totalorder %s154, %s168
      %p170 = scmp.eq.s32.totalorder %s34, 0
      %p171 = por %p169, %p170
      %s173 = sadd.s32 %s172, 1
      %p176 = scmp.eq.s32.totalorder %s28, 1
      %p177 = scmp.ne.s32.totalorder %s172, %s174
      %p178 = scmp.eq.s32.totalorder %s28, 0
      %p179 = por %p177, %p178
      %p180 = scmp.ne.s32.totalorder %s172, %s174
      %p181 = scmp.eq.s32.totalorder %s33, 1
      %p182 = por %p180, %p181
      %p183 = scmp.ne.s32.totalorder %s174, %s175
      %p184 = scmp.eq.s32.totalorder %s33, 0
      %p185 = por %p183, %p184
      %p186 = scmp.ne.s32.totalorder %s174, %s175
      %p187 = scmp.eq.s32.totalorder %s34, 1
      %p188 = por %p186, %p187
      %p190 = scmp.ne.s32.totalorder %s175, %s189
      %p191 = scmp.eq.s32.totalorder %s34, 0
      %p192 = por %p190, %p191
      %s194 = sadd.s32 %s193, 1
      %p197 = scmp.eq.s32.totalorder %s28, 1
      %p198 = scmp.ne.s32.totalorder %s193, %s195
      %p199 = scmp.eq.s32.totalorder %s28, 0
      %p200 = por %p198, %p199
      %p201 = scmp.ne.s32.totalorder %s193, %s195
      %p202 = scmp.eq.s32.totalorder %s33, 1
      %p203 = por %p201, %p202
      %p204 = scmp.ne.s32.totalorder %s195, %s196
      %p205 = scmp.eq.s32.totalorder %s33, 0
      %p206 = por %p204, %p205
      %p207 = scmp.ne.s32.totalorder %s195, %s196
      %p208 = scmp.eq.s32.totalorder %s34, 1
      %p209 = por %p207, %p208
      %p211 = scmp.ne.s32.totalorder %s196, %s210
      %p212 = scmp.eq.s32.totalorder %s34, 0
      %p213 = por %p211, %p212
      %s215 = sadd.s32 %s214, 1
      %p218 = scmp.eq.s32.totalorder %s28, 1
      %p219 = scmp.ne.s32.totalorder %s214, %s216
      %p220 = scmp.eq.s32.totalorder %s28, 0
      %p221 = por %p219, %p220
      %p222 = scmp.ne.s32.totalorder %s214, %s216
      %p223 = scmp.eq.s32.totalorder %s33, 1
      %p224 = por %p222, %p223
      %p225 = scmp.ne.s32.totalorder %s216, %s217
      %p226 = scmp.eq.s32.totalorder %s33, 0
      %p227 = por %p225, %p226
      %p228 = scmp.ne.s32.totalorder %s216, %s217
      %p229 = scmp.eq.s32.totalorder %s34, 1
      %p230 = por %p228, %p229
      %p232 = scmp.ne.s32.totalorder %s217, %s231
      %p233 = scmp.eq.s32.totalorder %s34, 0
      %p234 = por %p232, %p233
      %s236 = sadd.s32 %s235, 1
      %p239 = scmp.eq.s32.totalorder %s28, 1
      %p240 = scmp.ne.s32.totalorder %s235, %s237
      %p241 = scmp.eq.s32.totalorder %s28, 0
      %p242 = por %p240, %p241
      %p243 = scmp.ne.s32.totalorder %s235, %s237
      %p244 = scmp.eq.s32.totalorder %s33, 1
      %p245 = por %p243, %p244
      %p246 = scmp.ne.s32.totalorder %s237, %s238
      %p247 = scmp.eq.s32.totalorder %s33, 0
      %p248 = por %p246, %p247
      %p249 = scmp.ne.s32.totalorder %s237, %s238
      %p250 = scmp.eq.s32.totalorder %s34, 1
      %p251 = por %p249, %p250
      %p253 = scmp.ne.s32.totalorder %s238, %s252
      %p254 = scmp.eq.s32.totalorder %s34, 0
      %p255 = por %p253, %p254
      %s257 = sadd.s32 %s256, 1
      %p260 = scmp.eq.s32.totalorder %s28, 1
      %p261 = scmp.ne.s32.totalorder %s256, %s258
      %p262 = scmp.eq.s32.totalorder %s28, 0
      %p263 = por %p261, %p262
      %p264 = scmp.ne.s32.totalorder %s256, %s258
      %p265 = scmp.eq.s32.totalorder %s33, 1
      %p266 = por %p264, %p265
      %p267 = scmp.ne.s32.totalorder %s258, %s259
      %p268 = scmp.eq.s32.totalorder %s33, 0
      %p269 = por %p267, %p268
      %p270 = scmp.ne.s32.totalorder %s258, %s259
      %p271 = scmp.eq.s32.totalorder %s34, 1
      %p272 = por %p270, %p271
      %p274 = scmp.ne.s32.totalorder %s259, %s273
      %p275 = scmp.eq.s32.totalorder %s34, 0
      %p276 = por %p274, %p275
      %s278 = sadd.s32 %s277, 1
      %p281 = scmp.eq.s32.totalorder %s28, 1
      %p282 = scmp.ne.s32.totalorder %s277, %s279
      %p283 = scmp.eq.s32.totalorder %s28, 0
      %p284 = por %p282, %p283
      %p285 = scmp.ne.s32.totalorder %s277, %s279
      %p286 = scmp.eq.s32.totalorder %s33, 1
      %p287 = por %p285, %p286
      %p288 = scmp.ne.s32.totalorder %s279, %s280
      %p289 = scmp.eq.s32.totalorder %s33, 0
      %p290 = por %p288, %p289
      %p291 = scmp.ne.s32.totalorder %s279, %s280
      %p292 = scmp.eq.s32.totalorder %s34, 1
      %p293 = por %p291, %p292
      %p295 = scmp.ne.s32.totalorder %s280, %s294
      %p296 = scmp.eq.s32.totalorder %s34, 0
      %p297 = por %p295, %p296
      %s299 = sadd.s32 %s298, 1
      %p302 = scmp.eq.s32.totalorder %s28, 1
      %p303 = scmp.ne.s32.totalorder %s298, %s300
      %p304 = scmp.eq.s32.totalorder %s28, 0
      %p305 = por %p303, %p304
      %p306 = scmp.ne.s32.totalorder %s298, %s300
      %p307 = scmp.eq.s32.totalorder %s33, 1
      %p308 = por %p306, %p307
      %p309 = scmp.ne.s32.totalorder %s300, %s301
      %p310 = scmp.eq.s32.totalorder %s33, 0
      %p311 = por %p309, %p310
      %p312 = scmp.ne.s32.totalorder %s300, %s301
      %p313 = scmp.eq.s32.totalorder %s34, 1
      %p314 = por %p312, %p313
      %p316 = scmp.ne.s32.totalorder %s301, %s315
      %p317 = scmp.eq.s32.totalorder %s34, 0
      %p318 = por %p316, %p317
      %s320 = sadd.s32 %s319, 1
      %p323 = scmp.eq.s32.totalorder %s28, 1
      %p324 = scmp.ne.s32.totalorder %s319, %s321
      %p325 = scmp.eq.s32.totalorder %s28, 0
      %p326 = por %p324, %p325
      %p327 = scmp.ne.s32.totalorder %s319, %s321
      %p328 = scmp.eq.s32.totalorder %s33, 1
      %p329 = por %p327, %p328
      %p330 = scmp.ne.s32.totalorder %s321, %s322
      %p331 = scmp.eq.s32.totalorder %s33, 0
      %p332 = por %p330, %p331
      %p333 = scmp.ne.s32.totalorder %s321, %s322
      %p334 = scmp.eq.s32.totalorder %s34, 1
      %p335 = por %p333, %p334
      %p337 = scmp.ne.s32.totalorder %s322, %s336
      %p338 = scmp.eq.s32.totalorder %s34, 0
      %p339 = por %p337, %p338
      %s341 = sadd.s32 %s340, 1
      %p344 = scmp.eq.s32.totalorder %s28, 1
      %p345 = scmp.ne.s32.totalorder %s340, %s342
      %p346 = scmp.eq.s32.totalorder %s28, 0
      %p347 = por %p345, %p346
      %p348 = scmp.ne.s32.totalorder %s340, %s342
      %p349 = scmp.eq.s32.totalorder %s33, 1
      %p350 = por %p348, %p349
      %p351 = scmp.ne.s32.totalorder %s342, %s343
      %p352 = scmp.eq.s32.totalorder %s33, 0
      %p353 = por %p351, %p352
      %p354 = scmp.ne.s32.totalorder %s342, %s343
      %p355 = scmp.eq.s32.totalorder %s34, 1
      %p356 = por %p354, %p355
      %p358 = scmp.ne.s32.totalorder %s343, %s357
      %p359 = scmp.eq.s32.totalorder %s34, 0
      %p360 = por %p358, %p359
      %s362 = sadd.s32 %s361, 1
      %p365 = scmp.eq.s32.totalorder %s28, 1
      %p366 = scmp.ne.s32.totalorder %s361, %s363
      %p367 = scmp.eq.s32.totalorder %s28, 0
      %p368 = por %p366, %p367
      %p369 = scmp.ne.s32.totalorder %s361, %s363
      %p370 = scmp.eq.s32.totalorder %s33, 1
      %p371 = por %p369, %p370
      %p372 = scmp.ne.s32.totalorder %s363, %s364
      %p373 = scmp.eq.s32.totalorder %s33, 0
      %p374 = por %p372, %p373
      %p375 = scmp.ne.s32.totalorder %s363, %s364
      %p376 = scmp.eq.s32.totalorder %s34, 1
      %p377 = por %p375, %p376
      %p379 = scmp.ne.s32.totalorder %s364, %s378
      %p380 = scmp.eq.s32.totalorder %s34, 0
      %p381 = por %p379, %p380
      %s382 = ssub.s32 %s28, %s35
      %p383 = scmp.eq.s32.totalorder %s382, 0
      %s385 = sadd.s32 %s384, 1
      %s386 = scalar_select %p383, %s384, %s385
      %p389 = pneg %p383
      %p390 = scmp.eq.s32.totalorder %s28, 1
      %p391 = por %p389, %p390
      %p392 = scmp.ne.s32.totalorder %s384, %s387
      %p393 = scmp.eq.s32.totalorder %s28, 0
      %p394 = por %p392, %p393
      %p395 = scmp.ne.s32.totalorder %s384, %s387
      %p396 = scmp.eq.s32.totalorder %s33, 1
      %p397 = por %p395, %p396
      %p398 = scmp.ne.s32.totalorder %s387, %s388
      %p399 = scmp.eq.s32.totalorder %s33, 0
      %p400 = por %p398, %p399
      %p401 = scmp.ne.s32.totalorder %s387, %s388
      %p402 = scmp.eq.s32.totalorder %s34, 1
      %p403 = por %p401, %p402
      %p405 = scmp.ne.s32.totalorder %s388, %s404
      %p406 = scmp.eq.s32.totalorder %s34, 0
      %p407 = por %p405, %p406
      %p408 = scmp.le.s32.totalorder 1, %s28
      %p409 = scmp.lt.s32.totalorder %s28, 3
      %p410 = pnand %p408, %p409
      %p411 = pneg %p410
      // Predicated region
      $region9: #{tpu_custom_call.1} parent=5 // pred_check
        _
      $region10: #{tpu_custom_call.1} parent=5 // pred_check_branch
        %413 = sbr.rel (%p410) target = $region12
      $region11: #{tpu_custom_call.1} parent=5 // pred_region
        %s414 = ssub.s32 %s28, 1
        // Predicated region
        $region13: #{tpu_custom_call.1} parent=11 // pred_check
          %p415 = pneg %p101
        $region14: #{tpu_custom_call.1} parent=11 // pred_check_branch
          %417 = sbr.rel (%p415) target = $region16
        $region15: #{tpu_custom_call.1} parent=11 // pred_region
          _
        $region16: #{tpu_custom_call.1} parent=11 // pred_fallthru
          _
        // Predicated region
        $region17: #{tpu_custom_call.1} parent=11 // pred_check
          %p418 = pneg %p122
        $region18: #{tpu_custom_call.1} parent=11 // pred_check_branch
          %420 = sbr.rel (%p418) target = $region20
        $region19: #{tpu_custom_call.1} parent=11 // pred_region
          %422 = vsyncadd [#allocation3], 0
          %s423 = sshll.u32 %s3, 4
          %s424 = int_to_ptr.hbm [resolvable:$true] %s423
          %s425 = sshll.u32 [#allocation2], 4
          %s426 = int_to_ptr.vmem [resolvable:$true] %s425
          %431 = dma.hbm_to_vmem [thread:$0]  %s424, 32, %s426, [#allocation3], 16, 16, 1
        $region20: #{tpu_custom_call.1} parent=11 // pred_fallthru
          _
        // Predicated region
        $region21: #{tpu_custom_call.1} parent=11 // pred_check
          %p432 = pneg %p143
        $region22: #{tpu_custom_call.1} parent=11 // pred_check_branch
          %434 = sbr.rel (%p432) target = $region24
        $region23: #{tpu_custom_call.1} parent=11 // pred_region
          _
        $region24: #{tpu_custom_call.1} parent=11 // pred_fallthru
          _
        // Predicated region
        $region25: #{tpu_custom_call.1} parent=11 // pred_check
          %p435 = pneg %p164
        $region26: #{tpu_custom_call.1} parent=11 // pred_check_branch
          %437 = sbr.rel (%p435) target = $region28
        $region27: #{tpu_custom_call.1} parent=11 // pred_region
          _
        $region28: #{tpu_custom_call.1} parent=11 // pred_fallthru
          _
        // Predicated region
        $region29: #{tpu_custom_call.1} parent=11 // pred_check
          %p438 = pneg %p185
        $region30: #{tpu_custom_call.1} parent=11 // pred_check_branch
          %440 = sbr.rel (%p438) target = $region32
        $region31: #{tpu_custom_call.1} parent=11 // pred_region
          %442 = vsyncadd [#allocation6], 0
          %s443 = sshll.u32 %s6, 4
          %s444 = int_to_ptr.hbm [resolvable:$true] %s443
          %s445 = sshll.u32 [#allocation5], 4
          %s446 = int_to_ptr.vmem [resolvable:$true] %s445
          %451 = dma.hbm_to_vmem [thread:$0]  %s444, 256, %s446, [#allocation6], 128, 128, 8
        $region32: #{tpu_custom_call.1} parent=11 // pred_fallthru
          _
        // Predicated region
        $region33: #{tpu_custom_call.1} parent=11 // pred_check
          %p452 = pneg %p206
        $region34: #{tpu_custom_call.1} parent=11 // pred_check_branch
          %454 = sbr.rel (%p452) target = $region36
        $region35: #{tpu_custom_call.1} parent=11 // pred_region
          _
        $region36: #{tpu_custom_call.1} parent=11 // pred_fallthru
          _
        // Predicated region
        $region37: #{tpu_custom_call.1} parent=11 // pred_check
          %p455 = pneg %p227
        $region38: #{tpu_custom_call.1} parent=11 // pred_check_branch
          %457 = sbr.rel (%p455) target = $region40
        $region39: #{tpu_custom_call.1} parent=11 // pred_region
          _
        $region40: #{tpu_custom_call.1} parent=11 // pred_fallthru
          _
        // Predicated region
        $region41: #{tpu_custom_call.1} parent=11 // pred_check
          %p458 = pneg %p248
        $region42: #{tpu_custom_call.1} parent=11 // pred_check_branch
          %460 = sbr.rel (%p458) target = $region44
        $region43: #{tpu_custom_call.1} parent=11 // pred_region
          %462 = vsyncadd [#allocation6], 0
          %s463 = sshll.u32 %s9, 4
          %s464 = int_to_ptr.hbm [resolvable:$true] %s463
          %s465 = sshll.u32 [#allocation7], 4
          %s466 = int_to_ptr.vmem [resolvable:$true] %s465
          %471 = dma.hbm_to_vmem [thread:$0]  %s464, 32, %s466, [#allocation6], 16, 16, 1
        $region44: #{tpu_custom_call.1} parent=11 // pred_fallthru
          _
        // Predicated region
        $region45: #{tpu_custom_call.1} parent=11 // pred_check
          %p472 = pneg %p269
        $region46: #{tpu_custom_call.1} parent=11 // pred_check_branch
          %474 = sbr.rel (%p472) target = $region48
        $region47: #{tpu_custom_call.1} parent=11 // pred_region
          _
        $region48: #{tpu_custom_call.1} parent=11 // pred_fallthru
          _
        // Predicated region
        $region49: #{tpu_custom_call.1} parent=11 // pred_check
          %p475 = pneg %p290
        $region50: #{tpu_custom_call.1} parent=11 // pred_check_branch
          %477 = sbr.rel (%p475) target = $region52
        $region51: #{tpu_custom_call.1} parent=11 // pred_region
          %479 = vsyncadd [#allocation9], 0
          %s480 = sshll.u32 %s11, 4
          %s481 = int_to_ptr.hbm [resolvable:$true] %s480
          %s482 = sshll.u32 [#allocation8], 4
          %s483 = int_to_ptr.vmem [resolvable:$true] %s482
          %488 = dma.hbm_to_vmem [thread:$0]  %s481, 32, %s483, [#allocation9], 16, 16, 1
        $region52: #{tpu_custom_call.1} parent=11 // pred_fallthru
          _
        // Predicated region
        $region53: #{tpu_custom_call.1} parent=11 // pred_check
          %p489 = pneg %p311
        $region54: #{tpu_custom_call.1} parent=11 // pred_check_branch
          %491 = sbr.rel (%p489) target = $region56
        $region55: #{tpu_custom_call.1} parent=11 // pred_region
          _
        $region56: #{tpu_custom_call.1} parent=11 // pred_fallthru
          _
        // Predicated region
        $region57: #{tpu_custom_call.1} parent=11 // pred_check
          %p492 = pneg %p332
        $region58: #{tpu_custom_call.1} parent=11 // pred_check_branch
          %494 = sbr.rel (%p492) target = $region60
        $region59: #{tpu_custom_call.1} parent=11 // pred_region
          _
        $region60: #{tpu_custom_call.1} parent=11 // pred_fallthru
          _
        // Predicated region
        $region61: #{tpu_custom_call.1} parent=11 // pred_check
          %p495 = pneg %p353
        $region62: #{tpu_custom_call.1} parent=11 // pred_check_branch
          %497 = sbr.rel (%p495) target = $region64
        $region63: #{tpu_custom_call.1} parent=11 // pred_region
          _
        $region64: #{tpu_custom_call.1} parent=11 // pred_fallthru
          _
        // Predicated region
        $region65: #{tpu_custom_call.1} parent=11 // pred_check
          %p498 = pneg %p374
        $region66: #{tpu_custom_call.1} parent=11 // pred_check_branch
          %500 = sbr.rel (%p498) target = $region68
        $region67: #{tpu_custom_call.1} parent=11 // pred_region
          _
        $region68: #{tpu_custom_call.1} parent=11 // pred_fallthru
          _
      $region12: #{tpu_custom_call.1} parent=5 // pred_fallthru
        _
      %p501 = scmp.lt.s32.totalorder %s28, 2
      // Predicated region
      $region69: #{tpu_custom_call.1} parent=5 // pred_check
        %p502 = pneg %p501
      $region70: #{tpu_custom_call.1} parent=5 // pred_check_branch
        %504 = sbr.rel (%p502) target = $region72
      $region71: #{tpu_custom_call.1} parent=5 // pred_region
        // Predicated region
        $region73: #{tpu_custom_call.1} parent=71 // pred_check
          %p505 = pneg %p48
        $region74: #{tpu_custom_call.1} parent=71 // pred_check_branch
          %507 = sbr.rel (%p505) target = $region76
        $region75: #{tpu_custom_call.1} parent=71 // pred_region
          %p508 = scmp.lt.s32.totalorder %s28, 1
          %s509 = scalar_select %p508, %s28, 1
          %s510 = smul.addr %s509, 8
          %s511 = scalar_lea.vmem %s0, %s510
        $region76: #{tpu_custom_call.1} parent=71 // pred_fallthru
          _
        // Predicated region
        $region77: #{tpu_custom_call.1} parent=71 // pred_check
          %p512 = pneg %p74
        $region78: #{tpu_custom_call.1} parent=71 // pred_check_branch
          %514 = sbr.rel (%p512) target = $region80
        $region79: #{tpu_custom_call.1} parent=71 // pred_region
          %p515 = scmp.lt.s32.totalorder %s28, 1
          %s516 = scalar_select %p515, %s28, 1
          %s517 = smul.addr %s516, 8
          %s518 = scalar_lea.vmem %s1, %s517
        $region80: #{tpu_custom_call.1} parent=71 // pred_fallthru
          _
      $region72: #{tpu_custom_call.1} parent=5 // pred_fallthru
        _
      %p519 = scmp.le.s32.totalorder 1, %s28
      %p520 = scmp.lt.s32.totalorder %s28, 3
      %p521 = pnand %p519, %p520
      %p522 = pneg %p521
      // Predicated region
      $region81: #{tpu_custom_call.1} parent=5 // pred_check
        _
      $region82: #{tpu_custom_call.1} parent=5 // pred_check_branch
        %524 = sbr.rel (%p521) target = $region84
      $region83: #{tpu_custom_call.1} parent=5 // pred_region
        %s525 = ssub.s32 %s28, 1
        // Predicated region
        $region85: #{tpu_custom_call.1} parent=83 // pred_check
          %p526 = pneg %p122
        $region86: #{tpu_custom_call.1} parent=83 // pred_check_branch
          %528 = sbr.rel (%p526) target = $region88
        $region87: #{tpu_custom_call.1} parent=83 // pred_region
          %530 = dma.done [#allocation3], 32
        $region88: #{tpu_custom_call.1} parent=83 // pred_fallthru
          _
        // Predicated region
        $region89: #{tpu_custom_call.1} parent=83 // pred_check
          %p531 = pneg %p185
        $region90: #{tpu_custom_call.1} parent=83 // pred_check_branch
          %533 = sbr.rel (%p531) target = $region92
        $region91: #{tpu_custom_call.1} parent=83 // pred_region
          %535 = dma.done [#allocation6], 256
        $region92: #{tpu_custom_call.1} parent=83 // pred_fallthru
          _
        // Predicated region
        $region93: #{tpu_custom_call.1} parent=83 // pred_check
          %p536 = pneg %p248
        $region94: #{tpu_custom_call.1} parent=83 // pred_check_branch
          %538 = sbr.rel (%p536) target = $region96
        $region95: #{tpu_custom_call.1} parent=83 // pred_region
          %540 = dma.done [#allocation6], 32
        $region96: #{tpu_custom_call.1} parent=83 // pred_fallthru
          _
        // Predicated region
        $region97: #{tpu_custom_call.1} parent=83 // pred_check
          %p541 = pneg %p290
        $region98: #{tpu_custom_call.1} parent=83 // pred_check_branch
          %543 = sbr.rel (%p541) target = $region100
        $region99: #{tpu_custom_call.1} parent=83 // pred_region
          %545 = dma.done [#allocation9], 32
        $region100: #{tpu_custom_call.1} parent=83 // pred_fallthru
          _
        %p546 = scmp.lt.s32.totalorder %s33, 1
        %s547 = scalar_select %p546, %s33, 1
        %s548 = smul.addr %s547, 8
        %s549 = scalar_lea.vmem %s0, %s548
        %p550 = pneg %p54
        %p551 = pneg %p51
        %p552 = scmp.lt.s32.totalorder %s33, 1
        %s553 = scalar_select %p552, %s33, 1
        %s554 = smul.addr %s553, 8
        %s555 = scalar_lea.vmem %s1, %s554
        %p556 = pneg %p80
        %p557 = pneg %p77
        %p558 = pneg %p101
        %p559 = pneg %p98
        %p560 = pneg %p122
        %p561 = pneg %p119
        %p562 = pneg %p143
        %p563 = pneg %p140
        %p564 = pneg %p164
        %p565 = pneg %p161
        %p566 = pneg %p185
        %p567 = pneg %p182
        %p568 = pneg %p206
        %p569 = pneg %p203
        %p570 = pneg %p227
        %p571 = pneg %p224
        %p572 = pneg %p248
        %p573 = pneg %p245
        %p574 = pneg %p269
        %p575 = pneg %p266
        %p576 = pneg %p290
        %p577 = pneg %p287
        %p578 = pneg %p311
        %p579 = pneg %p308
        %p580 = pneg %p332
        %p581 = pneg %p329
        %p582 = pneg %p353
        %p583 = pneg %p350
        %p584 = pneg %p374
        %p585 = pneg %p371
        %p586 = pneg %p400
        %p587 = pneg %p397
        %s588 = sand.u32 %s387, 1
        %s589 = scalar_lea.sflag [#allocation4], %s588
        %s590 = sand.u32 %s387, 1
        %s591 = smul.addr %s590, 8
        %s592 = scalar_lea.vmem [#allocation10], %s591
        %p593 = scmp.lt.s32.totalorder %s33, 1
        %s594 = scalar_select %p593, %s33, 1
        %s595 = smul.addr %s594, 8
        %s596 = scalar_lea.vmem %s0, %s595
        %p597 = scmp.lt.s32.totalorder %s33, 1
        %s598 = scalar_select %p597, %s33, 1
        %s599 = smul.addr %s598, 8
        %s600 = scalar_lea.vmem %s1, %s599
        %v601 = vlaneseq
        %v602 = vand.u32 %v601, 127
        %vm603 = vcmp.lt.s32.totalorder %v602, 32
        %v604 = vld [vmem:[%s596] sm:$0xff]
        %v605 = vld [vmem:[%s600] sm:$0xff]
        %v606 = vld [vmem:[%s2] sm:$0x1]
        %v607 = vld [vmem:[#allocation2] sm:$0x1]
        %v608 = vld [vmem:[%s4] sm:$0xff]
        %v609 = vld [vmem:[%s4 + $0x8] sm:$0xff]
        %v610 = vld [vmem:[%s4 + $0x10] sm:$0xff]
        %v611 = vld [vmem:[%s4 + $0x18] sm:$0xff]
        %v612 = vld [vmem:[%s4 + $0x20] sm:$0xff]
        %v613 = vld [vmem:[%s4 + $0x28] sm:$0xff]
        %v614 = vld [vmem:[%s4 + $0x30] sm:$0xff]
        %v615 = vld [vmem:[%s4 + $0x38] sm:$0xff]
        %v616 = vld [vmem:[%s4 + $0x40] sm:$0xff]
        %v617 = vld [vmem:[%s4 + $0x48] sm:$0xff]
        %v618 = vld [vmem:[%s4 + $0x50] sm:$0xff]
        %v619 = vld [vmem:[%s4 + $0x58] sm:$0xff]
        %v620 = vld [vmem:[%s4 + $0x60] sm:$0xff]
        %v621 = vld [vmem:[%s4 + $0x68] sm:$0xff]
        %v622 = vld [vmem:[%s4 + $0x70] sm:$0xff]
        %v623 = vld [vmem:[%s4 + $0x78] sm:$0xff]
        %v624 = vld [vmem:[%s5] sm:$0xff]
        %v625 = vld [vmem:[%s5 + $0x8] sm:$0xff]
        %v626 = vld [vmem:[%s5 + $0x10] sm:$0xff]
        %v627 = vld [vmem:[%s5 + $0x18] sm:$0xff]
        %v628 = vld [vmem:[%s5 + $0x20] sm:$0xff]
        %v629 = vld [vmem:[%s5 + $0x28] sm:$0xff]
        %v630 = vld [vmem:[%s5 + $0x30] sm:$0xff]
        %v631 = vld [vmem:[%s5 + $0x38] sm:$0xff]
        %v632 = vld [vmem:[%s5 + $0x40] sm:$0xff]
        %v633 = vld [vmem:[%s5 + $0x48] sm:$0xff]
        %v634 = vld [vmem:[%s5 + $0x50] sm:$0xff]
        %v635 = vld [vmem:[%s5 + $0x58] sm:$0xff]
        %v636 = vld [vmem:[%s5 + $0x60] sm:$0xff]
        %v637 = vld [vmem:[%s5 + $0x68] sm:$0xff]
        %v638 = vld [vmem:[%s5 + $0x70] sm:$0xff]
        %v639 = vld [vmem:[%s5 + $0x78] sm:$0xff]
        %v640 = vld [vmem:[#allocation5] sm:$0xff]
        %v641 = vld [vmem:[%s7] sm:$0xff]
        %v642 = vld [vmem:[%s8] sm:$0x1]
        %v643 = vld [vmem:[#allocation7] sm:$0x1]
        %v644 = vld [vmem:[%s10] sm:$0xff]
        %v645 = vld [vmem:[%s10 + $0x8] sm:$0xff]
        %v646 = vld [vmem:[%s10 + $0x10] sm:$0xff]
        %v647 = vld [vmem:[%s10 + $0x18] sm:$0xff]
        %v648 = vld [vmem:[%s10 + $0x20] sm:$0xff]
        %v649 = vld [vmem:[%s10 + $0x28] sm:$0xff]
        %v650 = vld [vmem:[%s10 + $0x30] sm:$0xff]
        %v651 = vld [vmem:[%s10 + $0x38] sm:$0xff]
        %v652 = vld [vmem:[%s10 + $0x40] sm:$0xff]
        %v653 = vld [vmem:[%s10 + $0x48] sm:$0xff]
        %v654 = vld [vmem:[%s10 + $0x50] sm:$0xff]
        %v655 = vld [vmem:[%s10 + $0x58] sm:$0xff]
        %v656 = vld [vmem:[%s10 + $0x60] sm:$0xff]
        %v657 = vld [vmem:[%s10 + $0x68] sm:$0xff]
        %v658 = vld [vmem:[%s10 + $0x70] sm:$0xff]
        %v659 = vld [vmem:[%s10 + $0x78] sm:$0xff]
        %v660 = vld [vmem:[#allocation8] sm:$0x1]
        %v661 = vld [vmem:[%s12] sm:$0xff]
        %v662 = vld [vmem:[%s12 + $0x8] sm:$0xff]
        %v663 = vld [vmem:[%s12 + $0x10] sm:$0xff]
        %v664 = vld [vmem:[%s12 + $0x18] sm:$0xff]
        %v665 = vld [vmem:[%s12 + $0x20] sm:$0xff]
        %v666 = vld [vmem:[%s12 + $0x28] sm:$0xff]
        %v667 = vld [vmem:[%s12 + $0x30] sm:$0xff]
        %v668 = vld [vmem:[%s12 + $0x38] sm:$0xff]
        %v669 = vld [vmem:[%s12 + $0x40] sm:$0xff]
        %v670 = vld [vmem:[%s12 + $0x48] sm:$0xff]
        %v671 = vld [vmem:[%s12 + $0x50] sm:$0xff]
        %v672 = vld [vmem:[%s12 + $0x58] sm:$0xff]
        %v673 = vld [vmem:[%s12 + $0x60] sm:$0xff]
        %v674 = vld [vmem:[%s12 + $0x68] sm:$0xff]
        %v675 = vld [vmem:[%s12 + $0x70] sm:$0xff]
        %v676 = vld [vmem:[%s12 + $0x78] sm:$0xff]
        %v677 = vld [vmem:[%s13] sm:$0x1]
        %vm678 = vcmask 64512
        %v680 = vsel %vm678, %v605, 0
        %682 = vmatpush.msra.mxu0 0.0
        %683 = vmatpush.msra.mxu0 0.0
        %684 = vmatpush.msra.mxu0 0.0
        %685 = vmatpush.msra.mxu0 0.0
        %686 = vmatpush.msra.mxu0 0.0
        %687 = vmatpush.msra.mxu0 0.0
        %688 = vmatpush.msra.mxu0 0.0
        %689 = vmatpush.msra.mxu0 0.0
        %690 = vmatpush.msra.mxu0 0.0
        %691 = vmatpush.msra.mxu0 0.0
        %692 = vmatpush.msra.mxu0 0.0
        %693 = vmatpush.msra.mxu0 0.0
        %694 = vmatpush.msra.mxu0 0.0
        %695 = vmatpush.msra.mxu0 0.0
        %696 = vmatpush.msra.mxu0 0.0
        %697 = vmatpush.msra.mxu0 %v604
        %698 = vmatmul.f32.gmra.mxu0 %v680
        %v699 = vpop.f32.mrf.mxu0
        %v700 = vadd.f32 0.0, %v699
        %701 = vdwg.mxu0
        %702 = vadd.xlane.f32.xlu0 %v700
        %v703 = vpop.xlane.xlu0 %702
        %v704 = vmul.f32 %v703, 0.03125
        %v705 = vsub.f32 %v700, %v704
        %v706 = vmul.f32 %v705, %v705
        %v707 = vsel %vm603, %v706, 0.0
        %708 = vadd.xlane.f32.xlu0 %v707
        %v709 = vpop.xlane.xlu0 %708
        %v710 = vmul.f32 %v709, 0.03125
        %v711 = vadd.f32 %v710, 1e-05
        %v712 = vrsqrt.pop %v711
        %v713 = vmul.f32 %v712, %v711
        %v714 = vmul.f32 %v713, %v712
        %v715 = vmul.f32 0.5, %v714
        %v716 = vsub.f32 1.5, %v715
        %v717 = vmul.f32 %v712, %v716
        %vm718 = vweird.f32 %v711
        %vm719 = vweird.f32 %v712
        %vm720 = vmor %vm718, %vm719
        %v721 = vsel %vm720, %v712, %v717
        %v722 = vmul.f32 %v705, %v721
        %v724 = vperm.slane %v606, 0
        %v726 = vmul.f32 %v722, %v724
        %v728 = vperm.slane %v607, 0
        %v730 = vadd.f32 %v726, %v728
        %732 = vset.pattern.permute.xlu0 0
        %733 = vperm.xlu0 %732, %v624
        %v734 = vpop.permute.xlu0 %733
        %737 = vset.pattern.permute.xlu0 0
        %738 = vperm.xlu0 %737, %v625
        %v739 = vpop.permute.xlu0 %738
        %742 = vset.pattern.permute.xlu0 0
        %743 = vperm.xlu0 %742, %v626
        %v744 = vpop.permute.xlu0 %743
        %747 = vset.pattern.permute.xlu0 0
        %748 = vperm.xlu0 %747, %v627
        %v749 = vpop.permute.xlu0 %748
        %752 = vset.pattern.permute.xlu0 0
        %753 = vperm.xlu0 %752, %v628
        %v754 = vpop.permute.xlu0 %753
        %757 = vset.pattern.permute.xlu0 0
        %758 = vperm.xlu0 %757, %v629
        %v759 = vpop.permute.xlu0 %758
        %762 = vset.pattern.permute.xlu0 0
        %763 = vperm.xlu0 %762, %v630
        %v764 = vpop.permute.xlu0 %763
        %767 = vset.pattern.permute.xlu0 0
        %768 = vperm.xlu0 %767, %v631
        %v769 = vpop.permute.xlu0 %768
        %772 = vset.pattern.permute.xlu0 0
        %773 = vperm.xlu0 %772, %v632
        %v774 = vpop.permute.xlu0 %773
        %777 = vset.pattern.permute.xlu0 0
        %778 = vperm.xlu0 %777, %v633
        %v779 = vpop.permute.xlu0 %778
        %782 = vset.pattern.permute.xlu0 0
        %783 = vperm.xlu0 %782, %v634
        %v784 = vpop.permute.xlu0 %783
        %787 = vset.pattern.permute.xlu0 0
        %788 = vperm.xlu0 %787, %v635
        %v789 = vpop.permute.xlu0 %788
        %792 = vset.pattern.permute.xlu0 0
        %793 = vperm.xlu0 %792, %v636
        %v794 = vpop.permute.xlu0 %793
        %797 = vset.pattern.permute.xlu0 0
        %798 = vperm.xlu0 %797, %v637
        %v799 = vpop.permute.xlu0 %798
        %802 = vset.pattern.permute.xlu0 0
        %803 = vperm.xlu0 %802, %v638
        %v804 = vpop.permute.xlu0 %803
        %807 = vset.pattern.permute.xlu0 0
        %808 = vperm.xlu0 %807, %v639
        %v809 = vpop.permute.xlu0 %808
        %v812 = vsel %vm678, %v608, 0
        %v815 = vsel %vm678, %v609, 0
        %v818 = vsel %vm678, %v610, 0
        %v821 = vsel %vm678, %v611, 0
        %v824 = vsel %vm678, %v612, 0
        %v827 = vsel %vm678, %v613, 0
        %v830 = vsel %vm678, %v614, 0
        %v833 = vsel %vm678, %v615, 0
        %v836 = vsel %vm678, %v616, 0
        %v839 = vsel %vm678, %v617, 0
        %v842 = vsel %vm678, %v618, 0
        %v845 = vsel %vm678, %v619, 0
        %v848 = vsel %vm678, %v620, 0
        %v851 = vsel %vm678, %v621, 0
        %v854 = vsel %vm678, %v622, 0
        %v857 = vsel %vm678, %v623, 0
        %859 = vmatpush.msra.mxu0 0.0
        %860 = vmatpush.msra.mxu0 0.0
        %861 = vmatpush.msra.mxu0 0.0
        %862 = vmatpush.msra.mxu0 0.0
        %863 = vmatpush.msra.mxu0 0.0
        %864 = vmatpush.msra.mxu0 0.0
        %865 = vmatpush.msra.mxu0 0.0
        %866 = vmatpush.msra.mxu0 0.0
        %867 = vmatpush.msra.mxu0 0.0
        %868 = vmatpush.msra.mxu0 0.0
        %869 = vmatpush.msra.mxu0 0.0
        %870 = vmatpush.msra.mxu0 0.0
        %871 = vmatpush.msra.mxu0 0.0
        %872 = vmatpush.msra.mxu0 0.0
        %873 = vmatpush.msra.mxu0 0.0
        %874 = vmatpush.msra.mxu0 %v730
        %875 = vmatmul.f32.gmra.mxu0 %v812
        %v876 = vpop.f32.mrf.mxu0
        %v877 = vadd.f32 %v734, %v876
        %878 = vmatmul.f32.gmra.mxu0 %v815
        %v879 = vpop.f32.mrf.mxu0
        %v880 = vadd.f32 %v739, %v879
        %881 = vmatmul.f32.gmra.mxu0 %v818
        %v882 = vpop.f32.mrf.mxu0
        %v883 = vadd.f32 %v744, %v882
        %884 = vmatmul.f32.gmra.mxu0 %v821
        %v885 = vpop.f32.mrf.mxu0
        %v886 = vadd.f32 %v749, %v885
        %887 = vmatmul.f32.gmra.mxu0 %v824
        %v888 = vpop.f32.mrf.mxu0
        %v889 = vadd.f32 %v754, %v888
        %890 = vmatmul.f32.gmra.mxu0 %v827
        %v891 = vpop.f32.mrf.mxu0
        %v892 = vadd.f32 %v759, %v891
        %893 = vmatmul.f32.gmra.mxu0 %v830
        %v894 = vpop.f32.mrf.mxu0
        %v895 = vadd.f32 %v764, %v894
        %896 = vmatmul.f32.gmra.mxu0 %v833
        %v897 = vpop.f32.mrf.mxu0
        %v898 = vadd.f32 %v769, %v897
        %899 = vmatmul.f32.gmra.mxu0 %v836
        %v900 = vpop.f32.mrf.mxu0
        %v901 = vadd.f32 %v774, %v900
        %902 = vmatmul.f32.gmra.mxu0 %v839
        %v903 = vpop.f32.mrf.mxu0
        %v904 = vadd.f32 %v779, %v903
        %905 = vmatmul.f32.gmra.mxu0 %v842
        %v906 = vpop.f32.mrf.mxu0
        %v907 = vadd.f32 %v784, %v906
        %908 = vmatmul.f32.gmra.mxu0 %v845
        %v909 = vpop.f32.mrf.mxu0
        %v910 = vadd.f32 %v789, %v909
        %911 = vmatmul.f32.gmra.mxu0 %v848
        %v912 = vpop.f32.mrf.mxu0
        %v913 = vadd.f32 %v794, %v912
        %914 = vmatmul.f32.gmra.mxu0 %v851
        %v915 = vpop.f32.mrf.mxu0
        %v916 = vadd.f32 %v799, %v915
        %917 = vmatmul.f32.gmra.mxu0 %v854
        %v918 = vpop.f32.mrf.mxu0
        %v919 = vadd.f32 %v804, %v918
        %920 = vmatmul.f32.gmra.mxu0 %v857
        %v921 = vpop.f32.mrf.mxu0
        %v922 = vadd.f32 %v809, %v921
        %923 = vdwg.mxu0
        %v924 = vmul.f32 %v877, 0.5
        %v925 = vmul.f32 %v880, 0.5
        %v926 = vmul.f32 %v883, 0.5
        %v927 = vmul.f32 %v886, 0.5
        %v928 = vmul.f32 %v889, 0.5
        %v929 = vmul.f32 %v892, 0.5
        %v930 = vmul.f32 %v895, 0.5
        %v931 = vmul.f32 %v898, 0.5
        %v932 = vmul.f32 %v901, 0.5
        %v933 = vmul.f32 %v904, 0.5
        %v934 = vmul.f32 %v907, 0.5
        %v935 = vmul.f32 %v910, 0.5
        %v936 = vmul.f32 %v913, 0.5
        %v937 = vmul.f32 %v916, 0.5
        %v938 = vmul.f32 %v919, 0.5
        %v939 = vmul.f32 %v922, 0.5
        %v940 = vmul.f32 %v877, 0.70710677
        %v941 = vmul.f32 %v880, 0.70710677
        %v942 = vmul.f32 %v883, 0.70710677
        %v943 = vmul.f32 %v886, 0.70710677
        %v944 = vmul.f32 %v889, 0.70710677
        %v945 = vmul.f32 %v892, 0.70710677
        %v946 = vmul.f32 %v895, 0.70710677
        %v947 = vmul.f32 %v898, 0.70710677
        %v948 = vmul.f32 %v901, 0.70710677
        %v949 = vmul.f32 %v904, 0.70710677
        %v950 = vmul.f32 %v907, 0.70710677
        %v951 = vmul.f32 %v910, 0.70710677
        %v952 = vmul.f32 %v913, 0.70710677
        %v953 = vmul.f32 %v916, 0.70710677
        %v954 = vmul.f32 %v919, 0.70710677
        %v955 = vmul.f32 %v922, 0.70710677
        %v956 = vmul.f32 %v940, %v940
        %v957 = vmin.f32 16.0, %v956
        %v958 = vmul.f32 %v957, 2.1237322e-06
        %v959 = vadd.f32 %v958, 0.00028619796
        %v960 = vmul.f32 %v957, %v959
        %v961 = vadd.f32 %v960, 0.0036580483
        %v962 = vmul.f32 %v957, %v961
        %v963 = vadd.f32 %v962, 0.05243302
        %v964 = vmul.f32 %v957, %v963
        %v965 = vadd.f32 %v964, 0.18741608
        %v966 = vmul.f32 %v957, %v965
        %v967 = vadd.f32 %v966, 1.1283791
        %v968 = vmul.f32 %v940, %v967
        %v969 = vmul.f32 %v957, 3.8918573e-05
        %v970 = vadd.f32 %v969, 0.001143296
        %v971 = vmul.f32 %v957, %v970
        %v972 = vadd.f32 %v971, 0.014752088
        %v973 = vmul.f32 %v957, %v972
        %v974 = vadd.f32 %v973, 0.112945676
        %v975 = vmul.f32 %v957, %v974
        %v976 = vadd.f32 %v975, 0.4994258
        %v977 = vmul.f32 %v957, %v976
        %v978 = vadd.f32 %v977, 1.0
        %v979 = vrcp.pop %v978
        %v980 = vmul.f32 %v978, %v979
        %v981 = vsub.f32 1.0, %v980
        %v982 = vmul.f32 %v979, %v981
        %v983 = vadd.f32 %v979, %v982
        %vm984 = vweird.f32 %v978
        %vm985 = vweird.f32 %v979
        %vm986 = vmor %vm984, %vm985
        %v987 = vsel %vm986, %v979, %v983
        %v988 = vand.u32 2147483647, %v978
        %vm989 = vcmp.eq.f32.partialorder %v988, 8.507059e+37
        %v990 = vand.u32 %v978, 2147483648
        %v991 = vor.u32 1.1754944e-38, %v990
        %v992 = vsel %vm989, %v991, %v987
        %v993 = vmul.f32 %v968, %v992
        %v994 = vmin.f32 %v993, 1.0
        %v995 = vmax.f32 %v994, -1.0
        %v996 = vmul.f32 %v941, %v941
        %v997 = vmin.f32 16.0, %v996
        %v998 = vmul.f32 %v997, 2.1237322e-06
        %v999 = vadd.f32 %v998, 0.00028619796
        %v1000 = vmul.f32 %v997, %v999
        %v1001 = vadd.f32 %v1000, 0.0036580483
        %v1002 = vmul.f32 %v997, %v1001
        %v1003 = vadd.f32 %v1002, 0.05243302
        %v1004 = vmul.f32 %v997, %v1003
        %v1005 = vadd.f32 %v1004, 0.18741608
        %v1006 = vmul.f32 %v997, %v1005
        %v1007 = vadd.f32 %v1006, 1.1283791
        %v1008 = vmul.f32 %v941, %v1007
        %v1009 = vmul.f32 %v997, 3.8918573e-05
        %v1010 = vadd.f32 %v1009, 0.001143296
        %v1011 = vmul.f32 %v997, %v1010
        %v1012 = vadd.f32 %v1011, 0.014752088
        %v1013 = vmul.f32 %v997, %v1012
        %v1014 = vadd.f32 %v1013, 0.112945676
        %v1015 = vmul.f32 %v997, %v1014
        %v1016 = vadd.f32 %v1015, 0.4994258
        %v1017 = vmul.f32 %v997, %v1016
        %v1018 = vadd.f32 %v1017, 1.0
        %v1019 = vrcp.pop %v1018
        %v1020 = vmul.f32 %v1018, %v1019
        %v1021 = vsub.f32 1.0, %v1020
        %v1022 = vmul.f32 %v1019, %v1021
        %v1023 = vadd.f32 %v1019, %v1022
        %vm1024 = vweird.f32 %v1018
        %vm1025 = vweird.f32 %v1019
        %vm1026 = vmor %vm1024, %vm1025
        %v1027 = vsel %vm1026, %v1019, %v1023
        %v1028 = vand.u32 2147483647, %v1018
        %vm1029 = vcmp.eq.f32.partialorder %v1028, 8.507059e+37
        %v1030 = vand.u32 %v1018, 2147483648
        %v1031 = vor.u32 1.1754944e-38, %v1030
        %v1032 = vsel %vm1029, %v1031, %v1027
        %v1033 = vmul.f32 %v1008, %v1032
        %v1034 = vmin.f32 %v1033, 1.0
        %v1035 = vmax.f32 %v1034, -1.0
        %v1036 = vmul.f32 %v942, %v942
        %v1037 = vmin.f32 16.0, %v1036
        %v1038 = vmul.f32 %v1037, 2.1237322e-06
        %v1039 = vadd.f32 %v1038, 0.00028619796
        %v1040 = vmul.f32 %v1037, %v1039
        %v1041 = vadd.f32 %v1040, 0.0036580483
        %v1042 = vmul.f32 %v1037, %v1041
        %v1043 = vadd.f32 %v1042, 0.05243302
        %v1044 = vmul.f32 %v1037, %v1043
        %v1045 = vadd.f32 %v1044, 0.18741608
        %v1046 = vmul.f32 %v1037, %v1045
        %v1047 = vadd.f32 %v1046, 1.1283791
        %v1048 = vmul.f32 %v942, %v1047
        %v1049 = vmul.f32 %v1037, 3.8918573e-05
        %v1050 = vadd.f32 %v1049, 0.001143296
        %v1051 = vmul.f32 %v1037, %v1050
        %v1052 = vadd.f32 %v1051, 0.014752088
        %v1053 = vmul.f32 %v1037, %v1052
        %v1054 = vadd.f32 %v1053, 0.112945676
        %v1055 = vmul.f32 %v1037, %v1054
        %v1056 = vadd.f32 %v1055, 0.4994258
        %v1057 = vmul.f32 %v1037, %v1056
        %v1058 = vadd.f32 %v1057, 1.0
        %v1059 = vrcp.pop %v1058
        %v1060 = vmul.f32 %v1058, %v1059
        %v1061 = vsub.f32 1.0, %v1060
        %v1062 = vmul.f32 %v1059, %v1061
        %v1063 = vadd.f32 %v1059, %v1062
        %vm1064 = vweird.f32 %v1058
        %vm1065 = vweird.f32 %v1059
        %vm1066 = vmor %vm1064, %vm1065
        %v1067 = vsel %vm1066, %v1059, %v1063
        %v1068 = vand.u32 2147483647, %v1058
        %vm1069 = vcmp.eq.f32.partialorder %v1068, 8.507059e+37
        %v1070 = vand.u32 %v1058, 2147483648
        %v1071 = vor.u32 1.1754944e-38, %v1070
        %v1072 = vsel %vm1069, %v1071, %v1067
        %v1073 = vmul.f32 %v1048, %v1072
        %v1074 = vmin.f32 %v1073, 1.0
        %v1075 = vmax.f32 %v1074, -1.0
        %v1076 = vmul.f32 %v943, %v943
        %v1077 = vmin.f32 16.0, %v1076
        %v1078 = vmul.f32 %v1077, 2.1237322e-06
        %v1079 = vadd.f32 %v1078, 0.00028619796
        %v1080 = vmul.f32 %v1077, %v1079
        %v1081 = vadd.f32 %v1080, 0.0036580483
        %v1082 = vmul.f32 %v1077, %v1081
        %v1083 = vadd.f32 %v1082, 0.05243302
        %v1084 = vmul.f32 %v1077, %v1083
        %v1085 = vadd.f32 %v1084, 0.18741608
        %v1086 = vmul.f32 %v1077, %v1085
        %v1087 = vadd.f32 %v1086, 1.1283791
        %v1088 = vmul.f32 %v943, %v1087
        %v1089 = vmul.f32 %v1077, 3.8918573e-05
        %v1090 = vadd.f32 %v1089, 0.001143296
        %v1091 = vmul.f32 %v1077, %v1090
        %v1092 = vadd.f32 %v1091, 0.014752088
        %v1093 = vmul.f32 %v1077, %v1092
        %v1094 = vadd.f32 %v1093, 0.112945676
        %v1095 = vmul.f32 %v1077, %v1094
        %v1096 = vadd.f32 %v1095, 0.4994258
        %v1097 = vmul.f32 %v1077, %v1096
        %v1098 = vadd.f32 %v1097, 1.0
        %v1099 = vrcp.pop %v1098
        %v1100 = vmul.f32 %v1098, %v1099
        %v1101 = vsub.f32 1.0, %v1100
        %v1102 = vmul.f32 %v1099, %v1101
        %v1103 = vadd.f32 %v1099, %v1102
        %vm1104 = vweird.f32 %v1098
        %vm1105 = vweird.f32 %v1099
        %vm1106 = vmor %vm1104, %vm1105
        %v1107 = vsel %vm1106, %v1099, %v1103
        %v1108 = vand.u32 2147483647, %v1098
        %vm1109 = vcmp.eq.f32.partialorder %v1108, 8.507059e+37
        %v1110 = vand.u32 %v1098, 2147483648
        %v1111 = vor.u32 1.1754944e-38, %v1110
        %v1112 = vsel %vm1109, %v1111, %v1107
        %v1113 = vmul.f32 %v1088, %v1112
        %v1114 = vmin.f32 %v1113, 1.0
        %v1115 = vmax.f32 %v1114, -1.0
        %v1116 = vmul.f32 %v944, %v944
        %v1117 = vmin.f32 16.0, %v1116
        %v1118 = vmul.f32 %v1117, 2.1237322e-06
        %v1119 = vadd.f32 %v1118, 0.00028619796
        %v1120 = vmul.f32 %v1117, %v1119
        %v1121 = vadd.f32 %v1120, 0.0036580483
        %v1122 = vmul.f32 %v1117, %v1121
        %v1123 = vadd.f32 %v1122, 0.05243302
        %v1124 = vmul.f32 %v1117, %v1123
        %v1125 = vadd.f32 %v1124, 0.18741608
        %v1126 = vmul.f32 %v1117, %v1125
        %v1127 = vadd.f32 %v1126, 1.1283791
        %v1128 = vmul.f32 %v944, %v1127
        %v1129 = vmul.f32 %v1117, 3.8918573e-05
        %v1130 = vadd.f32 %v1129, 0.001143296
        %v1131 = vmul.f32 %v1117, %v1130
        %v1132 = vadd.f32 %v1131, 0.014752088
        %v1133 = vmul.f32 %v1117, %v1132
        %v1134 = vadd.f32 %v1133, 0.112945676
        %v1135 = vmul.f32 %v1117, %v1134
        %v1136 = vadd.f32 %v1135, 0.4994258
        %v1137 = vmul.f32 %v1117, %v1136
        %v1138 = vadd.f32 %v1137, 1.0
        %v1139 = vrcp.pop %v1138
        %v1140 = vmul.f32 %v1138, %v1139
        %v1141 = vsub.f32 1.0, %v1140
        %v1142 = vmul.f32 %v1139, %v1141
        %v1143 = vadd.f32 %v1139, %v1142
        %vm1144 = vweird.f32 %v1138
        %vm1145 = vweird.f32 %v1139
        %vm1146 = vmor %vm1144, %vm1145
        %v1147 = vsel %vm1146, %v1139, %v1143
        %v1148 = vand.u32 2147483647, %v1138
        %vm1149 = vcmp.eq.f32.partialorder %v1148, 8.507059e+37
        %v1150 = vand.u32 %v1138, 2147483648
        %v1151 = vor.u32 1.1754944e-38, %v1150
        %v1152 = vsel %vm1149, %v1151, %v1147
        %v1153 = vmul.f32 %v1128, %v1152
        %v1154 = vmin.f32 %v1153, 1.0
        %v1155 = vmax.f32 %v1154, -1.0
        %v1156 = vmul.f32 %v945, %v945
        %v1157 = vmin.f32 16.0, %v1156
        %v1158 = vmul.f32 %v1157, 2.1237322e-06
        %v1159 = vadd.f32 %v1158, 0.00028619796
        %v1160 = vmul.f32 %v1157, %v1159
        %v1161 = vadd.f32 %v1160, 0.0036580483
        %v1162 = vmul.f32 %v1157, %v1161
        %v1163 = vadd.f32 %v1162, 0.05243302
        %v1164 = vmul.f32 %v1157, %v1163
        %v1165 = vadd.f32 %v1164, 0.18741608
        %v1166 = vmul.f32 %v1157, %v1165
        %v1167 = vadd.f32 %v1166, 1.1283791
        %v1168 = vmul.f32 %v945, %v1167
        %v1169 = vmul.f32 %v1157, 3.8918573e-05
        %v1170 = vadd.f32 %v1169, 0.001143296
        %v1171 = vmul.f32 %v1157, %v1170
        %v1172 = vadd.f32 %v1171, 0.014752088
        %v1173 = vmul.f32 %v1157, %v1172
        %v1174 = vadd.f32 %v1173, 0.112945676
        %v1175 = vmul.f32 %v1157, %v1174
        %v1176 = vadd.f32 %v1175, 0.4994258
        %v1177 = vmul.f32 %v1157, %v1176
        %v1178 = vadd.f32 %v1177, 1.0
        %v1179 = vrcp.pop %v1178
        %v1180 = vmul.f32 %v1178, %v1179
        %v1181 = vsub.f32 1.0, %v1180
        %v1182 = vmul.f32 %v1179, %v1181
        %v1183 = vadd.f32 %v1179, %v1182
        %vm1184 = vweird.f32 %v1178
        %vm1185 = vweird.f32 %v1179
        %vm1186 = vmor %vm1184, %vm1185
        %v1187 = vsel %vm1186, %v1179, %v1183
        %v1188 = vand.u32 2147483647, %v1178
        %vm1189 = vcmp.eq.f32.partialorder %v1188, 8.507059e+37
        %v1190 = vand.u32 %v1178, 2147483648
        %v1191 = vor.u32 1.1754944e-38, %v1190
        %v1192 = vsel %vm1189, %v1191, %v1187
        %v1193 = vmul.f32 %v1168, %v1192
        %v1194 = vmin.f32 %v1193, 1.0
        %v1195 = vmax.f32 %v1194, -1.0
        %v1196 = vmul.f32 %v946, %v946
        %v1197 = vmin.f32 16.0, %v1196
        %v1198 = vmul.f32 %v1197, 2.1237322e-06
        %v1199 = vadd.f32 %v1198, 0.00028619796
        %v1200 = vmul.f32 %v1197, %v1199
        %v1201 = vadd.f32 %v1200, 0.0036580483
        %v1202 = vmul.f32 %v1197, %v1201
        %v1203 = vadd.f32 %v1202, 0.05243302
        %v1204 = vmul.f32 %v1197, %v1203
        %v1205 = vadd.f32 %v1204, 0.18741608
        %v1206 = vmul.f32 %v1197, %v1205
        %v1207 = vadd.f32 %v1206, 1.1283791
        %v1208 = vmul.f32 %v946, %v1207
        %v1209 = vmul.f32 %v1197, 3.8918573e-05
        %v1210 = vadd.f32 %v1209, 0.001143296
        %v1211 = vmul.f32 %v1197, %v1210
        %v1212 = vadd.f32 %v1211, 0.014752088
        %v1213 = vmul.f32 %v1197, %v1212
        %v1214 = vadd.f32 %v1213, 0.112945676
        %v1215 = vmul.f32 %v1197, %v1214
        %v1216 = vadd.f32 %v1215, 0.4994258
        %v1217 = vmul.f32 %v1197, %v1216
        %v1218 = vadd.f32 %v1217, 1.0
        %v1219 = vrcp.pop %v1218
        %v1220 = vmul.f32 %v1218, %v1219
        %v1221 = vsub.f32 1.0, %v1220
        %v1222 = vmul.f32 %v1219, %v1221
        %v1223 = vadd.f32 %v1219, %v1222
        %vm1224 = vweird.f32 %v1218
        %vm1225 = vweird.f32 %v1219
        %vm1226 = vmor %vm1224, %vm1225
        %v1227 = vsel %vm1226, %v1219, %v1223
        %v1228 = vand.u32 2147483647, %v1218
        %vm1229 = vcmp.eq.f32.partialorder %v1228, 8.507059e+37
        %v1230 = vand.u32 %v1218, 2147483648
        %v1231 = vor.u32 1.1754944e-38, %v1230
        %v1232 = vsel %vm1229, %v1231, %v1227
        %v1233 = vmul.f32 %v1208, %v1232
        %v1234 = vmin.f32 %v1233, 1.0
        %v1235 = vmax.f32 %v1234, -1.0
        %v1236 = vmul.f32 %v947, %v947
        %v1237 = vmin.f32 16.0, %v1236
        %v1238 = vmul.f32 %v1237, 2.1237322e-06
        %v1239 = vadd.f32 %v1238, 0.00028619796
        %v1240 = vmul.f32 %v1237, %v1239
        %v1241 = vadd.f32 %v1240, 0.0036580483
        %v1242 = vmul.f32 %v1237, %v1241
        %v1243 = vadd.f32 %v1242, 0.05243302
        %v1244 = vmul.f32 %v1237, %v1243
        %v1245 = vadd.f32 %v1244, 0.18741608
        %v1246 = vmul.f32 %v1237, %v1245
        %v1247 = vadd.f32 %v1246, 1.1283791
        %v1248 = vmul.f32 %v947, %v1247
        %v1249 = vmul.f32 %v1237, 3.8918573e-05
        %v1250 = vadd.f32 %v1249, 0.001143296
        %v1251 = vmul.f32 %v1237, %v1250
        %v1252 = vadd.f32 %v1251, 0.014752088
        %v1253 = vmul.f32 %v1237, %v1252
        %v1254 = vadd.f32 %v1253, 0.112945676
        %v1255 = vmul.f32 %v1237, %v1254
        %v1256 = vadd.f32 %v1255, 0.4994258
        %v1257 = vmul.f32 %v1237, %v1256
        %v1258 = vadd.f32 %v1257, 1.0
        %v1259 = vrcp.pop %v1258
        %v1260 = vmul.f32 %v1258, %v1259
        %v1261 = vsub.f32 1.0, %v1260
        %v1262 = vmul.f32 %v1259, %v1261
        %v1263 = vadd.f32 %v1259, %v1262
        %vm1264 = vweird.f32 %v1258
        %vm1265 = vweird.f32 %v1259
        %vm1266 = vmor %vm1264, %vm1265
        %v1267 = vsel %vm1266, %v1259, %v1263
        %v1268 = vand.u32 2147483647, %v1258
        %vm1269 = vcmp.eq.f32.partialorder %v1268, 8.507059e+37
        %v1270 = vand.u32 %v1258, 2147483648
        %v1271 = vor.u32 1.1754944e-38, %v1270
        %v1272 = vsel %vm1269, %v1271, %v1267
        %v1273 = vmul.f32 %v1248, %v1272
        %v1274 = vmin.f32 %v1273, 1.0
        %v1275 = vmax.f32 %v1274, -1.0
        %v1276 = vmul.f32 %v948, %v948
        %v1277 = vmin.f32 16.0, %v1276
        %v1278 = vmul.f32 %v1277, 2.1237322e-06
        %v1279 = vadd.f32 %v1278, 0.00028619796
        %v1280 = vmul.f32 %v1277, %v1279
        %v1281 = vadd.f32 %v1280, 0.0036580483
        %v1282 = vmul.f32 %v1277, %v1281
        %v1283 = vadd.f32 %v1282, 0.05243302
        %v1284 = vmul.f32 %v1277, %v1283
        %v1285 = vadd.f32 %v1284, 0.18741608
        %v1286 = vmul.f32 %v1277, %v1285
        %v1287 = vadd.f32 %v1286, 1.1283791
        %v1288 = vmul.f32 %v948, %v1287
        %v1289 = vmul.f32 %v1277, 3.8918573e-05
        %v1290 = vadd.f32 %v1289, 0.001143296
        %v1291 = vmul.f32 %v1277, %v1290
        %v1292 = vadd.f32 %v1291, 0.014752088
        %v1293 = vmul.f32 %v1277, %v1292
        %v1294 = vadd.f32 %v1293, 0.112945676
        %v1295 = vmul.f32 %v1277, %v1294
        %v1296 = vadd.f32 %v1295, 0.4994258
        %v1297 = vmul.f32 %v1277, %v1296
        %v1298 = vadd.f32 %v1297, 1.0
        %v1299 = vrcp.pop %v1298
        %v1300 = vmul.f32 %v1298, %v1299
        %v1301 = vsub.f32 1.0, %v1300
        %v1302 = vmul.f32 %v1299, %v1301
        %v1303 = vadd.f32 %v1299, %v1302
        %vm1304 = vweird.f32 %v1298
        %vm1305 = vweird.f32 %v1299
        %vm1306 = vmor %vm1304, %vm1305
        %v1307 = vsel %vm1306, %v1299, %v1303
        %v1308 = vand.u32 2147483647, %v1298
        %vm1309 = vcmp.eq.f32.partialorder %v1308, 8.507059e+37
        %v1310 = vand.u32 %v1298, 2147483648
        %v1311 = vor.u32 1.1754944e-38, %v1310
        %v1312 = vsel %vm1309, %v1311, %v1307
        %v1313 = vmul.f32 %v1288, %v1312
        %v1314 = vmin.f32 %v1313, 1.0
        %v1315 = vmax.f32 %v1314, -1.0
        %v1316 = vmul.f32 %v949, %v949
        %v1317 = vmin.f32 16.0, %v1316
        %v1318 = vmul.f32 %v1317, 2.1237322e-06
        %v1319 = vadd.f32 %v1318, 0.00028619796
        %v1320 = vmul.f32 %v1317, %v1319
        %v1321 = vadd.f32 %v1320, 0.0036580483
        %v1322 = vmul.f32 %v1317, %v1321
        %v1323 = vadd.f32 %v1322, 0.05243302
        %v1324 = vmul.f32 %v1317, %v1323
        %v1325 = vadd.f32 %v1324, 0.18741608
        %v1326 = vmul.f32 %v1317, %v1325
        %v1327 = vadd.f32 %v1326, 1.1283791
        %v1328 = vmul.f32 %v949, %v1327
        %v1329 = vmul.f32 %v1317, 3.8918573e-05
        %v1330 = vadd.f32 %v1329, 0.001143296
        %v1331 = vmul.f32 %v1317, %v1330
        %v1332 = vadd.f32 %v1331, 0.014752088
        %v1333 = vmul.f32 %v1317, %v1332
        %v1334 = vadd.f32 %v1333, 0.112945676
        %v1335 = vmul.f32 %v1317, %v1334
        %v1336 = vadd.f32 %v1335, 0.4994258
        %v1337 = vmul.f32 %v1317, %v1336
        %v1338 = vadd.f32 %v1337, 1.0
        %v1339 = vrcp.pop %v1338
        %v1340 = vmul.f32 %v1338, %v1339
        %v1341 = vsub.f32 1.0, %v1340
        %v1342 = vmul.f32 %v1339, %v1341
        %v1343 = vadd.f32 %v1339, %v1342
        %vm1344 = vweird.f32 %v1338
        %vm1345 = vweird.f32 %v1339
        %vm1346 = vmor %vm1344, %vm1345
        %v1347 = vsel %vm1346, %v1339, %v1343
        %v1348 = vand.u32 2147483647, %v1338
        %vm1349 = vcmp.eq.f32.partialorder %v1348, 8.507059e+37
        %v1350 = vand.u32 %v1338, 2147483648
        %v1351 = vor.u32 1.1754944e-38, %v1350
        %v1352 = vsel %vm1349, %v1351, %v1347
        %v1353 = vmul.f32 %v1328, %v1352
        %v1354 = vmin.f32 %v1353, 1.0
        %v1355 = vmax.f32 %v1354, -1.0
        %v1356 = vmul.f32 %v950, %v950
        %v1357 = vmin.f32 16.0, %v1356
        %v1358 = vmul.f32 %v1357, 2.1237322e-06
        %v1359 = vadd.f32 %v1358, 0.00028619796
        %v1360 = vmul.f32 %v1357, %v1359
        %v1361 = vadd.f32 %v1360, 0.0036580483
        %v1362 = vmul.f32 %v1357, %v1361
        %v1363 = vadd.f32 %v1362, 0.05243302
        %v1364 = vmul.f32 %v1357, %v1363
        %v1365 = vadd.f32 %v1364, 0.18741608
        %v1366 = vmul.f32 %v1357, %v1365
        %v1367 = vadd.f32 %v1366, 1.1283791
        %v1368 = vmul.f32 %v950, %v1367
        %v1369 = vmul.f32 %v1357, 3.8918573e-05
        %v1370 = vadd.f32 %v1369, 0.001143296
        %v1371 = vmul.f32 %v1357, %v1370
        %v1372 = vadd.f32 %v1371, 0.014752088
        %v1373 = vmul.f32 %v1357, %v1372
        %v1374 = vadd.f32 %v1373, 0.112945676
        %v1375 = vmul.f32 %v1357, %v1374
        %v1376 = vadd.f32 %v1375, 0.4994258
        %v1377 = vmul.f32 %v1357, %v1376
        %v1378 = vadd.f32 %v1377, 1.0
        %v1379 = vrcp.pop %v1378
        %v1380 = vmul.f32 %v1378, %v1379
        %v1381 = vsub.f32 1.0, %v1380
        %v1382 = vmul.f32 %v1379, %v1381
        %v1383 = vadd.f32 %v1379, %v1382
        %vm1384 = vweird.f32 %v1378
        %vm1385 = vweird.f32 %v1379
        %vm1386 = vmor %vm1384, %vm1385
        %v1387 = vsel %vm1386, %v1379, %v1383
        %v1388 = vand.u32 2147483647, %v1378
        %vm1389 = vcmp.eq.f32.partialorder %v1388, 8.507059e+37
        %v1390 = vand.u32 %v1378, 2147483648
        %v1391 = vor.u32 1.1754944e-38, %v1390
        %v1392 = vsel %vm1389, %v1391, %v1387
        %v1393 = vmul.f32 %v1368, %v1392
        %v1394 = vmin.f32 %v1393, 1.0
        %v1395 = vmax.f32 %v1394, -1.0
        %v1396 = vmul.f32 %v951, %v951
        %v1397 = vmin.f32 16.0, %v1396
        %v1398 = vmul.f32 %v1397, 2.1237322e-06
        %v1399 = vadd.f32 %v1398, 0.00028619796
        %v1400 = vmul.f32 %v1397, %v1399
        %v1401 = vadd.f32 %v1400, 0.0036580483
        %v1402 = vmul.f32 %v1397, %v1401
        %v1403 = vadd.f32 %v1402, 0.05243302
        %v1404 = vmul.f32 %v1397, %v1403
        %v1405 = vadd.f32 %v1404, 0.18741608
        %v1406 = vmul.f32 %v1397, %v1405
        %v1407 = vadd.f32 %v1406, 1.1283791
        %v1408 = vmul.f32 %v951, %v1407
        %v1409 = vmul.f32 %v1397, 3.8918573e-05
        %v1410 = vadd.f32 %v1409, 0.001143296
        %v1411 = vmul.f32 %v1397, %v1410
        %v1412 = vadd.f32 %v1411, 0.014752088
        %v1413 = vmul.f32 %v1397, %v1412
        %v1414 = vadd.f32 %v1413, 0.112945676
        %v1415 = vmul.f32 %v1397, %v1414
        %v1416 = vadd.f32 %v1415, 0.4994258
        %v1417 = vmul.f32 %v1397, %v1416
        %v1418 = vadd.f32 %v1417, 1.0
        %v1419 = vrcp.pop %v1418
        %v1420 = vmul.f32 %v1418, %v1419
        %v1421 = vsub.f32 1.0, %v1420
        %v1422 = vmul.f32 %v1419, %v1421
        %v1423 = vadd.f32 %v1419, %v1422
        %vm1424 = vweird.f32 %v1418
        %vm1425 = vweird.f32 %v1419
        %vm1426 = vmor %vm1424, %vm1425
        %v1427 = vsel %vm1426, %v1419, %v1423
        %v1428 = vand.u32 2147483647, %v1418
        %vm1429 = vcmp.eq.f32.partialorder %v1428, 8.507059e+37
        %v1430 = vand.u32 %v1418, 2147483648
        %v1431 = vor.u32 1.1754944e-38, %v1430
        %v1432 = vsel %vm1429, %v1431, %v1427
        %v1433 = vmul.f32 %v1408, %v1432
        %v1434 = vmin.f32 %v1433, 1.0
        %v1435 = vmax.f32 %v1434, -1.0
        %v1436 = vmul.f32 %v952, %v952
        %v1437 = vmin.f32 16.0, %v1436
        %v1438 = vmul.f32 %v1437, 2.1237322e-06
        %v1439 = vadd.f32 %v1438, 0.00028619796
        %v1440 = vmul.f32 %v1437, %v1439
        %v1441 = vadd.f32 %v1440, 0.0036580483
        %v1442 = vmul.f32 %v1437, %v1441
        %v1443 = vadd.f32 %v1442, 0.05243302
        %v1444 = vmul.f32 %v1437, %v1443
        %v1445 = vadd.f32 %v1444, 0.18741608
        %v1446 = vmul.f32 %v1437, %v1445
        %v1447 = vadd.f32 %v1446, 1.1283791
        %v1448 = vmul.f32 %v952, %v1447
        %v1449 = vmul.f32 %v1437, 3.8918573e-05
        %v1450 = vadd.f32 %v1449, 0.001143296
        %v1451 = vmul.f32 %v1437, %v1450
        %v1452 = vadd.f32 %v1451, 0.014752088
        %v1453 = vmul.f32 %v1437, %v1452
        %v1454 = vadd.f32 %v1453, 0.112945676
        %v1455 = vmul.f32 %v1437, %v1454
        %v1456 = vadd.f32 %v1455, 0.4994258
        %v1457 = vmul.f32 %v1437, %v1456
        %v1458 = vadd.f32 %v1457, 1.0
        %v1459 = vrcp.pop %v1458
        %v1460 = vmul.f32 %v1458, %v1459
        %v1461 = vsub.f32 1.0, %v1460
        %v1462 = vmul.f32 %v1459, %v1461
        %v1463 = vadd.f32 %v1459, %v1462
        %vm1464 = vweird.f32 %v1458
        %vm1465 = vweird.f32 %v1459
        %vm1466 = vmor %vm1464, %vm1465
        %v1467 = vsel %vm1466, %v1459, %v1463
        %v1468 = vand.u32 2147483647, %v1458
        %vm1469 = vcmp.eq.f32.partialorder %v1468, 8.507059e+37
        %v1470 = vand.u32 %v1458, 2147483648
        %v1471 = vor.u32 1.1754944e-38, %v1470
        %v1472 = vsel %vm1469, %v1471, %v1467
        %v1473 = vmul.f32 %v1448, %v1472
        %v1474 = vmin.f32 %v1473, 1.0
        %v1475 = vmax.f32 %v1474, -1.0
        %v1476 = vmul.f32 %v953, %v953
        %v1477 = vmin.f32 16.0, %v1476
        %v1478 = vmul.f32 %v1477, 2.1237322e-06
        %v1479 = vadd.f32 %v1478, 0.00028619796
        %v1480 = vmul.f32 %v1477, %v1479
        %v1481 = vadd.f32 %v1480, 0.0036580483
        %v1482 = vmul.f32 %v1477, %v1481
        %v1483 = vadd.f32 %v1482, 0.05243302
        %v1484 = vmul.f32 %v1477, %v1483
        %v1485 = vadd.f32 %v1484, 0.18741608
        %v1486 = vmul.f32 %v1477, %v1485
        %v1487 = vadd.f32 %v1486, 1.1283791
        %v1488 = vmul.f32 %v953, %v1487
        %v1489 = vmul.f32 %v1477, 3.8918573e-05
        %v1490 = vadd.f32 %v1489, 0.001143296
        %v1491 = vmul.f32 %v1477, %v1490
        %v1492 = vadd.f32 %v1491, 0.014752088
        %v1493 = vmul.f32 %v1477, %v1492
        %v1494 = vadd.f32 %v1493, 0.112945676
        %v1495 = vmul.f32 %v1477, %v1494
        %v1496 = vadd.f32 %v1495, 0.4994258
        %v1497 = vmul.f32 %v1477, %v1496
        %v1498 = vadd.f32 %v1497, 1.0
        %v1499 = vrcp.pop %v1498
        %v1500 = vmul.f32 %v1498, %v1499
        %v1501 = vsub.f32 1.0, %v1500
        %v1502 = vmul.f32 %v1499, %v1501
        %v1503 = vadd.f32 %v1499, %v1502
        %vm1504 = vweird.f32 %v1498
        %vm1505 = vweird.f32 %v1499
        %vm1506 = vmor %vm1504, %vm1505
        %v1507 = vsel %vm1506, %v1499, %v1503
        %v1508 = vand.u32 2147483647, %v1498
        %vm1509 = vcmp.eq.f32.partialorder %v1508, 8.507059e+37
        %v1510 = vand.u32 %v1498, 2147483648
        %v1511 = vor.u32 1.1754944e-38, %v1510
        %v1512 = vsel %vm1509, %v1511, %v1507
        %v1513 = vmul.f32 %v1488, %v1512
        %v1514 = vmin.f32 %v1513, 1.0
        %v1515 = vmax.f32 %v1514, -1.0
        %v1516 = vmul.f32 %v954, %v954
        %v1517 = vmin.f32 16.0, %v1516
        %v1518 = vmul.f32 %v1517, 2.1237322e-06
        %v1519 = vadd.f32 %v1518, 0.00028619796
        %v1520 = vmul.f32 %v1517, %v1519
        %v1521 = vadd.f32 %v1520, 0.0036580483
        %v1522 = vmul.f32 %v1517, %v1521
        %v1523 = vadd.f32 %v1522, 0.05243302
        %v1524 = vmul.f32 %v1517, %v1523
        %v1525 = vadd.f32 %v1524, 0.18741608
        %v1526 = vmul.f32 %v1517, %v1525
        %v1527 = vadd.f32 %v1526, 1.1283791
        %v1528 = vmul.f32 %v954, %v1527
        %v1529 = vmul.f32 %v1517, 3.8918573e-05
        %v1530 = vadd.f32 %v1529, 0.001143296
        %v1531 = vmul.f32 %v1517, %v1530
        %v1532 = vadd.f32 %v1531, 0.014752088
        %v1533 = vmul.f32 %v1517, %v1532
        %v1534 = vadd.f32 %v1533, 0.112945676
        %v1535 = vmul.f32 %v1517, %v1534
        %v1536 = vadd.f32 %v1535, 0.4994258
        %v1537 = vmul.f32 %v1517, %v1536
        %v1538 = vadd.f32 %v1537, 1.0
        %v1539 = vrcp.pop %v1538
        %v1540 = vmul.f32 %v1538, %v1539
        %v1541 = vsub.f32 1.0, %v1540
        %v1542 = vmul.f32 %v1539, %v1541
        %v1543 = vadd.f32 %v1539, %v1542
        %vm1544 = vweird.f32 %v1538
        %vm1545 = vweird.f32 %v1539
        %vm1546 = vmor %vm1544, %vm1545
        %v1547 = vsel %vm1546, %v1539, %v1543
        %v1548 = vand.u32 2147483647, %v1538
        %vm1549 = vcmp.eq.f32.partialorder %v1548, 8.507059e+37
        %v1550 = vand.u32 %v1538, 2147483648
        %v1551 = vor.u32 1.1754944e-38, %v1550
        %v1552 = vsel %vm1549, %v1551, %v1547
        %v1553 = vmul.f32 %v1528, %v1552
        %v1554 = vmin.f32 %v1553, 1.0
        %v1555 = vmax.f32 %v1554, -1.0
        %v1556 = vmul.f32 %v955, %v955
        %v1557 = vmin.f32 16.0, %v1556
        %v1558 = vmul.f32 %v1557, 2.1237322e-06
        %v1559 = vadd.f32 %v1558, 0.00028619796
        %v1560 = vmul.f32 %v1557, %v1559
        %v1561 = vadd.f32 %v1560, 0.0036580483
        %v1562 = vmul.f32 %v1557, %v1561
        %v1563 = vadd.f32 %v1562, 0.05243302
        %v1564 = vmul.f32 %v1557, %v1563
        %v1565 = vadd.f32 %v1564, 0.18741608
        %v1566 = vmul.f32 %v1557, %v1565
        %v1567 = vadd.f32 %v1566, 1.1283791
        %v1568 = vmul.f32 %v955, %v1567
        %v1569 = vmul.f32 %v1557, 3.8918573e-05
        %v1570 = vadd.f32 %v1569, 0.001143296
        %v1571 = vmul.f32 %v1557, %v1570
        %v1572 = vadd.f32 %v1571, 0.014752088
        %v1573 = vmul.f32 %v1557, %v1572
        %v1574 = vadd.f32 %v1573, 0.112945676
        %v1575 = vmul.f32 %v1557, %v1574
        %v1576 = vadd.f32 %v1575, 0.4994258
        %v1577 = vmul.f32 %v1557, %v1576
        %v1578 = vadd.f32 %v1577, 1.0
        %v1579 = vrcp.pop %v1578
        %v1580 = vmul.f32 %v1578, %v1579
        %v1581 = vsub.f32 1.0, %v1580
        %v1582 = vmul.f32 %v1579, %v1581
        %v1583 = vadd.f32 %v1579, %v1582
        %vm1584 = vweird.f32 %v1578
        %vm1585 = vweird.f32 %v1579
        %vm1586 = vmor %vm1584, %vm1585
        %v1587 = vsel %vm1586, %v1579, %v1583
        %v1588 = vand.u32 2147483647, %v1578
        %vm1589 = vcmp.eq.f32.partialorder %v1588, 8.507059e+37
        %v1590 = vand.u32 %v1578, 2147483648
        %v1591 = vor.u32 1.1754944e-38, %v1590
        %v1592 = vsel %vm1589, %v1591, %v1587
        %v1593 = vmul.f32 %v1568, %v1592
        %v1594 = vmin.f32 %v1593, 1.0
        %v1595 = vmax.f32 %v1594, -1.0
        %v1596 = vadd.f32 %v995, 1.0
        %v1597 = vadd.f32 %v1035, 1.0
        %v1598 = vadd.f32 %v1075, 1.0
        %v1599 = vadd.f32 %v1115, 1.0
        %v1600 = vadd.f32 %v1155, 1.0
        %v1601 = vadd.f32 %v1195, 1.0
        %v1602 = vadd.f32 %v1235, 1.0
        %v1603 = vadd.f32 %v1275, 1.0
        %v1604 = vadd.f32 %v1315, 1.0
        %v1605 = vadd.f32 %v1355, 1.0
        %v1606 = vadd.f32 %v1395, 1.0
        %v1607 = vadd.f32 %v1435, 1.0
        %v1608 = vadd.f32 %v1475, 1.0
        %v1609 = vadd.f32 %v1515, 1.0
        %v1610 = vadd.f32 %v1555, 1.0
        %v1611 = vadd.f32 %v1595, 1.0
        %v1612 = vmul.f32 %v924, %v1596
        %v1613 = vmul.f32 %v925, %v1597
        %v1614 = vmul.f32 %v926, %v1598
        %v1615 = vmul.f32 %v927, %v1599
        %v1616 = vmul.f32 %v928, %v1600
        %v1617 = vmul.f32 %v929, %v1601
        %v1618 = vmul.f32 %v930, %v1602
        %v1619 = vmul.f32 %v931, %v1603
        %v1620 = vmul.f32 %v932, %v1604
        %v1621 = vmul.f32 %v933, %v1605
        %v1622 = vmul.f32 %v934, %v1606
        %v1623 = vmul.f32 %v935, %v1607
        %v1624 = vmul.f32 %v936, %v1608
        %v1625 = vmul.f32 %v937, %v1609
        %v1626 = vmul.f32 %v938, %v1610
        %v1627 = vmul.f32 %v939, %v1611
        %1629 = vset.pattern.permute.xlu0 0
        %1630 = vperm.xlu0 %1629, %v641
        %v1631 = vpop.permute.xlu0 %1630
        %1633 = vmatpush.msra.mxu0 %v1627
        %1634 = vmatpush.msra.mxu0 %v1626
        %1635 = vmatpush.msra.mxu0 %v1625
        %1636 = vmatpush.msra.mxu0 %v1624
        %1637 = vmatpush.msra.mxu0 %v1623
        %1638 = vmatpush.msra.mxu0 %v1622
        %1639 = vmatpush.msra.mxu0 %v1621
        %1640 = vmatpush.msra.mxu0 %v1620
        %1641 = vmatpush.msra.mxu0 %v1619
        %1642 = vmatpush.msra.mxu0 %v1618
        %1643 = vmatpush.msra.mxu0 %v1617
        %1644 = vmatpush.msra.mxu0 %v1616
        %1645 = vmatpush.msra.mxu0 %v1615
        %1646 = vmatpush.msra.mxu0 %v1614
        %1647 = vmatpush.msra.mxu0 %v1613
        %1648 = vmatpush.msra.mxu0 %v1612
        %1649 = vmatmul.f32.gmra.mxu0 %v640
        %v1650 = vpop.f32.mrf.mxu0
        %v1651 = vadd.f32 %v1631, %v1650
        %1652 = vdwg.mxu0
        %v1653 = vsel %vm603, %v1651, 0.0
        %v1654 = vadd.f32 %v604, %v1653
        %1655 = vadd.xlane.f32.xlu0 %v1654
        %v1656 = vpop.xlane.xlu0 %1655
        %v1657 = vmul.f32 %v1656, 0.03125
        %v1658 = vsub.f32 %v1654, %v1657
        %v1659 = vmul.f32 %v1658, %v1658
        %v1660 = vsel %vm603, %v1659, 0.0
        %1661 = vadd.xlane.f32.xlu0 %v1660
        %v1662 = vpop.xlane.xlu0 %1661
        %v1663 = vmul.f32 %v1662, 0.03125
        %v1664 = vadd.f32 %v1663, 1e-05
        %v1665 = vrsqrt.pop %v1664
        %v1666 = vmul.f32 %v1665, %v1664
        %v1667 = vmul.f32 %v1666, %v1665
        %v1668 = vmul.f32 0.5, %v1667
        %v1669 = vsub.f32 1.5, %v1668
        %v1670 = vmul.f32 %v1665, %v1669
        %vm1671 = vweird.f32 %v1664
        %vm1672 = vweird.f32 %v1665
        %vm1673 = vmor %vm1671, %vm1672
        %v1674 = vsel %vm1673, %v1665, %v1670
        %v1675 = vmul.f32 %v1658, %v1674
        %v1677 = vperm.slane %v642, 0
        %v1679 = vmul.f32 %v1675, %v1677
        %v1681 = vperm.slane %v643, 0
        %v1683 = vadd.f32 %v1679, %v1681
        %v1685 = vperm.slane %v660, 0
        %1687 = vmatpush.msra.mxu0 %v659
        %1688 = vmatpush.msra.mxu0 %v658
        %1689 = vmatpush.msra.mxu0 %v657
        %1690 = vmatpush.msra.mxu0 %v656
        %1691 = vmatpush.msra.mxu0 %v655
        %1692 = vmatpush.msra.mxu0 %v654
        %1693 = vmatpush.msra.mxu0 %v653
        %1694 = vmatpush.msra.mxu0 %v652
        %1695 = vmatpush.msra.mxu0 %v651
        %1696 = vmatpush.msra.mxu0 %v650
        %1697 = vmatpush.msra.mxu0 %v649
        %1698 = vmatpush.msra.mxu0 %v648
        %1699 = vmatpush.msra.mxu0 %v647
        %1700 = vmatpush.msra.mxu0 %v646
        %1701 = vmatpush.msra.mxu0 %v645
        %1702 = vmatpush.msra.mxu0 %v644
        %1703 = vmatmul.f32.gmra.mxu0 %v1683
        %v1704 = vpop.f32.mrf.mxu0
        %v1705 = vadd.f32 %v1685, %v1704
        %1706 = vdwg.mxu0
        %v1707 = vmul.f32 %v1705, 0.5
        %v1708 = vmul.f32 %v1705, 0.70710677
        %v1709 = vmul.f32 %v1708, %v1708
        %v1710 = vmin.f32 16.0, %v1709
        %v1711 = vmul.f32 %v1710, 2.1237322e-06
        %v1712 = vadd.f32 %v1711, 0.00028619796
        %v1713 = vmul.f32 %v1710, %v1712
        %v1714 = vadd.f32 %v1713, 0.0036580483
        %v1715 = vmul.f32 %v1710, %v1714
        %v1716 = vadd.f32 %v1715, 0.05243302
        %v1717 = vmul.f32 %v1710, %v1716
        %v1718 = vadd.f32 %v1717, 0.18741608
        %v1719 = vmul.f32 %v1710, %v1718
        %v1720 = vadd.f32 %v1719, 1.1283791
        %v1721 = vmul.f32 %v1708, %v1720
        %v1722 = vmul.f32 %v1710, 3.8918573e-05
        %v1723 = vadd.f32 %v1722, 0.001143296
        %v1724 = vmul.f32 %v1710, %v1723
        %v1725 = vadd.f32 %v1724, 0.014752088
        %v1726 = vmul.f32 %v1710, %v1725
        %v1727 = vadd.f32 %v1726, 0.112945676
        %v1728 = vmul.f32 %v1710, %v1727
        %v1729 = vadd.f32 %v1728, 0.4994258
        %v1730 = vmul.f32 %v1710, %v1729
        %v1731 = vadd.f32 %v1730, 1.0
        %v1732 = vrcp.pop %v1731
        %v1733 = vmul.f32 %v1731, %v1732
        %v1734 = vsub.f32 1.0, %v1733
        %v1735 = vmul.f32 %v1732, %v1734
        %v1736 = vadd.f32 %v1732, %v1735
        %vm1737 = vweird.f32 %v1731
        %vm1738 = vweird.f32 %v1732
        %vm1739 = vmor %vm1737, %vm1738
        %v1740 = vsel %vm1739, %v1732, %v1736
        %v1741 = vand.u32 2147483647, %v1731
        %vm1742 = vcmp.eq.f32.partialorder %v1741, 8.507059e+37
        %v1743 = vand.u32 %v1731, 2147483648
        %v1744 = vor.u32 1.1754944e-38, %v1743
        %v1745 = vsel %vm1742, %v1744, %v1740
        %v1746 = vmul.f32 %v1721, %v1745
        %v1747 = vmin.f32 %v1746, 1.0
        %v1748 = vmax.f32 %v1747, -1.0
        %v1749 = vadd.f32 %v1748, 1.0
        %v1750 = vmul.f32 %v1707, %v1749
        %v1752 = vperm.slane %v677, 0
        %1754 = vmatpush.msra.mxu0 %v676
        %1755 = vmatpush.msra.mxu0 %v675
        %1756 = vmatpush.msra.mxu0 %v674
        %1757 = vmatpush.msra.mxu0 %v673
        %1758 = vmatpush.msra.mxu0 %v672
        %1759 = vmatpush.msra.mxu0 %v671
        %1760 = vmatpush.msra.mxu0 %v670
        %1761 = vmatpush.msra.mxu0 %v669
        %1762 = vmatpush.msra.mxu0 %v668
        %1763 = vmatpush.msra.mxu0 %v667
        %1764 = vmatpush.msra.mxu0 %v666
        %1765 = vmatpush.msra.mxu0 %v665
        %1766 = vmatpush.msra.mxu0 %v664
        %1767 = vmatpush.msra.mxu0 %v663
        %1768 = vmatpush.msra.mxu0 %v662
        %1769 = vmatpush.msra.mxu0 %v661
        %1770 = vmatmul.f32.gmra.mxu0 %v1750
        %v1771 = vpop.f32.mrf.mxu0
        %v1772 = vadd.f32 %v1752, %v1771
        %1773 = vdwg.mxu0
        %v1774 = vadd.f32 %v1654, %v1772
        %s1775 = scalar_lea.vmem %s2, 1
        %v1776 = vld [vmem:[%s1775] sm:$0x1]
        %s1777 = scalar_lea.vmem [#allocation2], 1
        %v1778 = vld [vmem:[%s1777] sm:$0x1]
        %s1779 = scalar_lea.vmem %s4, 128
        %v1780 = vld [vmem:[%s1779] sm:$0xff]
        %v1781 = vld [vmem:[%s1779 + $0x8] sm:$0xff]
        %v1782 = vld [vmem:[%s1779 + $0x10] sm:$0xff]
        %v1783 = vld [vmem:[%s1779 + $0x18] sm:$0xff]
        %v1784 = vld [vmem:[%s1779 + $0x20] sm:$0xff]
        %v1785 = vld [vmem:[%s1779 + $0x28] sm:$0xff]
        %v1786 = vld [vmem:[%s1779 + $0x30] sm:$0xff]
        %v1787 = vld [vmem:[%s1779 + $0x38] sm:$0xff]
        %v1788 = vld [vmem:[%s1779 + $0x40] sm:$0xff]
        %v1789 = vld [vmem:[%s1779 + $0x48] sm:$0xff]
        %v1790 = vld [vmem:[%s1779 + $0x50] sm:$0xff]
        %v1791 = vld [vmem:[%s1779 + $0x58] sm:$0xff]
        %v1792 = vld [vmem:[%s1779 + $0x60] sm:$0xff]
        %v1793 = vld [vmem:[%s1779 + $0x68] sm:$0xff]
        %v1794 = vld [vmem:[%s1779 + $0x70] sm:$0xff]
        %v1795 = vld [vmem:[%s1779 + $0x78] sm:$0xff]
        %s1796 = scalar_lea.vmem %s5, 128
        %v1797 = vld [vmem:[%s1796] sm:$0xff]
        %v1798 = vld [vmem:[%s1796 + $0x8] sm:$0xff]
        %v1799 = vld [vmem:[%s1796 + $0x10] sm:$0xff]
        %v1800 = vld [vmem:[%s1796 + $0x18] sm:$0xff]
        %v1801 = vld [vmem:[%s1796 + $0x20] sm:$0xff]
        %v1802 = vld [vmem:[%s1796 + $0x28] sm:$0xff]
        %v1803 = vld [vmem:[%s1796 + $0x30] sm:$0xff]
        %v1804 = vld [vmem:[%s1796 + $0x38] sm:$0xff]
        %v1805 = vld [vmem:[%s1796 + $0x40] sm:$0xff]
        %v1806 = vld [vmem:[%s1796 + $0x48] sm:$0xff]
        %v1807 = vld [vmem:[%s1796 + $0x50] sm:$0xff]
        %v1808 = vld [vmem:[%s1796 + $0x58] sm:$0xff]
        %v1809 = vld [vmem:[%s1796 + $0x60] sm:$0xff]
        %v1810 = vld [vmem:[%s1796 + $0x68] sm:$0xff]
        %v1811 = vld [vmem:[%s1796 + $0x70] sm:$0xff]
        %v1812 = vld [vmem:[%s1796 + $0x78] sm:$0xff]
        %s1813 = scalar_lea.vmem [#allocation5], 8
        %v1814 = vld [vmem:[%s1813] sm:$0xff]
        %s1815 = scalar_lea.vmem %s7, 8
        %v1816 = vld [vmem:[%s1815] sm:$0xff]
        %s1817 = scalar_lea.vmem %s8, 1
        %v1818 = vld [vmem:[%s1817] sm:$0x1]
        %s1819 = scalar_lea.vmem [#allocation7], 1
        %v1820 = vld [vmem:[%s1819] sm:$0x1]
        %s1821 = scalar_lea.vmem %s10, 128
        %v1822 = vld [vmem:[%s1821] sm:$0xff]
        %v1823 = vld [vmem:[%s1821 + $0x8] sm:$0xff]
        %v1824 = vld [vmem:[%s1821 + $0x10] sm:$0xff]
        %v1825 = vld [vmem:[%s1821 + $0x18] sm:$0xff]
        %v1826 = vld [vmem:[%s1821 + $0x20] sm:$0xff]
        %v1827 = vld [vmem:[%s1821 + $0x28] sm:$0xff]
        %v1828 = vld [vmem:[%s1821 + $0x30] sm:$0xff]
        %v1829 = vld [vmem:[%s1821 + $0x38] sm:$0xff]
        %v1830 = vld [vmem:[%s1821 + $0x40] sm:$0xff]
        %v1831 = vld [vmem:[%s1821 + $0x48] sm:$0xff]
        %v1832 = vld [vmem:[%s1821 + $0x50] sm:$0xff]
        %v1833 = vld [vmem:[%s1821 + $0x58] sm:$0xff]
        %v1834 = vld [vmem:[%s1821 + $0x60] sm:$0xff]
        %v1835 = vld [vmem:[%s1821 + $0x68] sm:$0xff]
        %v1836 = vld [vmem:[%s1821 + $0x70] sm:$0xff]
        %v1837 = vld [vmem:[%s1821 + $0x78] sm:$0xff]
        %s1838 = scalar_lea.vmem [#allocation8], 1
        %v1839 = vld [vmem:[%s1838] sm:$0x1]
        %s1840 = scalar_lea.vmem %s12, 128
        %v1841 = vld [vmem:[%s1840] sm:$0xff]
        %v1842 = vld [vmem:[%s1840 + $0x8] sm:$0xff]
        %v1843 = vld [vmem:[%s1840 + $0x10] sm:$0xff]
        %v1844 = vld [vmem:[%s1840 + $0x18] sm:$0xff]
        %v1845 = vld [vmem:[%s1840 + $0x20] sm:$0xff]
        %v1846 = vld [vmem:[%s1840 + $0x28] sm:$0xff]
        %v1847 = vld [vmem:[%s1840 + $0x30] sm:$0xff]
        %v1848 = vld [vmem:[%s1840 + $0x38] sm:$0xff]
        %v1849 = vld [vmem:[%s1840 + $0x40] sm:$0xff]
        %v1850 = vld [vmem:[%s1840 + $0x48] sm:$0xff]
        %v1851 = vld [vmem:[%s1840 + $0x50] sm:$0xff]
        %v1852 = vld [vmem:[%s1840 + $0x58] sm:$0xff]
        %v1853 = vld [vmem:[%s1840 + $0x60] sm:$0xff]
        %v1854 = vld [vmem:[%s1840 + $0x68] sm:$0xff]
        %v1855 = vld [vmem:[%s1840 + $0x70] sm:$0xff]
        %v1856 = vld [vmem:[%s1840 + $0x78] sm:$0xff]
        %s1857 = scalar_lea.vmem %s13, 1
        %v1858 = vld [vmem:[%s1857] sm:$0x1]
        %1859 = vmatpush.msra.mxu0 0.0
        %1860 = vmatpush.msra.mxu0 0.0
        %1861 = vmatpush.msra.mxu0 0.0
        %1862 = vmatpush.msra.mxu0 0.0
        %1863 = vmatpush.msra.mxu0 0.0
        %1864 = vmatpush.msra.mxu0 0.0
        %1865 = vmatpush.msra.mxu0 0.0
        %1866 = vmatpush.msra.mxu0 0.0
        %1867 = vmatpush.msra.mxu0 0.0
        %1868 = vmatpush.msra.mxu0 0.0
        %1869 = vmatpush.msra.mxu0 0.0
        %1870 = vmatpush.msra.mxu0 0.0
        %1871 = vmatpush.msra.mxu0 0.0
        %1872 = vmatpush.msra.mxu0 0.0
        %1873 = vmatpush.msra.mxu0 0.0
        %1874 = vmatpush.msra.mxu0 %v1774
        %1875 = vmatmul.f32.gmra.mxu0 %v680
        %v1876 = vpop.f32.mrf.mxu0
        %v1877 = vadd.f32 0.0, %v1876
        %1878 = vdwg.mxu0
        %1879 = vadd.xlane.f32.xlu0 %v1877
        %v1880 = vpop.xlane.xlu0 %1879
        %v1881 = vmul.f32 %v1880, 0.03125
        %v1882 = vsub.f32 %v1877, %v1881
        %v1883 = vmul.f32 %v1882, %v1882
        %v1884 = vsel %vm603, %v1883, 0.0
        %1885 = vadd.xlane.f32.xlu0 %v1884
        %v1886 = vpop.xlane.xlu0 %1885
        %v1887 = vmul.f32 %v1886, 0.03125
        %v1888 = vadd.f32 %v1887, 1e-05
        %v1889 = vrsqrt.pop %v1888
        %v1890 = vmul.f32 %v1889, %v1888
        %v1891 = vmul.f32 %v1890, %v1889
        %v1892 = vmul.f32 0.5, %v1891
        %v1893 = vsub.f32 1.5, %v1892
        %v1894 = vmul.f32 %v1889, %v1893
        %vm1895 = vweird.f32 %v1888
        %vm1896 = vweird.f32 %v1889
        %vm1897 = vmor %vm1895, %vm1896
        %v1898 = vsel %vm1897, %v1889, %v1894
        %v1899 = vmul.f32 %v1882, %v1898
        %v1901 = vperm.slane %v1776, 0
        %v1903 = vmul.f32 %v1899, %v1901
        %v1905 = vperm.slane %v1778, 0
        %v1907 = vadd.f32 %v1903, %v1905
        %1909 = vset.pattern.permute.xlu0 0
        %1910 = vperm.xlu0 %1909, %v1797
        %v1911 = vpop.permute.xlu0 %1910
        %1914 = vset.pattern.permute.xlu0 0
        %1915 = vperm.xlu0 %1914, %v1798
        %v1916 = vpop.permute.xlu0 %1915
        %1919 = vset.pattern.permute.xlu0 0
        %1920 = vperm.xlu0 %1919, %v1799
        %v1921 = vpop.permute.xlu0 %1920
        %1924 = vset.pattern.permute.xlu0 0
        %1925 = vperm.xlu0 %1924, %v1800
        %v1926 = vpop.permute.xlu0 %1925
        %1929 = vset.pattern.permute.xlu0 0
        %1930 = vperm.xlu0 %1929, %v1801
        %v1931 = vpop.permute.xlu0 %1930
        %1934 = vset.pattern.permute.xlu0 0
        %1935 = vperm.xlu0 %1934, %v1802
        %v1936 = vpop.permute.xlu0 %1935
        %1939 = vset.pattern.permute.xlu0 0
        %1940 = vperm.xlu0 %1939, %v1803
        %v1941 = vpop.permute.xlu0 %1940
        %1944 = vset.pattern.permute.xlu0 0
        %1945 = vperm.xlu0 %1944, %v1804
        %v1946 = vpop.permute.xlu0 %1945
        %1949 = vset.pattern.permute.xlu0 0
        %1950 = vperm.xlu0 %1949, %v1805
        %v1951 = vpop.permute.xlu0 %1950
        %1954 = vset.pattern.permute.xlu0 0
        %1955 = vperm.xlu0 %1954, %v1806
        %v1956 = vpop.permute.xlu0 %1955
        %1959 = vset.pattern.permute.xlu0 0
        %1960 = vperm.xlu0 %1959, %v1807
        %v1961 = vpop.permute.xlu0 %1960
        %1964 = vset.pattern.permute.xlu0 0
        %1965 = vperm.xlu0 %1964, %v1808
        %v1966 = vpop.permute.xlu0 %1965
        %1969 = vset.pattern.permute.xlu0 0
        %1970 = vperm.xlu0 %1969, %v1809
        %v1971 = vpop.permute.xlu0 %1970
        %1974 = vset.pattern.permute.xlu0 0
        %1975 = vperm.xlu0 %1974, %v1810
        %v1976 = vpop.permute.xlu0 %1975
        %1979 = vset.pattern.permute.xlu0 0
        %1980 = vperm.xlu0 %1979, %v1811
        %v1981 = vpop.permute.xlu0 %1980
        %1984 = vset.pattern.permute.xlu0 0
        %1985 = vperm.xlu0 %1984, %v1812
        %v1986 = vpop.permute.xlu0 %1985
        %v1989 = vsel %vm678, %v1780, 0
        %v1992 = vsel %vm678, %v1781, 0
        %v1995 = vsel %vm678, %v1782, 0
        %v1998 = vsel %vm678, %v1783, 0
        %v2001 = vsel %vm678, %v1784, 0
        %v2004 = vsel %vm678, %v1785, 0
        %v2007 = vsel %vm678, %v1786, 0
        %v2010 = vsel %vm678, %v1787, 0
        %v2013 = vsel %vm678, %v1788, 0
        %v2016 = vsel %vm678, %v1789, 0
        %v2019 = vsel %vm678, %v1790, 0
        %v2022 = vsel %vm678, %v1791, 0
        %v2025 = vsel %vm678, %v1792, 0
        %v2028 = vsel %vm678, %v1793, 0
        %v2031 = vsel %vm678, %v1794, 0
        %v2034 = vsel %vm678, %v1795, 0
        %2036 = vmatpush.msra.mxu0 0.0
        %2037 = vmatpush.msra.mxu0 0.0
        %2038 = vmatpush.msra.mxu0 0.0
        %2039 = vmatpush.msra.mxu0 0.0
        %2040 = vmatpush.msra.mxu0 0.0
        %2041 = vmatpush.msra.mxu0 0.0
        %2042 = vmatpush.msra.mxu0 0.0
        %2043 = vmatpush.msra.mxu0 0.0
        %2044 = vmatpush.msra.mxu0 0.0
        %2045 = vmatpush.msra.mxu0 0.0
        %2046 = vmatpush.msra.mxu0 0.0
        %2047 = vmatpush.msra.mxu0 0.0
        %2048 = vmatpush.msra.mxu0 0.0
        %2049 = vmatpush.msra.mxu0 0.0
        %2050 = vmatpush.msra.mxu0 0.0
        %2051 = vmatpush.msra.mxu0 %v1907
        %2052 = vmatmul.f32.gmra.mxu0 %v1989
        %v2053 = vpop.f32.mrf.mxu0
        %v2054 = vadd.f32 %v1911, %v2053
        %2055 = vmatmul.f32.gmra.mxu0 %v1992
        %v2056 = vpop.f32.mrf.mxu0
        %v2057 = vadd.f32 %v1916, %v2056
        %2058 = vmatmul.f32.gmra.mxu0 %v1995
        %v2059 = vpop.f32.mrf.mxu0
        %v2060 = vadd.f32 %v1921, %v2059
        %2061 = vmatmul.f32.gmra.mxu0 %v1998
        %v2062 = vpop.f32.mrf.mxu0
        %v2063 = vadd.f32 %v1926, %v2062
        %2064 = vmatmul.f32.gmra.mxu0 %v2001
        %v2065 = vpop.f32.mrf.mxu0
        %v2066 = vadd.f32 %v1931, %v2065
        %2067 = vmatmul.f32.gmra.mxu0 %v2004
        %v2068 = vpop.f32.mrf.mxu0
        %v2069 = vadd.f32 %v1936, %v2068
        %2070 = vmatmul.f32.gmra.mxu0 %v2007
        %v2071 = vpop.f32.mrf.mxu0
        %v2072 = vadd.f32 %v1941, %v2071
        %2073 = vmatmul.f32.gmra.mxu0 %v2010
        %v2074 = vpop.f32.mrf.mxu0
        %v2075 = vadd.f32 %v1946, %v2074
        %2076 = vmatmul.f32.gmra.mxu0 %v2013
        %v2077 = vpop.f32.mrf.mxu0
        %v2078 = vadd.f32 %v1951, %v2077
        %2079 = vmatmul.f32.gmra.mxu0 %v2016
        %v2080 = vpop.f32.mrf.mxu0
        %v2081 = vadd.f32 %v1956, %v2080
        %2082 = vmatmul.f32.gmra.mxu0 %v2019
        %v2083 = vpop.f32.mrf.mxu0
        %v2084 = vadd.f32 %v1961, %v2083
        %2085 = vmatmul.f32.gmra.mxu0 %v2022
        %v2086 = vpop.f32.mrf.mxu0
        %v2087 = vadd.f32 %v1966, %v2086
        %2088 = vmatmul.f32.gmra.mxu0 %v2025
        %v2089 = vpop.f32.mrf.mxu0
        %v2090 = vadd.f32 %v1971, %v2089
        %2091 = vmatmul.f32.gmra.mxu0 %v2028
        %v2092 = vpop.f32.mrf.mxu0
        %v2093 = vadd.f32 %v1976, %v2092
        %2094 = vmatmul.f32.gmra.mxu0 %v2031
        %v2095 = vpop.f32.mrf.mxu0
        %v2096 = vadd.f32 %v1981, %v2095
        %2097 = vmatmul.f32.gmra.mxu0 %v2034
        %v2098 = vpop.f32.mrf.mxu0
        %v2099 = vadd.f32 %v1986, %v2098
        %2100 = vdwg.mxu0
        %v2101 = vmul.f32 %v2054, 0.5
        %v2102 = vmul.f32 %v2057, 0.5
        %v2103 = vmul.f32 %v2060, 0.5
        %v2104 = vmul.f32 %v2063, 0.5
        %v2105 = vmul.f32 %v2066, 0.5
        %v2106 = vmul.f32 %v2069, 0.5
        %v2107 = vmul.f32 %v2072, 0.5
        %v2108 = vmul.f32 %v2075, 0.5
        %v2109 = vmul.f32 %v2078, 0.5
        %v2110 = vmul.f32 %v2081, 0.5
        %v2111 = vmul.f32 %v2084, 0.5
        %v2112 = vmul.f32 %v2087, 0.5
        %v2113 = vmul.f32 %v2090, 0.5
        %v2114 = vmul.f32 %v2093, 0.5
        %v2115 = vmul.f32 %v2096, 0.5
        %v2116 = vmul.f32 %v2099, 0.5
        %v2117 = vmul.f32 %v2054, 0.70710677
        %v2118 = vmul.f32 %v2057, 0.70710677
        %v2119 = vmul.f32 %v2060, 0.70710677
        %v2120 = vmul.f32 %v2063, 0.70710677
        %v2121 = vmul.f32 %v2066, 0.70710677
        %v2122 = vmul.f32 %v2069, 0.70710677
        %v2123 = vmul.f32 %v2072, 0.70710677
        %v2124 = vmul.f32 %v2075, 0.70710677
        %v2125 = vmul.f32 %v2078, 0.70710677
        %v2126 = vmul.f32 %v2081, 0.70710677
        %v2127 = vmul.f32 %v2084, 0.70710677
        %v2128 = vmul.f32 %v2087, 0.70710677
        %v2129 = vmul.f32 %v2090, 0.70710677
        %v2130 = vmul.f32 %v2093, 0.70710677
        %v2131 = vmul.f32 %v2096, 0.70710677
        %v2132 = vmul.f32 %v2099, 0.70710677
        %v2133 = vmul.f32 %v2117, %v2117
        %v2134 = vmin.f32 16.0, %v2133
        %v2135 = vmul.f32 %v2134, 2.1237322e-06
        %v2136 = vadd.f32 %v2135, 0.00028619796
        %v2137 = vmul.f32 %v2134, %v2136
        %v2138 = vadd.f32 %v2137, 0.0036580483
        %v2139 = vmul.f32 %v2134, %v2138
        %v2140 = vadd.f32 %v2139, 0.05243302
        %v2141 = vmul.f32 %v2134, %v2140
        %v2142 = vadd.f32 %v2141, 0.18741608
        %v2143 = vmul.f32 %v2134, %v2142
        %v2144 = vadd.f32 %v2143, 1.1283791
        %v2145 = vmul.f32 %v2117, %v2144
        %v2146 = vmul.f32 %v2134, 3.8918573e-05
        %v2147 = vadd.f32 %v2146, 0.001143296
        %v2148 = vmul.f32 %v2134, %v2147
        %v2149 = vadd.f32 %v2148, 0.014752088
        %v2150 = vmul.f32 %v2134, %v2149
        %v2151 = vadd.f32 %v2150, 0.112945676
        %v2152 = vmul.f32 %v2134, %v2151
        %v2153 = vadd.f32 %v2152, 0.4994258
        %v2154 = vmul.f32 %v2134, %v2153
        %v2155 = vadd.f32 %v2154, 1.0
        %v2156 = vrcp.pop %v2155
        %v2157 = vmul.f32 %v2155, %v2156
        %v2158 = vsub.f32 1.0, %v2157
        %v2159 = vmul.f32 %v2156, %v2158
        %v2160 = vadd.f32 %v2156, %v2159
        %vm2161 = vweird.f32 %v2155
        %vm2162 = vweird.f32 %v2156
        %vm2163 = vmor %vm2161, %vm2162
        %v2164 = vsel %vm2163, %v2156, %v2160
        %v2165 = vand.u32 2147483647, %v2155
        %vm2166 = vcmp.eq.f32.partialorder %v2165, 8.507059e+37
        %v2167 = vand.u32 %v2155, 2147483648
        %v2168 = vor.u32 1.1754944e-38, %v2167
        %v2169 = vsel %vm2166, %v2168, %v2164
        %v2170 = vmul.f32 %v2145, %v2169
        %v2171 = vmin.f32 %v2170, 1.0
        %v2172 = vmax.f32 %v2171, -1.0
        %v2173 = vmul.f32 %v2118, %v2118
        %v2174 = vmin.f32 16.0, %v2173
        %v2175 = vmul.f32 %v2174, 2.1237322e-06
        %v2176 = vadd.f32 %v2175, 0.00028619796
        %v2177 = vmul.f32 %v2174, %v2176
        %v2178 = vadd.f32 %v2177, 0.0036580483
        %v2179 = vmul.f32 %v2174, %v2178
        %v2180 = vadd.f32 %v2179, 0.05243302
        %v2181 = vmul.f32 %v2174, %v2180
        %v2182 = vadd.f32 %v2181, 0.18741608
        %v2183 = vmul.f32 %v2174, %v2182
        %v2184 = vadd.f32 %v2183, 1.1283791
        %v2185 = vmul.f32 %v2118, %v2184
        %v2186 = vmul.f32 %v2174, 3.8918573e-05
        %v2187 = vadd.f32 %v2186, 0.001143296
        %v2188 = vmul.f32 %v2174, %v2187
        %v2189 = vadd.f32 %v2188, 0.014752088
        %v2190 = vmul.f32 %v2174, %v2189
        %v2191 = vadd.f32 %v2190, 0.112945676
        %v2192 = vmul.f32 %v2174, %v2191
        %v2193 = vadd.f32 %v2192, 0.4994258
        %v2194 = vmul.f32 %v2174, %v2193
        %v2195 = vadd.f32 %v2194, 1.0
        %v2196 = vrcp.pop %v2195
        %v2197 = vmul.f32 %v2195, %v2196
        %v2198 = vsub.f32 1.0, %v2197
        %v2199 = vmul.f32 %v2196, %v2198
        %v2200 = vadd.f32 %v2196, %v2199
        %vm2201 = vweird.f32 %v2195
        %vm2202 = vweird.f32 %v2196
        %vm2203 = vmor %vm2201, %vm2202
        %v2204 = vsel %vm2203, %v2196, %v2200
        %v2205 = vand.u32 2147483647, %v2195
        %vm2206 = vcmp.eq.f32.partialorder %v2205, 8.507059e+37
        %v2207 = vand.u32 %v2195, 2147483648
        %v2208 = vor.u32 1.1754944e-38, %v2207
        %v2209 = vsel %vm2206, %v2208, %v2204
        %v2210 = vmul.f32 %v2185, %v2209
        %v2211 = vmin.f32 %v2210, 1.0
        %v2212 = vmax.f32 %v2211, -1.0
        %v2213 = vmul.f32 %v2119, %v2119
        %v2214 = vmin.f32 16.0, %v2213
        %v2215 = vmul.f32 %v2214, 2.1237322e-06
        %v2216 = vadd.f32 %v2215, 0.00028619796
        %v2217 = vmul.f32 %v2214, %v2216
        %v2218 = vadd.f32 %v2217, 0.0036580483
        %v2219 = vmul.f32 %v2214, %v2218
        %v2220 = vadd.f32 %v2219, 0.05243302
        %v2221 = vmul.f32 %v2214, %v2220
        %v2222 = vadd.f32 %v2221, 0.18741608
        %v2223 = vmul.f32 %v2214, %v2222
        %v2224 = vadd.f32 %v2223, 1.1283791
        %v2225 = vmul.f32 %v2119, %v2224
        %v2226 = vmul.f32 %v2214, 3.8918573e-05
        %v2227 = vadd.f32 %v2226, 0.001143296
        %v2228 = vmul.f32 %v2214, %v2227
        %v2229 = vadd.f32 %v2228, 0.014752088
        %v2230 = vmul.f32 %v2214, %v2229
        %v2231 = vadd.f32 %v2230, 0.112945676
        %v2232 = vmul.f32 %v2214, %v2231
        %v2233 = vadd.f32 %v2232, 0.4994258
        %v2234 = vmul.f32 %v2214, %v2233
        %v2235 = vadd.f32 %v2234, 1.0
        %v2236 = vrcp.pop %v2235
        %v2237 = vmul.f32 %v2235, %v2236
        %v2238 = vsub.f32 1.0, %v2237
        %v2239 = vmul.f32 %v2236, %v2238
        %v2240 = vadd.f32 %v2236, %v2239
        %vm2241 = vweird.f32 %v2235
        %vm2242 = vweird.f32 %v2236
        %vm2243 = vmor %vm2241, %vm2242
        %v2244 = vsel %vm2243, %v2236, %v2240
        %v2245 = vand.u32 2147483647, %v2235
        %vm2246 = vcmp.eq.f32.partialorder %v2245, 8.507059e+37
        %v2247 = vand.u32 %v2235, 2147483648
        %v2248 = vor.u32 1.1754944e-38, %v2247
        %v2249 = vsel %vm2246, %v2248, %v2244
        %v2250 = vmul.f32 %v2225, %v2249
        %v2251 = vmin.f32 %v2250, 1.0
        %v2252 = vmax.f32 %v2251, -1.0
        %v2253 = vmul.f32 %v2120, %v2120
        %v2254 = vmin.f32 16.0, %v2253
        %v2255 = vmul.f32 %v2254, 2.1237322e-06
        %v2256 = vadd.f32 %v2255, 0.00028619796
        %v2257 = vmul.f32 %v2254, %v2256
        %v2258 = vadd.f32 %v2257, 0.0036580483
        %v2259 = vmul.f32 %v2254, %v2258
        %v2260 = vadd.f32 %v2259, 0.05243302
        %v2261 = vmul.f32 %v2254, %v2260
        %v2262 = vadd.f32 %v2261, 0.18741608
        %v2263 = vmul.f32 %v2254, %v2262
        %v2264 = vadd.f32 %v2263, 1.1283791
        %v2265 = vmul.f32 %v2120, %v2264
        %v2266 = vmul.f32 %v2254, 3.8918573e-05
        %v2267 = vadd.f32 %v2266, 0.001143296
        %v2268 = vmul.f32 %v2254, %v2267
        %v2269 = vadd.f32 %v2268, 0.014752088
        %v2270 = vmul.f32 %v2254, %v2269
        %v2271 = vadd.f32 %v2270, 0.112945676
        %v2272 = vmul.f32 %v2254, %v2271
        %v2273 = vadd.f32 %v2272, 0.4994258
        %v2274 = vmul.f32 %v2254, %v2273
        %v2275 = vadd.f32 %v2274, 1.0
        %v2276 = vrcp.pop %v2275
        %v2277 = vmul.f32 %v2275, %v2276
        %v2278 = vsub.f32 1.0, %v2277
        %v2279 = vmul.f32 %v2276, %v2278
        %v2280 = vadd.f32 %v2276, %v2279
        %vm2281 = vweird.f32 %v2275
        %vm2282 = vweird.f32 %v2276
        %vm2283 = vmor %vm2281, %vm2282
        %v2284 = vsel %vm2283, %v2276, %v2280
        %v2285 = vand.u32 2147483647, %v2275
        %vm2286 = vcmp.eq.f32.partialorder %v2285, 8.507059e+37
        %v2287 = vand.u32 %v2275, 2147483648
        %v2288 = vor.u32 1.1754944e-38, %v2287
        %v2289 = vsel %vm2286, %v2288, %v2284
        %v2290 = vmul.f32 %v2265, %v2289
        %v2291 = vmin.f32 %v2290, 1.0
        %v2292 = vmax.f32 %v2291, -1.0
        %v2293 = vmul.f32 %v2121, %v2121
        %v2294 = vmin.f32 16.0, %v2293
        %v2295 = vmul.f32 %v2294, 2.1237322e-06
        %v2296 = vadd.f32 %v2295, 0.00028619796
        %v2297 = vmul.f32 %v2294, %v2296
        %v2298 = vadd.f32 %v2297, 0.0036580483
        %v2299 = vmul.f32 %v2294, %v2298
        %v2300 = vadd.f32 %v2299, 0.05243302
        %v2301 = vmul.f32 %v2294, %v2300
        %v2302 = vadd.f32 %v2301, 0.18741608
        %v2303 = vmul.f32 %v2294, %v2302
        %v2304 = vadd.f32 %v2303, 1.1283791
        %v2305 = vmul.f32 %v2121, %v2304
        %v2306 = vmul.f32 %v2294, 3.8918573e-05
        %v2307 = vadd.f32 %v2306, 0.001143296
        %v2308 = vmul.f32 %v2294, %v2307
        %v2309 = vadd.f32 %v2308, 0.014752088
        %v2310 = vmul.f32 %v2294, %v2309
        %v2311 = vadd.f32 %v2310, 0.112945676
        %v2312 = vmul.f32 %v2294, %v2311
        %v2313 = vadd.f32 %v2312, 0.4994258
        %v2314 = vmul.f32 %v2294, %v2313
        %v2315 = vadd.f32 %v2314, 1.0
        %v2316 = vrcp.pop %v2315
        %v2317 = vmul.f32 %v2315, %v2316
        %v2318 = vsub.f32 1.0, %v2317
        %v2319 = vmul.f32 %v2316, %v2318
        %v2320 = vadd.f32 %v2316, %v2319
        %vm2321 = vweird.f32 %v2315
        %vm2322 = vweird.f32 %v2316
        %vm2323 = vmor %vm2321, %vm2322
        %v2324 = vsel %vm2323, %v2316, %v2320
        %v2325 = vand.u32 2147483647, %v2315
        %vm2326 = vcmp.eq.f32.partialorder %v2325, 8.507059e+37
        %v2327 = vand.u32 %v2315, 2147483648
        %v2328 = vor.u32 1.1754944e-38, %v2327
        %v2329 = vsel %vm2326, %v2328, %v2324
        %v2330 = vmul.f32 %v2305, %v2329
        %v2331 = vmin.f32 %v2330, 1.0
        %v2332 = vmax.f32 %v2331, -1.0
        %v2333 = vmul.f32 %v2122, %v2122
        %v2334 = vmin.f32 16.0, %v2333
        %v2335 = vmul.f32 %v2334, 2.1237322e-06
        %v2336 = vadd.f32 %v2335, 0.00028619796
        %v2337 = vmul.f32 %v2334, %v2336
        %v2338 = vadd.f32 %v2337, 0.0036580483
        %v2339 = vmul.f32 %v2334, %v2338
        %v2340 = vadd.f32 %v2339, 0.05243302
        %v2341 = vmul.f32 %v2334, %v2340
        %v2342 = vadd.f32 %v2341, 0.18741608
        %v2343 = vmul.f32 %v2334, %v2342
        %v2344 = vadd.f32 %v2343, 1.1283791
        %v2345 = vmul.f32 %v2122, %v2344
        %v2346 = vmul.f32 %v2334, 3.8918573e-05
        %v2347 = vadd.f32 %v2346, 0.001143296
        %v2348 = vmul.f32 %v2334, %v2347
        %v2349 = vadd.f32 %v2348, 0.014752088
        %v2350 = vmul.f32 %v2334, %v2349
        %v2351 = vadd.f32 %v2350, 0.112945676
        %v2352 = vmul.f32 %v2334, %v2351
        %v2353 = vadd.f32 %v2352, 0.4994258
        %v2354 = vmul.f32 %v2334, %v2353
        %v2355 = vadd.f32 %v2354, 1.0
        %v2356 = vrcp.pop %v2355
        %v2357 = vmul.f32 %v2355, %v2356
        %v2358 = vsub.f32 1.0, %v2357
        %v2359 = vmul.f32 %v2356, %v2358
        %v2360 = vadd.f32 %v2356, %v2359
        %vm2361 = vweird.f32 %v2355
        %vm2362 = vweird.f32 %v2356
        %vm2363 = vmor %vm2361, %vm2362
        %v2364 = vsel %vm2363, %v2356, %v2360
        %v2365 = vand.u32 2147483647, %v2355
        %vm2366 = vcmp.eq.f32.partialorder %v2365, 8.507059e+37
        %v2367 = vand.u32 %v2355, 2147483648
        %v2368 = vor.u32 1.1754944e-38, %v2367
        %v2369 = vsel %vm2366, %v2368, %v2364
        %v2370 = vmul.f32 %v2345, %v2369
        %v2371 = vmin.f32 %v2370, 1.0
        %v2372 = vmax.f32 %v2371, -1.0
        %v2373 = vmul.f32 %v2123, %v2123
        %v2374 = vmin.f32 16.0, %v2373
        %v2375 = vmul.f32 %v2374, 2.1237322e-06
        %v2376 = vadd.f32 %v2375, 0.00028619796
        %v2377 = vmul.f32 %v2374, %v2376
        %v2378 = vadd.f32 %v2377, 0.0036580483
        %v2379 = vmul.f32 %v2374, %v2378
        %v2380 = vadd.f32 %v2379, 0.05243302
        %v2381 = vmul.f32 %v2374, %v2380
        %v2382 = vadd.f32 %v2381, 0.18741608
        %v2383 = vmul.f32 %v2374, %v2382
        %v2384 = vadd.f32 %v2383, 1.1283791
        %v2385 = vmul.f32 %v2123, %v2384
        %v2386 = vmul.f32 %v2374, 3.8918573e-05
        %v2387 = vadd.f32 %v2386, 0.001143296
        %v2388 = vmul.f32 %v2374, %v2387
        %v2389 = vadd.f32 %v2388, 0.014752088
        %v2390 = vmul.f32 %v2374, %v2389
        %v2391 = vadd.f32 %v2390, 0.112945676
        %v2392 = vmul.f32 %v2374, %v2391
        %v2393 = vadd.f32 %v2392, 0.4994258
        %v2394 = vmul.f32 %v2374, %v2393
        %v2395 = vadd.f32 %v2394, 1.0
        %v2396 = vrcp.pop %v2395
        %v2397 = vmul.f32 %v2395, %v2396
        %v2398 = vsub.f32 1.0, %v2397
        %v2399 = vmul.f32 %v2396, %v2398
        %v2400 = vadd.f32 %v2396, %v2399
        %vm2401 = vweird.f32 %v2395
        %vm2402 = vweird.f32 %v2396
        %vm2403 = vmor %vm2401, %vm2402
        %v2404 = vsel %vm2403, %v2396, %v2400
        %v2405 = vand.u32 2147483647, %v2395
        %vm2406 = vcmp.eq.f32.partialorder %v2405, 8.507059e+37
        %v2407 = vand.u32 %v2395, 2147483648
        %v2408 = vor.u32 1.1754944e-38, %v2407
        %v2409 = vsel %vm2406, %v2408, %v2404
        %v2410 = vmul.f32 %v2385, %v2409
        %v2411 = vmin.f32 %v2410, 1.0
        %v2412 = vmax.f32 %v2411, -1.0
        %v2413 = vmul.f32 %v2124, %v2124
        %v2414 = vmin.f32 16.0, %v2413
        %v2415 = vmul.f32 %v2414, 2.1237322e-06
        %v2416 = vadd.f32 %v2415, 0.00028619796
        %v2417 = vmul.f32 %v2414, %v2416
        %v2418 = vadd.f32 %v2417, 0.0036580483
        %v2419 = vmul.f32 %v2414, %v2418
        %v2420 = vadd.f32 %v2419, 0.05243302
        %v2421 = vmul.f32 %v2414, %v2420
        %v2422 = vadd.f32 %v2421, 0.18741608
        %v2423 = vmul.f32 %v2414, %v2422
        %v2424 = vadd.f32 %v2423, 1.1283791
        %v2425 = vmul.f32 %v2124, %v2424
        %v2426 = vmul.f32 %v2414, 3.8918573e-05
        %v2427 = vadd.f32 %v2426, 0.001143296
        %v2428 = vmul.f32 %v2414, %v2427
        %v2429 = vadd.f32 %v2428, 0.014752088
        %v2430 = vmul.f32 %v2414, %v2429
        %v2431 = vadd.f32 %v2430, 0.112945676
        %v2432 = vmul.f32 %v2414, %v2431
        %v2433 = vadd.f32 %v2432, 0.4994258
        %v2434 = vmul.f32 %v2414, %v2433
        %v2435 = vadd.f32 %v2434, 1.0
        %v2436 = vrcp.pop %v2435
        %v2437 = vmul.f32 %v2435, %v2436
        %v2438 = vsub.f32 1.0, %v2437
        %v2439 = vmul.f32 %v2436, %v2438
        %v2440 = vadd.f32 %v2436, %v2439
        %vm2441 = vweird.f32 %v2435
        %vm2442 = vweird.f32 %v2436
        %vm2443 = vmor %vm2441, %vm2442
        %v2444 = vsel %vm2443, %v2436, %v2440
        %v2445 = vand.u32 2147483647, %v2435
        %vm2446 = vcmp.eq.f32.partialorder %v2445, 8.507059e+37
        %v2447 = vand.u32 %v2435, 2147483648
        %v2448 = vor.u32 1.1754944e-38, %v2447
        %v2449 = vsel %vm2446, %v2448, %v2444
        %v2450 = vmul.f32 %v2425, %v2449
        %v2451 = vmin.f32 %v2450, 1.0
        %v2452 = vmax.f32 %v2451, -1.0
        %v2453 = vmul.f32 %v2125, %v2125
        %v2454 = vmin.f32 16.0, %v2453
        %v2455 = vmul.f32 %v2454, 2.1237322e-06
        %v2456 = vadd.f32 %v2455, 0.00028619796
        %v2457 = vmul.f32 %v2454, %v2456
        %v2458 = vadd.f32 %v2457, 0.0036580483
        %v2459 = vmul.f32 %v2454, %v2458
        %v2460 = vadd.f32 %v2459, 0.05243302
        %v2461 = vmul.f32 %v2454, %v2460
        %v2462 = vadd.f32 %v2461, 0.18741608
        %v2463 = vmul.f32 %v2454, %v2462
        %v2464 = vadd.f32 %v2463, 1.1283791
        %v2465 = vmul.f32 %v2125, %v2464
        %v2466 = vmul.f32 %v2454, 3.8918573e-05
        %v2467 = vadd.f32 %v2466, 0.001143296
        %v2468 = vmul.f32 %v2454, %v2467
        %v2469 = vadd.f32 %v2468, 0.014752088
        %v2470 = vmul.f32 %v2454, %v2469
        %v2471 = vadd.f32 %v2470, 0.112945676
        %v2472 = vmul.f32 %v2454, %v2471
        %v2473 = vadd.f32 %v2472, 0.4994258
        %v2474 = vmul.f32 %v2454, %v2473
        %v2475 = vadd.f32 %v2474, 1.0
        %v2476 = vrcp.pop %v2475
        %v2477 = vmul.f32 %v2475, %v2476
        %v2478 = vsub.f32 1.0, %v2477
        %v2479 = vmul.f32 %v2476, %v2478
        %v2480 = vadd.f32 %v2476, %v2479
        %vm2481 = vweird.f32 %v2475
        %vm2482 = vweird.f32 %v2476
        %vm2483 = vmor %vm2481, %vm2482
        %v2484 = vsel %vm2483, %v2476, %v2480
        %v2485 = vand.u32 2147483647, %v2475
        %vm2486 = vcmp.eq.f32.partialorder %v2485, 8.507059e+37
        %v2487 = vand.u32 %v2475, 2147483648
        %v2488 = vor.u32 1.1754944e-38, %v2487
        %v2489 = vsel %vm2486, %v2488, %v2484
        %v2490 = vmul.f32 %v2465, %v2489
        %v2491 = vmin.f32 %v2490, 1.0
        %v2492 = vmax.f32 %v2491, -1.0
        %v2493 = vmul.f32 %v2126, %v2126
        %v2494 = vmin.f32 16.0, %v2493
        %v2495 = vmul.f32 %v2494, 2.1237322e-06
        %v2496 = vadd.f32 %v2495, 0.00028619796
        %v2497 = vmul.f32 %v2494, %v2496
        %v2498 = vadd.f32 %v2497, 0.0036580483
        %v2499 = vmul.f32 %v2494, %v2498
        %v2500 = vadd.f32 %v2499, 0.05243302
        %v2501 = vmul.f32 %v2494, %v2500
        %v2502 = vadd.f32 %v2501, 0.18741608
        %v2503 = vmul.f32 %v2494, %v2502
        %v2504 = vadd.f32 %v2503, 1.1283791
        %v2505 = vmul.f32 %v2126, %v2504
        %v2506 = vmul.f32 %v2494, 3.8918573e-05
        %v2507 = vadd.f32 %v2506, 0.001143296
        %v2508 = vmul.f32 %v2494, %v2507
        %v2509 = vadd.f32 %v2508, 0.014752088
        %v2510 = vmul.f32 %v2494, %v2509
        %v2511 = vadd.f32 %v2510, 0.112945676
        %v2512 = vmul.f32 %v2494, %v2511
        %v2513 = vadd.f32 %v2512, 0.4994258
        %v2514 = vmul.f32 %v2494, %v2513
        %v2515 = vadd.f32 %v2514, 1.0
        %v2516 = vrcp.pop %v2515
        %v2517 = vmul.f32 %v2515, %v2516
        %v2518 = vsub.f32 1.0, %v2517
        %v2519 = vmul.f32 %v2516, %v2518
        %v2520 = vadd.f32 %v2516, %v2519
        %vm2521 = vweird.f32 %v2515
        %vm2522 = vweird.f32 %v2516
        %vm2523 = vmor %vm2521, %vm2522
        %v2524 = vsel %vm2523, %v2516, %v2520
        %v2525 = vand.u32 2147483647, %v2515
        %vm2526 = vcmp.eq.f32.partialorder %v2525, 8.507059e+37
        %v2527 = vand.u32 %v2515, 2147483648
        %v2528 = vor.u32 1.1754944e-38, %v2527
        %v2529 = vsel %vm2526, %v2528, %v2524
        %v2530 = vmul.f32 %v2505, %v2529
        %v2531 = vmin.f32 %v2530, 1.0
        %v2532 = vmax.f32 %v2531, -1.0
        %v2533 = vmul.f32 %v2127, %v2127
        %v2534 = vmin.f32 16.0, %v2533
        %v2535 = vmul.f32 %v2534, 2.1237322e-06
        %v2536 = vadd.f32 %v2535, 0.00028619796
        %v2537 = vmul.f32 %v2534, %v2536
        %v2538 = vadd.f32 %v2537, 0.0036580483
        %v2539 = vmul.f32 %v2534, %v2538
        %v2540 = vadd.f32 %v2539, 0.05243302
        %v2541 = vmul.f32 %v2534, %v2540
        %v2542 = vadd.f32 %v2541, 0.18741608
        %v2543 = vmul.f32 %v2534, %v2542
        %v2544 = vadd.f32 %v2543, 1.1283791
        %v2545 = vmul.f32 %v2127, %v2544
        %v2546 = vmul.f32 %v2534, 3.8918573e-05
        %v2547 = vadd.f32 %v2546, 0.001143296
        %v2548 = vmul.f32 %v2534, %v2547
        %v2549 = vadd.f32 %v2548, 0.014752088
        %v2550 = vmul.f32 %v2534, %v2549
        %v2551 = vadd.f32 %v2550, 0.112945676
        %v2552 = vmul.f32 %v2534, %v2551
        %v2553 = vadd.f32 %v2552, 0.4994258
        %v2554 = vmul.f32 %v2534, %v2553
        %v2555 = vadd.f32 %v2554, 1.0
        %v2556 = vrcp.pop %v2555
        %v2557 = vmul.f32 %v2555, %v2556
        %v2558 = vsub.f32 1.0, %v2557
        %v2559 = vmul.f32 %v2556, %v2558
        %v2560 = vadd.f32 %v2556, %v2559
        %vm2561 = vweird.f32 %v2555
        %vm2562 = vweird.f32 %v2556
        %vm2563 = vmor %vm2561, %vm2562
        %v2564 = vsel %vm2563, %v2556, %v2560
        %v2565 = vand.u32 2147483647, %v2555
        %vm2566 = vcmp.eq.f32.partialorder %v2565, 8.507059e+37
        %v2567 = vand.u32 %v2555, 2147483648
        %v2568 = vor.u32 1.1754944e-38, %v2567
        %v2569 = vsel %vm2566, %v2568, %v2564
        %v2570 = vmul.f32 %v2545, %v2569
        %v2571 = vmin.f32 %v2570, 1.0
        %v2572 = vmax.f32 %v2571, -1.0
        %v2573 = vmul.f32 %v2128, %v2128
        %v2574 = vmin.f32 16.0, %v2573
        %v2575 = vmul.f32 %v2574, 2.1237322e-06
        %v2576 = vadd.f32 %v2575, 0.00028619796
        %v2577 = vmul.f32 %v2574, %v2576
        %v2578 = vadd.f32 %v2577, 0.0036580483
        %v2579 = vmul.f32 %v2574, %v2578
        %v2580 = vadd.f32 %v2579, 0.05243302
        %v2581 = vmul.f32 %v2574, %v2580
        %v2582 = vadd.f32 %v2581, 0.18741608
        %v2583 = vmul.f32 %v2574, %v2582
        %v2584 = vadd.f32 %v2583, 1.1283791
        %v2585 = vmul.f32 %v2128, %v2584
        %v2586 = vmul.f32 %v2574, 3.8918573e-05
        %v2587 = vadd.f32 %v2586, 0.001143296
        %v2588 = vmul.f32 %v2574, %v2587
        %v2589 = vadd.f32 %v2588, 0.014752088
        %v2590 = vmul.f32 %v2574, %v2589
        %v2591 = vadd.f32 %v2590, 0.112945676
        %v2592 = vmul.f32 %v2574, %v2591
        %v2593 = vadd.f32 %v2592, 0.4994258
        %v2594 = vmul.f32 %v2574, %v2593
        %v2595 = vadd.f32 %v2594, 1.0
        %v2596 = vrcp.pop %v2595
        %v2597 = vmul.f32 %v2595, %v2596
        %v2598 = vsub.f32 1.0, %v2597
        %v2599 = vmul.f32 %v2596, %v2598
        %v2600 = vadd.f32 %v2596, %v2599
        %vm2601 = vweird.f32 %v2595
        %vm2602 = vweird.f32 %v2596
        %vm2603 = vmor %vm2601, %vm2602
        %v2604 = vsel %vm2603, %v2596, %v2600
        %v2605 = vand.u32 2147483647, %v2595
        %vm2606 = vcmp.eq.f32.partialorder %v2605, 8.507059e+37
        %v2607 = vand.u32 %v2595, 2147483648
        %v2608 = vor.u32 1.1754944e-38, %v2607
        %v2609 = vsel %vm2606, %v2608, %v2604
        %v2610 = vmul.f32 %v2585, %v2609
        %v2611 = vmin.f32 %v2610, 1.0
        %v2612 = vmax.f32 %v2611, -1.0
        %v2613 = vmul.f32 %v2129, %v2129
        %v2614 = vmin.f32 16.0, %v2613
        %v2615 = vmul.f32 %v2614, 2.1237322e-06
        %v2616 = vadd.f32 %v2615, 0.00028619796
        %v2617 = vmul.f32 %v2614, %v2616
        %v2618 = vadd.f32 %v2617, 0.0036580483
        %v2619 = vmul.f32 %v2614, %v2618
        %v2620 = vadd.f32 %v2619, 0.05243302
        %v2621 = vmul.f32 %v2614, %v2620
        %v2622 = vadd.f32 %v2621, 0.18741608
        %v2623 = vmul.f32 %v2614, %v2622
        %v2624 = vadd.f32 %v2623, 1.1283791
        %v2625 = vmul.f32 %v2129, %v2624
        %v2626 = vmul.f32 %v2614, 3.8918573e-05
        %v2627 = vadd.f32 %v2626, 0.001143296
        %v2628 = vmul.f32 %v2614, %v2627
        %v2629 = vadd.f32 %v2628, 0.014752088
        %v2630 = vmul.f32 %v2614, %v2629
        %v2631 = vadd.f32 %v2630, 0.112945676
        %v2632 = vmul.f32 %v2614, %v2631
        %v2633 = vadd.f32 %v2632, 0.4994258
        %v2634 = vmul.f32 %v2614, %v2633
        %v2635 = vadd.f32 %v2634, 1.0
        %v2636 = vrcp.pop %v2635
        %v2637 = vmul.f32 %v2635, %v2636
        %v2638 = vsub.f32 1.0, %v2637
        %v2639 = vmul.f32 %v2636, %v2638
        %v2640 = vadd.f32 %v2636, %v2639
        %vm2641 = vweird.f32 %v2635
        %vm2642 = vweird.f32 %v2636
        %vm2643 = vmor %vm2641, %vm2642
        %v2644 = vsel %vm2643, %v2636, %v2640
        %v2645 = vand.u32 2147483647, %v2635
        %vm2646 = vcmp.eq.f32.partialorder %v2645, 8.507059e+37
        %v2647 = vand.u32 %v2635, 2147483648
        %v2648 = vor.u32 1.1754944e-38, %v2647
        %v2649 = vsel %vm2646, %v2648, %v2644
        %v2650 = vmul.f32 %v2625, %v2649
        %v2651 = vmin.f32 %v2650, 1.0
        %v2652 = vmax.f32 %v2651, -1.0
        %v2653 = vmul.f32 %v2130, %v2130
        %v2654 = vmin.f32 16.0, %v2653
        %v2655 = vmul.f32 %v2654, 2.1237322e-06
        %v2656 = vadd.f32 %v2655, 0.00028619796
        %v2657 = vmul.f32 %v2654, %v2656
        %v2658 = vadd.f32 %v2657, 0.0036580483
        %v2659 = vmul.f32 %v2654, %v2658
        %v2660 = vadd.f32 %v2659, 0.05243302
        %v2661 = vmul.f32 %v2654, %v2660
        %v2662 = vadd.f32 %v2661, 0.18741608
        %v2663 = vmul.f32 %v2654, %v2662
        %v2664 = vadd.f32 %v2663, 1.1283791
        %v2665 = vmul.f32 %v2130, %v2664
        %v2666 = vmul.f32 %v2654, 3.8918573e-05
        %v2667 = vadd.f32 %v2666, 0.001143296
        %v2668 = vmul.f32 %v2654, %v2667
        %v2669 = vadd.f32 %v2668, 0.014752088
        %v2670 = vmul.f32 %v2654, %v2669
        %v2671 = vadd.f32 %v2670, 0.112945676
        %v2672 = vmul.f32 %v2654, %v2671
        %v2673 = vadd.f32 %v2672, 0.4994258
        %v2674 = vmul.f32 %v2654, %v2673
        %v2675 = vadd.f32 %v2674, 1.0
        %v2676 = vrcp.pop %v2675
        %v2677 = vmul.f32 %v2675, %v2676
        %v2678 = vsub.f32 1.0, %v2677
        %v2679 = vmul.f32 %v2676, %v2678
        %v2680 = vadd.f32 %v2676, %v2679
        %vm2681 = vweird.f32 %v2675
        %vm2682 = vweird.f32 %v2676
        %vm2683 = vmor %vm2681, %vm2682
        %v2684 = vsel %vm2683, %v2676, %v2680
        %v2685 = vand.u32 2147483647, %v2675
        %vm2686 = vcmp.eq.f32.partialorder %v2685, 8.507059e+37
        %v2687 = vand.u32 %v2675, 2147483648
        %v2688 = vor.u32 1.1754944e-38, %v2687
        %v2689 = vsel %vm2686, %v2688, %v2684
        %v2690 = vmul.f32 %v2665, %v2689
        %v2691 = vmin.f32 %v2690, 1.0
        %v2692 = vmax.f32 %v2691, -1.0
        %v2693 = vmul.f32 %v2131, %v2131
        %v2694 = vmin.f32 16.0, %v2693
        %v2695 = vmul.f32 %v2694, 2.1237322e-06
        %v2696 = vadd.f32 %v2695, 0.00028619796
        %v2697 = vmul.f32 %v2694, %v2696
        %v2698 = vadd.f32 %v2697, 0.0036580483
        %v2699 = vmul.f32 %v2694, %v2698
        %v2700 = vadd.f32 %v2699, 0.05243302
        %v2701 = vmul.f32 %v2694, %v2700
        %v2702 = vadd.f32 %v2701, 0.18741608
        %v2703 = vmul.f32 %v2694, %v2702
        %v2704 = vadd.f32 %v2703, 1.1283791
        %v2705 = vmul.f32 %v2131, %v2704
        %v2706 = vmul.f32 %v2694, 3.8918573e-05
        %v2707 = vadd.f32 %v2706, 0.001143296
        %v2708 = vmul.f32 %v2694, %v2707
        %v2709 = vadd.f32 %v2708, 0.014752088
        %v2710 = vmul.f32 %v2694, %v2709
        %v2711 = vadd.f32 %v2710, 0.112945676
        %v2712 = vmul.f32 %v2694, %v2711
        %v2713 = vadd.f32 %v2712, 0.4994258
        %v2714 = vmul.f32 %v2694, %v2713
        %v2715 = vadd.f32 %v2714, 1.0
        %v2716 = vrcp.pop %v2715
        %v2717 = vmul.f32 %v2715, %v2716
        %v2718 = vsub.f32 1.0, %v2717
        %v2719 = vmul.f32 %v2716, %v2718
        %v2720 = vadd.f32 %v2716, %v2719
        %vm2721 = vweird.f32 %v2715
        %vm2722 = vweird.f32 %v2716
        %vm2723 = vmor %vm2721, %vm2722
        %v2724 = vsel %vm2723, %v2716, %v2720
        %v2725 = vand.u32 2147483647, %v2715
        %vm2726 = vcmp.eq.f32.partialorder %v2725, 8.507059e+37
        %v2727 = vand.u32 %v2715, 2147483648
        %v2728 = vor.u32 1.1754944e-38, %v2727
        %v2729 = vsel %vm2726, %v2728, %v2724
        %v2730 = vmul.f32 %v2705, %v2729
        %v2731 = vmin.f32 %v2730, 1.0
        %v2732 = vmax.f32 %v2731, -1.0
        %v2733 = vmul.f32 %v2132, %v2132
        %v2734 = vmin.f32 16.0, %v2733
        %v2735 = vmul.f32 %v2734, 2.1237322e-06
        %v2736 = vadd.f32 %v2735, 0.00028619796
        %v2737 = vmul.f32 %v2734, %v2736
        %v2738 = vadd.f32 %v2737, 0.0036580483
        %v2739 = vmul.f32 %v2734, %v2738
        %v2740 = vadd.f32 %v2739, 0.05243302
        %v2741 = vmul.f32 %v2734, %v2740
        %v2742 = vadd.f32 %v2741, 0.18741608
        %v2743 = vmul.f32 %v2734, %v2742
        %v2744 = vadd.f32 %v2743, 1.1283791
        %v2745 = vmul.f32 %v2132, %v2744
        %v2746 = vmul.f32 %v2734, 3.8918573e-05
        %v2747 = vadd.f32 %v2746, 0.001143296
        %v2748 = vmul.f32 %v2734, %v2747
        %v2749 = vadd.f32 %v2748, 0.014752088
        %v2750 = vmul.f32 %v2734, %v2749
        %v2751 = vadd.f32 %v2750, 0.112945676
        %v2752 = vmul.f32 %v2734, %v2751
        %v2753 = vadd.f32 %v2752, 0.4994258
        %v2754 = vmul.f32 %v2734, %v2753
        %v2755 = vadd.f32 %v2754, 1.0
        %v2756 = vrcp.pop %v2755
        %v2757 = vmul.f32 %v2755, %v2756
        %v2758 = vsub.f32 1.0, %v2757
        %v2759 = vmul.f32 %v2756, %v2758
        %v2760 = vadd.f32 %v2756, %v2759
        %vm2761 = vweird.f32 %v2755
        %vm2762 = vweird.f32 %v2756
        %vm2763 = vmor %vm2761, %vm2762
        %v2764 = vsel %vm2763, %v2756, %v2760
        %v2765 = vand.u32 2147483647, %v2755
        %vm2766 = vcmp.eq.f32.partialorder %v2765, 8.507059e+37
        %v2767 = vand.u32 %v2755, 2147483648
        %v2768 = vor.u32 1.1754944e-38, %v2767
        %v2769 = vsel %vm2766, %v2768, %v2764
        %v2770 = vmul.f32 %v2745, %v2769
        %v2771 = vmin.f32 %v2770, 1.0
        %v2772 = vmax.f32 %v2771, -1.0
        %v2773 = vadd.f32 %v2172, 1.0
        %v2774 = vadd.f32 %v2212, 1.0
        %v2775 = vadd.f32 %v2252, 1.0
        %v2776 = vadd.f32 %v2292, 1.0
        %v2777 = vadd.f32 %v2332, 1.0
        %v2778 = vadd.f32 %v2372, 1.0
        %v2779 = vadd.f32 %v2412, 1.0
        %v2780 = vadd.f32 %v2452, 1.0
        %v2781 = vadd.f32 %v2492, 1.0
        %v2782 = vadd.f32 %v2532, 1.0
        %v2783 = vadd.f32 %v2572, 1.0
        %v2784 = vadd.f32 %v2612, 1.0
        %v2785 = vadd.f32 %v2652, 1.0
        %v2786 = vadd.f32 %v2692, 1.0
        %v2787 = vadd.f32 %v2732, 1.0
        %v2788 = vadd.f32 %v2772, 1.0
        %v2789 = vmul.f32 %v2101, %v2773
        %v2790 = vmul.f32 %v2102, %v2774
        %v2791 = vmul.f32 %v2103, %v2775
        %v2792 = vmul.f32 %v2104, %v2776
        %v2793 = vmul.f32 %v2105, %v2777
        %v2794 = vmul.f32 %v2106, %v2778
        %v2795 = vmul.f32 %v2107, %v2779
        %v2796 = vmul.f32 %v2108, %v2780
        %v2797 = vmul.f32 %v2109, %v2781
        %v2798 = vmul.f32 %v2110, %v2782
        %v2799 = vmul.f32 %v2111, %v2783
        %v2800 = vmul.f32 %v2112, %v2784
        %v2801 = vmul.f32 %v2113, %v2785
        %v2802 = vmul.f32 %v2114, %v2786
        %v2803 = vmul.f32 %v2115, %v2787
        %v2804 = vmul.f32 %v2116, %v2788
        %2806 = vset.pattern.permute.xlu0 0
        %2807 = vperm.xlu0 %2806, %v1816
        %v2808 = vpop.permute.xlu0 %2807
        %2810 = vmatpush.msra.mxu0 %v2804
        %2811 = vmatpush.msra.mxu0 %v2803
        %2812 = vmatpush.msra.mxu0 %v2802
        %2813 = vmatpush.msra.mxu0 %v2801
        %2814 = vmatpush.msra.mxu0 %v2800
        %2815 = vmatpush.msra.mxu0 %v2799
        %2816 = vmatpush.msra.mxu0 %v2798
        %2817 = vmatpush.msra.mxu0 %v2797
        %2818 = vmatpush.msra.mxu0 %v2796
        %2819 = vmatpush.msra.mxu0 %v2795
        %2820 = vmatpush.msra.mxu0 %v2794
        %2821 = vmatpush.msra.mxu0 %v2793
        %2822 = vmatpush.msra.mxu0 %v2792
        %2823 = vmatpush.msra.mxu0 %v2791
        %2824 = vmatpush.msra.mxu0 %v2790
        %2825 = vmatpush.msra.mxu0 %v2789
        %2826 = vmatmul.f32.gmra.mxu0 %v1814
        %v2827 = vpop.f32.mrf.mxu0
        %v2828 = vadd.f32 %v2808, %v2827
        %2829 = vdwg.mxu0
        %v2830 = vsel %vm603, %v2828, 0.0
        %v2831 = vadd.f32 %v1774, %v2830
        %2832 = vadd.xlane.f32.xlu0 %v2831
        %v2833 = vpop.xlane.xlu0 %2832
        %v2834 = vmul.f32 %v2833, 0.03125
        %v2835 = vsub.f32 %v2831, %v2834
        %v2836 = vmul.f32 %v2835, %v2835
        %v2837 = vsel %vm603, %v2836, 0.0
        %2838 = vadd.xlane.f32.xlu0 %v2837
        %v2839 = vpop.xlane.xlu0 %2838
        %v2840 = vmul.f32 %v2839, 0.03125
        %v2841 = vadd.f32 %v2840, 1e-05
        %v2842 = vrsqrt.pop %v2841
        %v2843 = vmul.f32 %v2842, %v2841
        %v2844 = vmul.f32 %v2843, %v2842
        %v2845 = vmul.f32 0.5, %v2844
        %v2846 = vsub.f32 1.5, %v2845
        %v2847 = vmul.f32 %v2842, %v2846
        %vm2848 = vweird.f32 %v2841
        %vm2849 = vweird.f32 %v2842
        %vm2850 = vmor %vm2848, %vm2849
        %v2851 = vsel %vm2850, %v2842, %v2847
        %v2852 = vmul.f32 %v2835, %v2851
        %v2854 = vperm.slane %v1818, 0
        %v2856 = vmul.f32 %v2852, %v2854
        %v2858 = vperm.slane %v1820, 0
        %v2860 = vadd.f32 %v2856, %v2858
        %v2862 = vperm.slane %v1839, 0
        %2864 = vmatpush.msra.mxu0 %v1837
        %2865 = vmatpush.msra.mxu0 %v1836
        %2866 = vmatpush.msra.mxu0 %v1835
        %2867 = vmatpush.msra.mxu0 %v1834
        %2868 = vmatpush.msra.mxu0 %v1833
        %2869 = vmatpush.msra.mxu0 %v1832
        %2870 = vmatpush.msra.mxu0 %v1831
        %2871 = vmatpush.msra.mxu0 %v1830
        %2872 = vmatpush.msra.mxu0 %v1829
        %2873 = vmatpush.msra.mxu0 %v1828
        %2874 = vmatpush.msra.mxu0 %v1827
        %2875 = vmatpush.msra.mxu0 %v1826
        %2876 = vmatpush.msra.mxu0 %v1825
        %2877 = vmatpush.msra.mxu0 %v1824
        %2878 = vmatpush.msra.mxu0 %v1823
        %2879 = vmatpush.msra.mxu0 %v1822
        %2880 = vmatmul.f32.gmra.mxu0 %v2860
        %v2881 = vpop.f32.mrf.mxu0
        %v2882 = vadd.f32 %v2862, %v2881
        %2883 = vdwg.mxu0
        %v2884 = vmul.f32 %v2882, 0.5
        %v2885 = vmul.f32 %v2882, 0.70710677
        %v2886 = vmul.f32 %v2885, %v2885
        %v2887 = vmin.f32 16.0, %v2886
        %v2888 = vmul.f32 %v2887, 2.1237322e-06
        %v2889 = vadd.f32 %v2888, 0.00028619796
        %v2890 = vmul.f32 %v2887, %v2889
        %v2891 = vadd.f32 %v2890, 0.0036580483
        %v2892 = vmul.f32 %v2887, %v2891
        %v2893 = vadd.f32 %v2892, 0.05243302
        %v2894 = vmul.f32 %v2887, %v2893
        %v2895 = vadd.f32 %v2894, 0.18741608
        %v2896 = vmul.f32 %v2887, %v2895
        %v2897 = vadd.f32 %v2896, 1.1283791
        %v2898 = vmul.f32 %v2885, %v2897
        %v2899 = vmul.f32 %v2887, 3.8918573e-05
        %v2900 = vadd.f32 %v2899, 0.001143296
        %v2901 = vmul.f32 %v2887, %v2900
        %v2902 = vadd.f32 %v2901, 0.014752088
        %v2903 = vmul.f32 %v2887, %v2902
        %v2904 = vadd.f32 %v2903, 0.112945676
        %v2905 = vmul.f32 %v2887, %v2904
        %v2906 = vadd.f32 %v2905, 0.4994258
        %v2907 = vmul.f32 %v2887, %v2906
        %v2908 = vadd.f32 %v2907, 1.0
        %v2909 = vrcp.pop %v2908
        %v2910 = vmul.f32 %v2908, %v2909
        %v2911 = vsub.f32 1.0, %v2910
        %v2912 = vmul.f32 %v2909, %v2911
        %v2913 = vadd.f32 %v2909, %v2912
        %vm2914 = vweird.f32 %v2908
        %vm2915 = vweird.f32 %v2909
        %vm2916 = vmor %vm2914, %vm2915
        %v2917 = vsel %vm2916, %v2909, %v2913
        %v2918 = vand.u32 2147483647, %v2908
        %vm2919 = vcmp.eq.f32.partialorder %v2918, 8.507059e+37
        %v2920 = vand.u32 %v2908, 2147483648
        %v2921 = vor.u32 1.1754944e-38, %v2920
        %v2922 = vsel %vm2919, %v2921, %v2917
        %v2923 = vmul.f32 %v2898, %v2922
        %v2924 = vmin.f32 %v2923, 1.0
        %v2925 = vmax.f32 %v2924, -1.0
        %v2926 = vadd.f32 %v2925, 1.0
        %v2927 = vmul.f32 %v2884, %v2926
        %v2929 = vperm.slane %v1858, 0
        %2931 = vmatpush.msra.mxu0 %v1856
        %2932 = vmatpush.msra.mxu0 %v1855
        %2933 = vmatpush.msra.mxu0 %v1854
        %2934 = vmatpush.msra.mxu0 %v1853
        %2935 = vmatpush.msra.mxu0 %v1852
        %2936 = vmatpush.msra.mxu0 %v1851
        %2937 = vmatpush.msra.mxu0 %v1850
        %2938 = vmatpush.msra.mxu0 %v1849
        %2939 = vmatpush.msra.mxu0 %v1848
        %2940 = vmatpush.msra.mxu0 %v1847
        %2941 = vmatpush.msra.mxu0 %v1846
        %2942 = vmatpush.msra.mxu0 %v1845
        %2943 = vmatpush.msra.mxu0 %v1844
        %2944 = vmatpush.msra.mxu0 %v1843
        %2945 = vmatpush.msra.mxu0 %v1842
        %2946 = vmatpush.msra.mxu0 %v1841
        %2947 = vmatmul.f32.gmra.mxu0 %v2927
        %v2948 = vpop.f32.mrf.mxu0
        %v2949 = vadd.f32 %v2929, %v2948
        %2950 = vdwg.mxu0
        %v2951 = vadd.f32 %v2831, %v2949
        %v2952 = vld [vmem:[%s14] sm:$0x1]
        %v2953 = vld [vmem:[%s15] sm:$0x1]
        %2954 = vadd.xlane.f32.xlu0 %v2951
        %v2955 = vpop.xlane.xlu0 %2954
        %v2956 = vmul.f32 %v2955, 0.03125
        %v2957 = vsub.f32 %v2951, %v2956
        %v2958 = vmul.f32 %v2957, %v2957
        %v2959 = vsel %vm603, %v2958, 0.0
        %2960 = vadd.xlane.f32.xlu0 %v2959
        %v2961 = vpop.xlane.xlu0 %2960
        %v2962 = vmul.f32 %v2961, 0.03125
        %v2963 = vadd.f32 %v2962, 1e-05
        %v2964 = vrsqrt.pop %v2963
        %v2965 = vmul.f32 %v2964, %v2963
        %v2966 = vmul.f32 %v2965, %v2964
        %v2967 = vmul.f32 0.5, %v2966
        %v2968 = vsub.f32 1.5, %v2967
        %v2969 = vmul.f32 %v2964, %v2968
        %vm2970 = vweird.f32 %v2963
        %vm2971 = vweird.f32 %v2964
        %vm2972 = vmor %vm2970, %vm2971
        %v2973 = vsel %vm2972, %v2964, %v2969
        %v2974 = vmul.f32 %v2957, %v2973
        %v2976 = vperm.slane %v2952, 0
        %v2978 = vmul.f32 %v2974, %v2976
        %v2980 = vperm.slane %v2953, 0
        %v2982 = vadd.f32 %v2978, %v2980
        %2983 = vst [vmem:[%s592] sm:$0xff] %v2982
        %s2984 = sand.u32 %s387, 1
        %s2985 = scalar_lea.sflag [#allocation4], %s2984
        %s2986 = sand.u32 %s387, 1
        %s2987 = smul.addr %s2986, 8
        %s2988 = scalar_lea.vmem [#allocation10], %s2987
        // Predicated region
        $region101: #{tpu_custom_call.1} parent=83 // pred_check
          %p2989 = pneg %p397
        $region102: #{tpu_custom_call.1} parent=83 // pred_check_branch
          %2991 = sbr.rel (%p2989) target = $region104
        $region103: #{tpu_custom_call.1} parent=83 // pred_region
          %2993 = vsyncadd %s2985, 0
          %s2994 = smul.addr %s33, 8
          %s2995 = scalar_lea.hbm %s16, %s2994
          %s2997 = sshll.u32 %s2988, 4
          %s2998 = int_to_ptr.vmem [resolvable:$true] %s2997
          %s2999 = sshll.u32 %s2995, 4
          %s3000 = int_to_ptr.hbm [resolvable:$true] %s2999
          %3002 = dma.vmem_to_hbm [thread:$0]  %s2998, 128, %s3000, %s2985
        $region104: #{tpu_custom_call.1} parent=83 // pred_fallthru
          _
      $region84: #{tpu_custom_call.1} parent=5 // pred_fallthru
        _
      %p3003 = scmp.le.s32.totalorder 2, %s28
      // Predicated region
      $region105: #{tpu_custom_call.1} parent=5 // pred_check
        %p3004 = pneg %p3003
      $region106: #{tpu_custom_call.1} parent=5 // pred_check_branch
        %3006 = sbr.rel (%p3004) target = $region108
      $region107: #{tpu_custom_call.1} parent=5 // pred_region
        %s3007 = ssub.s32 %s28, 2
        // Predicated region
        $region109: #{tpu_custom_call.1} parent=107 // pred_check
          %p3008 = pneg %p403
        $region110: #{tpu_custom_call.1} parent=107 // pred_check_branch
          %3010 = sbr.rel (%p3008) target = $region112
        $region111: #{tpu_custom_call.1} parent=107 // pred_region
          %s3011 = sand.u32 %s388, 1
          %s3012 = scalar_lea.sflag [#allocation4], %s3011
          %s3013 = sand.u32 %s388, 1
          %s3014 = smul.addr %s3013, 8
          %s3015 = scalar_lea.vmem [#allocation10], %s3014
          %3017 = dma.done %s3012, 128
        $region112: #{tpu_custom_call.1} parent=107 // pred_fallthru
          _
      $region108: #{tpu_custom_call.1} parent=5 // pred_fallthru
        _
    $region6: #{tpu_custom_call.1} parent=1 // loop_footer
      %s32 = sadd.s32 1, %s28
    $region7: #{tpu_custom_call.1} parent=1 // loop_footer_branch
      %27 = sbr.rel target = $region3
    $region8: #{tpu_custom_call.1} parent=1 // loop_exit
      _
    %3018 = vsyncpa [#allocation3], 1
    %s3019 = scalar_lea.sflag [#allocation3], 1
    %3020 = vsyncpa %s3019, 1
    %3021 = vsyncpa [#allocation6], 1
    %3022 = vsyncpa [#allocation9], 1
    %3023 = vsyncpa [#allocation4], 1
    %s3024 = scalar_lea.sflag [#allocation4], 1
    %3025 = vsyncpa %s3024, 1

</llo_original>
